<compile_context>
chip_gen: v6e
topology: v6e:2x2x1
jax: 0.10.0
libtpu: 0.0.40
codegen_flags: <defaults>
</compile_context>

<pallas_src>
import math

import jax
import jax.numpy as jnp
import numpy as np
from jax import lax
from jax.experimental import pallas as pl
from jax.experimental.pallas import tpu as pltpu

# Small-but-consistent problem sizes (module: embed_size, num_heads).
EMBED = 128
NUM_HEADS = 8
HEAD_DIM = EMBED // NUM_HEADS
HIDDEN = 4 * EMBED
SEQ = 8
BATCH = 2
EPS = 1e-5


def _layernorm(v, g, b):
    mu = jnp.mean(v, axis=-1, keepdims=True)
    var = jnp.mean((v - mu) ** 2, axis=-1, keepdims=True)
    return (v - mu) * lax.rsqrt(var + EPS) * g + b


def transformer_block_kernel(
    x_ref,            # (1, L, E) f32   one batch element per grid step
    g1_ref, be1_ref,  # (1, E) f32      ln1 weight / bias
    wqkv_ref,         # (3E, E) bf16    in-proj weight (PyTorch layout, Q rows pre-scaled)
    bqkv_ref,         # (8, E) f32      rows 0..2 = [bq*scale, bk, bv], rows 3..7 zero pad
    woT_ref, bo_ref,  # (E, E) bf16, (1, E) f32   out-proj (weight pre-transposed)
    g2_ref, be2_ref,  # (1, E) f32      ln2 weight / bias
    w1T_ref, b1_ref,  # (E, 4E) bf16, (1, 4E) f32  mlp fc1 (pre-transposed)
    w2T_ref, b2_ref,  # (4E, E) bf16, (1, E) f32   mlp fc2 (pre-transposed)
    o_ref,            # (1, L, E) f32
):
    _, L, E = x_ref.shape
    H, HD = NUM_HEADS, HEAD_DIM
    bf16 = jnp.bfloat16

    x2d = x_ref[...].reshape(L, E)                           # (L, E) f32

    # ---- LayerNorm 1 (f32); single bf16 cast feeds every downstream matmul ----
    h_bf = _layernorm(x2d, g1_ref[0], be1_ref[0]).astype(bf16)

    # ---- QKV projection: contract last dims of both operands (no h.T materialized).
    # Transposed output (3E, L): heads land on sublanes -> head split is layout-free.
    qkvT = lax.dot_general(wqkv_ref[...], h_bf, (((1,), (1,)), ((), ())),
                           preferred_element_type=jnp.float32)        # (3E, L) f32 (transient)

    # In-proj bias arrives lane-dense; one tile-aligned (8,E)->(E,8) transpose gives
    # per-component column vectors to fold into the transposed Q/K/V tensors.
    bcol = bqkv_ref[...].T                                            # (E, 8) f32

    qh = (qkvT[0:E]         + bcol[:, 0:1]).astype(bf16).reshape(H, HD, L)
    kh = (qkvT[E:2 * E]     + bcol[:, 1:2]).astype(bf16).reshape(H, HD, L)
    vh = (qkvT[2 * E:3 * E] + bcol[:, 2:3]).astype(bf16).reshape(H, HD, L)

    # ---- Attention: contract the shared sublane d axis (transposed-LHS MXU matmul). ----
    s = jnp.einsum("hdq,hdk->hqk", qh, kh,
                   preferred_element_type=jnp.float32)                # (H, L, L) f32
    s = s - jnp.max(s, axis=-1, keepdims=True)
    p = jnp.exp(s)
    p = p * pl.reciprocal(jnp.sum(p, axis=-1, keepdims=True), approx=True)

    attnT = jnp.einsum("hdk,hqk->hdq", vh, p.astype(bf16),
                       preferred_element_type=jnp.float32)            # (H, HD, L) f32

    # ---- Head merge + out-projection fused: rows[m,e] = sum_{h,d} attnT[h,d,m] * woT[h*HD+d,e]
    rows = lax.dot_general(attnT.reshape(E, L).astype(bf16), woT_ref[...],
                           (((0,), (0,)), ((), ())),
                           preferred_element_type=jnp.float32) + bo_ref[0]   # (L, E) f32
    x1 = x2d + rows                                                   # first residual

    # ---- LayerNorm 2 + MLP (exact erf-form GELU) ----
    h2 = _layernorm(x1, g2_ref[0], be2_ref[0]).astype(bf16)
    m = jnp.dot(h2, w1T_ref[...], preferred_element_type=jnp.float32) + b1_ref[0]
    m = 0.5 * m * (1.0 + lax.erf(m * (1.0 / math.sqrt(2.0))))
    m = jnp.dot(m.astype(bf16), w2T_ref[...],
                preferred_element_type=jnp.float32) + b2_ref[0]

    o_ref[...] = (x1 + m).reshape(1, L, E)                            # second residual


def transformer_block(x, params):
    """x: (L, N, E) float32, PyTorch seq-first convention."""
    L, N, E = x.shape
    xb = jnp.transpose(x, (1, 0, 2))                                  # (N, L, E)

    # Host-side weight prep: fold softmax scale into the Q third of the in-projection,
    # keep PyTorch (3E, E) orientation, cast big weights to bf16.  In-proj bias is packed
    # lane-dense into an (8, E) tile (rows 0..2 used) so its DMA/VMEM footprint is tiny and
    # the in-kernel transpose is sublane-tile aligned.
    scale = 1.0 / math.sqrt(HEAD_DIM)
    wqkv = jnp.concatenate([params["wqkv"][:EMBED] * scale, params["wqkv"][EMBED:]],
                           axis=0).astype(jnp.bfloat16)               # (3E, E)
    bqkv = jnp.concatenate([params["bqkv"][:EMBED] * scale,
                            params["bqkv"][EMBED:]]).reshape(3, EMBED)
    bqkv8 = jnp.zeros((8, EMBED), jnp.float32).at[0:3].set(bqkv)      # (8, E) lane-dense

    const = lambda shape: pl.BlockSpec(shape, lambda n: (0, 0))       # resident across steps

    out = pl.pallas_call(
        transformer_block_kernel,
        out_shape=jax.ShapeDtypeStruct((N, L, E), jnp.float32),
        grid=(N,),                                                    # one step per batch element
        in_specs=[
            pl.BlockSpec((1, L, E), lambda n: (n, 0, 0)),
            const((1, E)),                 # ln1 gamma
            const((1, E)),                 # ln1 beta
            const((3 * E, E)),             # in_proj weight (Q-scaled, bf16)
            const((8, E)),                 # in_proj bias (lane-dense, padded rows)
            const((E, E)),                 # out_proj weight^T (bf16)
            const((1, E)),                 # out_proj bias
            const((1, E)),                 # ln2 gamma
            const((1, E)),                 # ln2 beta
            const((E, HIDDEN)),            # mlp fc1 weight^T (bf16)
            const((1, HIDDEN)),            # mlp fc1 bias
            const((HIDDEN, E)),            # mlp fc2 weight^T (bf16)
            const((1, E)),                 # mlp fc2 bias
        ],
        out_specs=pl.BlockSpec((1, L, E), lambda n: (n, 0, 0)),
        compiler_params=pltpu.CompilerParams(dimension_semantics=("parallel",)),
    )(
        xb,
        params["g1"][None, :], params["be1"][None, :],
        wqkv, bqkv8,
        params["wo"].T.astype(jnp.bfloat16), params["bo"][None, :],
        params["g2"][None, :], params["be2"][None, :],
        params["w1"].T.astype(jnp.bfloat16), params["b1"][None, :],
        params["w2"].T.astype(jnp.bfloat16), params["b2"][None, :],
    )
    return jnp.transpose(out, (1, 0, 2))                              # back to (L, N, E)


def reference_block(x, p):
    """Pure-JAX f32 mirror of the PyTorch forward, for correctness checking."""
    L, N, E = x.shape
    h = _layernorm(x, p["g1"], p["be1"])
    qkv = h @ p["wqkv"].T + p["bqkv"]                                 # (L, N, 3E)
    q, k, v = jnp.split(qkv, 3, axis=-1)

    def split_heads(t):                                               # -> (N, H, L, hd)
        return t.reshape(L, N, NUM_HEADS, HEAD_DIM).transpose(1, 2, 0, 3)

    qh = split_heads(q) * (1.0 / math.sqrt(HEAD_DIM))
    kh = split_heads(k)
    vh = split_heads(v)
    s = jnp.einsum("nhld,nhmd->nhlm", qh, kh)
    pr = jax.nn.softmax(s, axis=-1)
    o = jnp.einsum("nhlm,nhmd->nhld", pr, vh)                         # (N, H, L, hd)
    o = o.transpose(2, 0, 1, 3).reshape(L, N, E)
    o = o @ p["wo"].T + p["bo"]
    x1 = x + o
    h2 = _layernorm(x1, p["g2"], p["be2"])
    m = h2 @ p["w1"].T + p["b1"]
    m = 0.5 * m * (1.0 + lax.erf(m * (1.0 / jnp.sqrt(2.0))))
    m = m @ p["w2"].T + p["b2"]
    return x1 + m


def make_params(key):
    ks = jax.random.split(key, 8)
    s = 0.05
    return {
        "g1": jnp.ones((EMBED,), jnp.float32),
        "be1": jnp.zeros((EMBED,), jnp.float32),
        "wqkv": s * jax.random.normal(ks[0], (3 * EMBED, EMBED), jnp.float32),
        "bqkv": s * jax.random.normal(ks[1], (3 * EMBED,), jnp.float32),
        "wo": s * jax.random.normal(ks[2], (EMBED, EMBED), jnp.float32),
        "bo": s * jax.random.normal(ks[3], (EMBED,), jnp.float32),
        "g2": jnp.ones((EMBED,), jnp.float32),
        "be2": jnp.zeros((EMBED,), jnp.float32),
        "w1": s * jax.random.normal(ks[4], (HIDDEN, EMBED), jnp.float32),
        "b1": s * jax.random.normal(ks[5], (HIDDEN,), jnp.float32),
        "w2": s * jax.random.normal(ks[6], (EMBED, HIDDEN), jnp.float32),
        "b2": s * jax.random.normal(ks[7], (EMBED,), jnp.float32),
    }


if __name__ == "__main__":
    key = jax.random.PRNGKey(0)
    kx, kp = jax.random.split(key)
    x = jax.random.normal(kx, (SEQ, BATCH, EMBED), jnp.float32)       # (L, N, E)
    params = make_params(kp)

    y = jax.block_until_ready(transformer_block(x, params))
    y_ref = jax.block_until_ready(reference_block(x, params))

    # Tolerance loosened vs a pure-f32 kernel because weights / matmul operands are bf16 and
    # the softmax denominator uses the approximate EUP reciprocal; LayerNorm, softmax max/sum
    # and all accumulation stay f32.
    np.testing.assert_allclose(np.asarray(y), np.asarray(y_ref), rtol=2e-2, atol=3e-2)

    print("KERNEL_OK")
</pallas_src>

<mosaic_0001>
module attributes {stable_mosaic.version = 11 : i64} {
  func.func @transformer_block_kernel(%arg0: i32, %arg1: memref<1x8x128xf32, #tpu.memory_space<vmem>>, %arg2: memref<1x128xf32, #tpu.memory_space<vmem>>, %arg3: memref<1x128xf32, #tpu.memory_space<vmem>>, %arg4: memref<384x128xbf16, #tpu.memory_space<vmem>>, %arg5: memref<8x128xf32, #tpu.memory_space<vmem>>, %arg6: memref<128x128xbf16, #tpu.memory_space<vmem>>, %arg7: memref<1x128xf32, #tpu.memory_space<vmem>>, %arg8: memref<1x128xf32, #tpu.memory_space<vmem>>, %arg9: memref<1x128xf32, #tpu.memory_space<vmem>>, %arg10: memref<128x512xbf16, #tpu.memory_space<vmem>>, %arg11: memref<1x512xf32, #tpu.memory_space<vmem>>, %arg12: memref<512x128xbf16, #tpu.memory_space<vmem>>, %arg13: memref<1x128xf32, #tpu.memory_space<vmem>>, %arg14: memref<1x8x128xf32, #tpu.memory_space<vmem>>) attributes {dimension_semantics = [#tpu.dimension_semantics<parallel>], iteration_bounds = array<i64: 2>, scalar_prefetch = 0 : i64, scratch_operands = 0 : i64, tpu.core_type = #tpu.core_type<tc>, window_params = [{transform_indices = @transform_0, window_bounds = array<i64: 1, 8, 128>}, {pipeline_mode = #tpu.pipeline_mode<synchronous>, transform_indices = @transform_1, window_bounds = array<i64: 1, 128>}, {pipeline_mode = #tpu.pipeline_mode<synchronous>, transform_indices = @transform_2, window_bounds = array<i64: 1, 128>}, {pipeline_mode = #tpu.pipeline_mode<synchronous>, transform_indices = @transform_3, window_bounds = array<i64: 384, 128>}, {pipeline_mode = #tpu.pipeline_mode<synchronous>, transform_indices = @transform_4, window_bounds = array<i64: 8, 128>}, {pipeline_mode = #tpu.pipeline_mode<synchronous>, transform_indices = @transform_5, window_bounds = array<i64: 128, 128>}, {pipeline_mode = #tpu.pipeline_mode<synchronous>, transform_indices = @transform_6, window_bounds = array<i64: 1, 128>}, {pipeline_mode = #tpu.pipeline_mode<synchronous>, transform_indices = @transform_7, window_bounds = array<i64: 1, 128>}, {pipeline_mode = #tpu.pipeline_mode<synchronous>, transform_indices = @transform_8, window_bounds = array<i64: 1, 128>}, {pipeline_mode = #tpu.pipeline_mode<synchronous>, transform_indices = @transform_9, window_bounds = array<i64: 128, 512>}, {pipeline_mode = #tpu.pipeline_mode<synchronous>, transform_indices = @transform_10, window_bounds = array<i64: 1, 512>}, {pipeline_mode = #tpu.pipeline_mode<synchronous>, transform_indices = @transform_11, window_bounds = array<i64: 512, 128>}, {pipeline_mode = #tpu.pipeline_mode<synchronous>, transform_indices = @transform_12, window_bounds = array<i64: 1, 128>}, {transform_indices = @transform_13, window_bounds = array<i64: 1, 8, 128>}]} {
    %c0 = arith.constant 0 : index
    %c0_0 = arith.constant 0 : index
    %c0_1 = arith.constant 0 : index
    %0 = vector.load %arg1[%c0, %c0_0, %c0_1] : memref<1x8x128xf32, #tpu.memory_space<vmem>>, vector<1x8x128xf32>
    %1 = vector.shape_cast %0 : vector<1x8x128xf32> to vector<8x128xf32>
    %c0_2 = arith.constant 0 : index
    %c0_3 = arith.constant 0 : index
    %2 = vector.load %arg2[%c0_2, %c0_3] : memref<1x128xf32, #tpu.memory_space<vmem>>, vector<1x128xf32>
    %3 = vector.shape_cast %2 : vector<1x128xf32> to vector<128xf32>
    %c0_4 = arith.constant 0 : index
    %c0_5 = arith.constant 0 : index
    %4 = vector.load %arg3[%c0_4, %c0_5] : memref<1x128xf32, #tpu.memory_space<vmem>>, vector<1x128xf32>
    %5 = vector.shape_cast %4 : vector<1x128xf32> to vector<128xf32>
    %cst = arith.constant dense<0.000000e+00> : vector<8xf32>
    %6 = vector.multi_reduction <add>, %1, %cst [1] : vector<8x128xf32> to vector<8xf32>
    %7 = vector.shape_cast %6 : vector<8xf32> to vector<8x1xf32>
    %cst_6 = arith.constant 1.280000e+02 : f32
    %8 = vector.broadcast %cst_6 : f32 to vector<8x1xf32>
    %9 = arith.divf %7, %8 : vector<8x1xf32>
    %10 = vector.broadcast %9 : vector<8x1xf32> to vector<8x128xf32>
    %11 = arith.subf %1, %10 : vector<8x128xf32>
    %12 = arith.mulf %11, %11 : vector<8x128xf32>
    %cst_7 = arith.constant dense<0.000000e+00> : vector<8xf32>
    %13 = vector.multi_reduction <add>, %12, %cst_7 [1] : vector<8x128xf32> to vector<8xf32>
    %14 = vector.shape_cast %13 : vector<8xf32> to vector<8x1xf32>
    %cst_8 = arith.constant 1.280000e+02 : f32
    %15 = vector.broadcast %cst_8 : f32 to vector<8x1xf32>
    %16 = arith.divf %14, %15 : vector<8x1xf32>
    %17 = vector.broadcast %9 : vector<8x1xf32> to vector<8x128xf32>
    %18 = arith.subf %1, %17 : vector<8x128xf32>
    %cst_9 = arith.constant 9.99999974E-6 : f32
    %19 = vector.broadcast %cst_9 : f32 to vector<8x1xf32>
    %20 = arith.addf %16, %19 : vector<8x1xf32>
    %21 = math.rsqrt %20 : vector<8x1xf32>
    %22 = vector.broadcast %21 : vector<8x1xf32> to vector<8x128xf32>
    %23 = arith.mulf %18, %22 : vector<8x128xf32>
    %24 = vector.shape_cast %3 : vector<128xf32> to vector<1x128xf32>
    %25 = vector.broadcast %24 : vector<1x128xf32> to vector<8x128xf32>
    %26 = arith.mulf %23, %25 : vector<8x128xf32>
    %27 = vector.shape_cast %5 : vector<128xf32> to vector<1x128xf32>
    %28 = vector.broadcast %27 : vector<1x128xf32> to vector<8x128xf32>
    %29 = arith.addf %26, %28 : vector<8x128xf32>
    %30 = arith.truncf %29 : vector<8x128xf32> to vector<8x128xbf16>
    %c0_10 = arith.constant 0 : index
    %c0_11 = arith.constant 0 : index
    %31 = vector.load %arg4[%c0_10, %c0_11] : memref<384x128xbf16, #tpu.memory_space<vmem>>, vector<384x128xbf16>
    %cst_12 = arith.constant dense<0.000000e+00> : vector<384x8xf32>
    %32 = tpu.matmul %31, %30, %cst_12 {dimension_numbers = #tpu.dot_dimension_numbers<[1], [1], [0], [0], [0, 0, 1, 0], [], []>} : vector<384x128xbf16>, vector<8x128xbf16>, vector<384x8xf32> -> vector<384x8xf32>
    %c0_13 = arith.constant 0 : index
    %c0_14 = arith.constant 0 : index
    %33 = vector.load %arg5[%c0_13, %c0_14] : memref<8x128xf32, #tpu.memory_space<vmem>>, vector<8x128xf32>
    %34 = tpu.transpose %33, [1, 0] : vector<8x128xf32> -> vector<128x8xf32>
    %35 = vector.extract_strided_slice %32 {offsets = [0, 0], sizes = [128, 8], strides = [1, 1]} : vector<384x8xf32> to vector<128x8xf32>
    %36 = vector.extract_strided_slice %34 {offsets = [0, 0], sizes = [128, 1], strides = [1, 1]} : vector<128x8xf32> to vector<128x1xf32>
    %37 = vector.broadcast %36 : vector<128x1xf32> to vector<128x8xf32>
    %38 = arith.addf %35, %37 : vector<128x8xf32>
    %39 = arith.truncf %38 : vector<128x8xf32> to vector<128x8xbf16>
    %40 = vector.shape_cast %39 : vector<128x8xbf16> to vector<8x16x8xbf16>
    %41 = vector.extract_strided_slice %32 {offsets = [128, 0], sizes = [128, 8], strides = [1, 1]} : vector<384x8xf32> to vector<128x8xf32>
    %42 = vector.extract_strided_slice %34 {offsets = [0, 1], sizes = [128, 1], strides = [1, 1]} : vector<128x8xf32> to vector<128x1xf32>
    %43 = vector.broadcast %42 : vector<128x1xf32> to vector<128x8xf32>
    %44 = arith.addf %41, %43 : vector<128x8xf32>
    %45 = arith.truncf %44 : vector<128x8xf32> to vector<128x8xbf16>
    %46 = vector.shape_cast %45 : vector<128x8xbf16> to vector<8x16x8xbf16>
    %47 = vector.extract_strided_slice %32 {offsets = [256, 0], sizes = [128, 8], strides = [1, 1]} : vector<384x8xf32> to vector<128x8xf32>
    %48 = vector.extract_strided_slice %34 {offsets = [0, 2], sizes = [128, 1], strides = [1, 1]} : vector<128x8xf32> to vector<128x1xf32>
    %49 = vector.broadcast %48 : vector<128x1xf32> to vector<128x8xf32>
    %50 = arith.addf %47, %49 : vector<128x8xf32>
    %51 = arith.truncf %50 : vector<128x8xf32> to vector<128x8xbf16>
    %52 = vector.shape_cast %51 : vector<128x8xbf16> to vector<8x16x8xbf16>
    "tpu.trace_start"() <{level = 10 : i32, message = "hdq,hdk->hqk"}> : () -> ()
    %cst_15 = arith.constant dense<0.000000e+00> : vector<8x8x8xf32>
    %53 = tpu.matmul %40, %46, %cst_15 {dimension_numbers = #tpu.dot_dimension_numbers<[1], [1], [2], [2], [0, 0, 0, 2, 1, 2], [0], [0]>} : vector<8x16x8xbf16>, vector<8x16x8xbf16>, vector<8x8x8xf32> -> vector<8x8x8xf32>
    "tpu.trace_stop"() : () -> ()
    %cst_16 = arith.constant dense<0xFF800000> : vector<8x8xf32>
    %54 = vector.multi_reduction <maximumf>, %53, %cst_16 [2] : vector<8x8x8xf32> to vector<8x8xf32>
    %55 = vector.shape_cast %54 : vector<8x8xf32> to vector<8x8x1xf32>
    %56 = vector.broadcast %55 : vector<8x8x1xf32> to vector<8x8x8xf32>
    %57 = arith.subf %53, %56 : vector<8x8x8xf32>
    %58 = math.exp %57 : vector<8x8x8xf32>
    %cst_17 = arith.constant dense<0.000000e+00> : vector<8x8xf32>
    %59 = vector.multi_reduction <add>, %58, %cst_17 [2] : vector<8x8x8xf32> to vector<8x8xf32>
    %60 = vector.shape_cast %59 : vector<8x8xf32> to vector<8x8x1xf32>
    %61 = tpu.reciprocal %60 {approx = true} : vector<8x8x1xf32> -> vector<8x8x1xf32>
    %62 = vector.broadcast %61 : vector<8x8x1xf32> to vector<8x8x8xf32>
    %63 = arith.mulf %58, %62 : vector<8x8x8xf32>
    %64 = arith.truncf %63 : vector<8x8x8xf32> to vector<8x8x8xbf16>
    "tpu.trace_start"() <{level = 10 : i32, message = "hdk,hqk->hdq"}> : () -> ()
    %cst_18 = arith.constant dense<0.000000e+00> : vector<8x16x8xf32>
    %65 = tpu.matmul %52, %64, %cst_18 {dimension_numbers = #tpu.dot_dimension_numbers<[2], [2], [1], [1], [0, 0, 0, 1, 1, 1], [0], [0]>} : vector<8x16x8xbf16>, vector<8x8x8xbf16>, vector<8x16x8xf32> -> vector<8x16x8xf32>
    "tpu.trace_stop"() : () -> ()
    %66 = vector.shape_cast %65 : vector<8x16x8xf32> to vector<128x8xf32>
    %67 = arith.truncf %66 : vector<128x8xf32> to vector<128x8xbf16>
    %c0_19 = arith.constant 0 : index
    %c0_20 = arith.constant 0 : index
    %68 = vector.load %arg6[%c0_19, %c0_20] : memref<128x128xbf16, #tpu.memory_space<vmem>>, vector<128x128xbf16>
    %cst_21 = arith.constant dense<0.000000e+00> : vector<8x128xf32>
    %69 = tpu.matmul %67, %68, %cst_21 {dimension_numbers = #tpu.dot_dimension_numbers<[0], [0], [1], [1], [0, 1, 1, 1], [], []>} : vector<128x8xbf16>, vector<128x128xbf16>, vector<8x128xf32> -> vector<8x128xf32>
    %c0_22 = arith.constant 0 : index
    %c0_23 = arith.constant 0 : index
    %70 = vector.load %arg7[%c0_22, %c0_23] : memref<1x128xf32, #tpu.memory_space<vmem>>, vector<1x128xf32>
    %71 = vector.shape_cast %70 : vector<1x128xf32> to vector<128xf32>
    %72 = vector.shape_cast %71 : vector<128xf32> to vector<1x128xf32>
    %73 = vector.broadcast %72 : vector<1x128xf32> to vector<8x128xf32>
    %74 = arith.addf %69, %73 : vector<8x128xf32>
    %75 = arith.addf %1, %74 : vector<8x128xf32>
    %c0_24 = arith.constant 0 : index
    %c0_25 = arith.constant 0 : index
    %76 = vector.load %arg8[%c0_24, %c0_25] : memref<1x128xf32, #tpu.memory_space<vmem>>, vector<1x128xf32>
    %77 = vector.shape_cast %76 : vector<1x128xf32> to vector<128xf32>
    %c0_26 = arith.constant 0 : index
    %c0_27 = arith.constant 0 : index
    %78 = vector.load %arg9[%c0_26, %c0_27] : memref<1x128xf32, #tpu.memory_space<vmem>>, vector<1x128xf32>
    %79 = vector.shape_cast %78 : vector<1x128xf32> to vector<128xf32>
    %cst_28 = arith.constant dense<0.000000e+00> : vector<8xf32>
    %80 = vector.multi_reduction <add>, %75, %cst_28 [1] : vector<8x128xf32> to vector<8xf32>
    %81 = vector.shape_cast %80 : vector<8xf32> to vector<8x1xf32>
    %cst_29 = arith.constant 1.280000e+02 : f32
    %82 = vector.broadcast %cst_29 : f32 to vector<8x1xf32>
    %83 = arith.divf %81, %82 : vector<8x1xf32>
    %84 = vector.broadcast %83 : vector<8x1xf32> to vector<8x128xf32>
    %85 = arith.subf %75, %84 : vector<8x128xf32>
    %86 = arith.mulf %85, %85 : vector<8x128xf32>
    %cst_30 = arith.constant dense<0.000000e+00> : vector<8xf32>
    %87 = vector.multi_reduction <add>, %86, %cst_30 [1] : vector<8x128xf32> to vector<8xf32>
    %88 = vector.shape_cast %87 : vector<8xf32> to vector<8x1xf32>
    %cst_31 = arith.constant 1.280000e+02 : f32
    %89 = vector.broadcast %cst_31 : f32 to vector<8x1xf32>
    %90 = arith.divf %88, %89 : vector<8x1xf32>
    %91 = vector.broadcast %83 : vector<8x1xf32> to vector<8x128xf32>
    %92 = arith.subf %75, %91 : vector<8x128xf32>
    %cst_32 = arith.constant 9.99999974E-6 : f32
    %93 = vector.broadcast %cst_32 : f32 to vector<8x1xf32>
    %94 = arith.addf %90, %93 : vector<8x1xf32>
    %95 = math.rsqrt %94 : vector<8x1xf32>
    %96 = vector.broadcast %95 : vector<8x1xf32> to vector<8x128xf32>
    %97 = arith.mulf %92, %96 : vector<8x128xf32>
    %98 = vector.shape_cast %77 : vector<128xf32> to vector<1x128xf32>
    %99 = vector.broadcast %98 : vector<1x128xf32> to vector<8x128xf32>
    %100 = arith.mulf %97, %99 : vector<8x128xf32>
    %101 = vector.shape_cast %79 : vector<128xf32> to vector<1x128xf32>
    %102 = vector.broadcast %101 : vector<1x128xf32> to vector<8x128xf32>
    %103 = arith.addf %100, %102 : vector<8x128xf32>
    %104 = arith.truncf %103 : vector<8x128xf32> to vector<8x128xbf16>
    %c0_33 = arith.constant 0 : index
    %c0_34 = arith.constant 0 : index
    %105 = vector.load %arg10[%c0_33, %c0_34] : memref<128x512xbf16, #tpu.memory_space<vmem>>, vector<128x512xbf16>
    %cst_35 = arith.constant dense<0.000000e+00> : vector<8x512xf32>
    %106 = tpu.matmul %104, %105, %cst_35 {dimension_numbers = #tpu.dot_dimension_numbers<[1], [0], [0], [1], [0, 0, 1, 1], [], []>} : vector<8x128xbf16>, vector<128x512xbf16>, vector<8x512xf32> -> vector<8x512xf32>
    %c0_36 = arith.constant 0 : index
    %c0_37 = arith.constant 0 : index
    %107 = vector.load %arg11[%c0_36, %c0_37] : memref<1x512xf32, #tpu.memory_space<vmem>>, vector<1x512xf32>
    %108 = vector.shape_cast %107 : vector<1x512xf32> to vector<512xf32>
    %109 = vector.shape_cast %108 : vector<512xf32> to vector<1x512xf32>
    %110 = vector.broadcast %109 : vector<1x512xf32> to vector<8x512xf32>
    %111 = arith.addf %106, %110 : vector<8x512xf32>
    %cst_38 = arith.constant 5.000000e-01 : f32
    %112 = vector.broadcast %cst_38 : f32 to vector<8x512xf32>
    %113 = arith.mulf %112, %111 : vector<8x512xf32>
    %cst_39 = arith.constant 0.707106769 : f32
    %114 = vector.broadcast %cst_39 : f32 to vector<8x512xf32>
    %115 = arith.mulf %111, %114 : vector<8x512xf32>
    %116 = math.erf %115 : vector<8x512xf32>
    %cst_40 = arith.constant 1.000000e+00 : f32
    %117 = vector.broadcast %cst_40 : f32 to vector<8x512xf32>
    %118 = arith.addf %117, %116 : vector<8x512xf32>
    %119 = arith.mulf %113, %118 : vector<8x512xf32>
    %120 = arith.truncf %119 : vector<8x512xf32> to vector<8x512xbf16>
    %c0_41 = arith.constant 0 : index
    %c0_42 = arith.constant 0 : index
    %121 = vector.load %arg12[%c0_41, %c0_42] : memref<512x128xbf16, #tpu.memory_space<vmem>>, vector<512x128xbf16>
    %cst_43 = arith.constant dense<0.000000e+00> : vector<8x128xf32>
    %122 = tpu.matmul %120, %121, %cst_43 {dimension_numbers = #tpu.dot_dimension_numbers<[1], [0], [0], [1], [0, 0, 1, 1], [], []>} : vector<8x512xbf16>, vector<512x128xbf16>, vector<8x128xf32> -> vector<8x128xf32>
    %c0_44 = arith.constant 0 : index
    %c0_45 = arith.constant 0 : index
    %123 = vector.load %arg13[%c0_44, %c0_45] : memref<1x128xf32, #tpu.memory_space<vmem>>, vector<1x128xf32>
    %124 = vector.shape_cast %123 : vector<1x128xf32> to vector<128xf32>
    %125 = vector.shape_cast %124 : vector<128xf32> to vector<1x128xf32>
    %126 = vector.broadcast %125 : vector<1x128xf32> to vector<8x128xf32>
    %127 = arith.addf %122, %126 : vector<8x128xf32>
    %128 = arith.addf %75, %127 : vector<8x128xf32>
    %129 = vector.shape_cast %128 : vector<8x128xf32> to vector<1x8x128xf32>
    %c0_46 = arith.constant 0 : index
    %c0_47 = arith.constant 0 : index
    %c0_48 = arith.constant 0 : index
    %130 = vector.load %arg14[%c0_46, %c0_47, %c0_48] : memref<1x8x128xf32, #tpu.memory_space<vmem>>, vector<1x8x128xf32>
    tpu.vector_store %arg14[%c0_46, %c0_47, %c0_48], %129 {strides = array<i32>} : memref<1x8x128xf32, #tpu.memory_space<vmem>>, vector<1x8x128xf32>,
    return
  }
  func.func @transform_0(%arg0: i32) -> (i32, i32, i32) {
    %c0_i32 = arith.constant 0 : i32
    %c0_i32_0 = arith.constant 0 : i32
    %c0_i32_1 = arith.constant 0 : i32
    return %arg0, %c0_i32, %c0_i32_0 : i32, i32, i32
  }
  func.func @transform_1(%arg0: i32) -> (i32, i32) {
    %c0_i32 = arith.constant 0 : i32
    %c0_i32_0 = arith.constant 0 : i32
    %c0_i32_1 = arith.constant 0 : i32
    return %c0_i32, %c0_i32_0 : i32, i32
  }
  func.func @transform_2(%arg0: i32) -> (i32, i32) {
    %c0_i32 = arith.constant 0 : i32
    %c0_i32_0 = arith.constant 0 : i32
    %c0_i32_1 = arith.constant 0 : i32
    return %c0_i32, %c0_i32_0 : i32, i32
  }
  func.func @transform_3(%arg0: i32) -> (i32, i32) {
    %c0_i32 = arith.constant 0 : i32
    %c0_i32_0 = arith.constant 0 : i32
    %c0_i32_1 = arith.constant 0 : i32
    return %c0_i32, %c0_i32_0 : i32, i32
  }
  func.func @transform_4(%arg0: i32) -> (i32, i32) {
    %c0_i32 = arith.constant 0 : i32
    %c0_i32_0 = arith.constant 0 : i32
    %c0_i32_1 = arith.constant 0 : i32
    return %c0_i32, %c0_i32_0 : i32, i32
  }
  func.func @transform_5(%arg0: i32) -> (i32, i32) {
    %c0_i32 = arith.constant 0 : i32
    %c0_i32_0 = arith.constant 0 : i32
    %c0_i32_1 = arith.constant 0 : i32
    return %c0_i32, %c0_i32_0 : i32, i32
  }
  func.func @transform_6(%arg0: i32) -> (i32, i32) {
    %c0_i32 = arith.constant 0 : i32
    %c0_i32_0 = arith.constant 0 : i32
    %c0_i32_1 = arith.constant 0 : i32
    return %c0_i32, %c0_i32_0 : i32, i32
  }
  func.func @transform_7(%arg0: i32) -> (i32, i32) {
    %c0_i32 = arith.constant 0 : i32
    %c0_i32_0 = arith.constant 0 : i32
    %c0_i32_1 = arith.constant 0 : i32
    return %c0_i32, %c0_i32_0 : i32, i32
  }
  func.func @transform_8(%arg0: i32) -> (i32, i32) {
    %c0_i32 = arith.constant 0 : i32
    %c0_i32_0 = arith.constant 0 : i32
    %c0_i32_1 = arith.constant 0 : i32
    return %c0_i32, %c0_i32_0 : i32, i32
  }
  func.func @transform_9(%arg0: i32) -> (i32, i32) {
    %c0_i32 = arith.constant 0 : i32
    %c0_i32_0 = arith.constant 0 : i32
    %c0_i32_1 = arith.constant 0 : i32
    return %c0_i32, %c0_i32_0 : i32, i32
  }
  func.func @transform_10(%arg0: i32) -> (i32, i32) {
    %c0_i32 = arith.constant 0 : i32
    %c0_i32_0 = arith.constant 0 : i32
    %c0_i32_1 = arith.constant 0 : i32
    return %c0_i32, %c0_i32_0 : i32, i32
  }
  func.func @transform_11(%arg0: i32) -> (i32, i32) {
    %c0_i32 = arith.constant 0 : i32
    %c0_i32_0 = arith.constant 0 : i32
    %c0_i32_1 = arith.constant 0 : i32
    return %c0_i32, %c0_i32_0 : i32, i32
  }
  func.func @transform_12(%arg0: i32) -> (i32, i32) {
    %c0_i32 = arith.constant 0 : i32
    %c0_i32_0 = arith.constant 0 : i32
    %c0_i32_1 = arith.constant 0 : i32
    return %c0_i32, %c0_i32_0 : i32, i32
  }
  func.func @transform_13(%arg0: i32) -> (i32, i32, i32) {
    %c0_i32 = arith.constant 0 : i32
    %c0_i32_0 = arith.constant 0 : i32
    %c0_i32_1 = arith.constant 0 : i32
    return %arg0, %c0_i32, %c0_i32_0 : i32, i32, i32
  }
}

</mosaic_0001>

<llo_original>
// kernel: tpu_custom_call.1
$region0: #{tpu_custom_call.1}
  #allocation0 [shape = 'u32[]', space=smem, size = 0x4, offset = 0x4, fixed_abs, tag = 'smem constant byte address 0x4 - core index']
  #allocation1 [shape = 'u32[144,128]{1,0:T(1,128)}', space=vmem, size = 0x12000, scoped, tag = 'internal scratch']
  %s0 = inlined_call_operand.hbm [shape: f32[2,8,128], index: 0, kind: input, shape index: {}]
  %s1 = inlined_call_operand.vmem [shape: f32[1,128], index: 1, kind: input, shape index: {}]
  %s2 = inlined_call_operand.vmem [shape: f32[1,128], index: 2, kind: input, shape index: {}]
  %s3 = inlined_call_operand.hbm [shape: bf16[384,128], index: 3, kind: input, shape index: {}]
  %s4 = inlined_call_operand.hbm [shape: f32[8,128], index: 4, kind: input, shape index: {}]
  %s5 = inlined_call_operand.hbm [shape: bf16[128,128], index: 5, kind: input, shape index: {}]
  %s6 = inlined_call_operand.vmem [shape: f32[1,128], index: 6, kind: input, shape index: {}]
  %s7 = inlined_call_operand.vmem [shape: f32[1,128], index: 7, kind: input, shape index: {}]
  %s8 = inlined_call_operand.vmem [shape: f32[1,128], index: 8, kind: input, shape index: {}]
  %s9 = inlined_call_operand.hbm [shape: bf16[128,512], index: 9, kind: input, shape index: {}]
  %s10 = inlined_call_operand.vmem [shape: f32[1,512], index: 10, kind: input, shape index: {}]
  %s11 = inlined_call_operand.hbm [shape: bf16[512,128], index: 11, kind: input, shape index: {}]
  %s12 = inlined_call_operand.vmem [shape: f32[1,128], index: 12, kind: input, shape index: {}]
  %s13 = inlined_call_operand.hbm [shape: f32[2,8,128], index: 13, kind: output, shape index: {}]
  %s14 = sld [smem:[#allocation0]]
  $region109: #{tpu_custom_call.1} parent=0
    _
  %s16 = ssub.s32 1, %s14
  %s17 = scalar_select 0, %s16, %s14
  $region1: #{tpu_custom_call.1} parent=0
    #allocation2 [shape = 'u8[8192]{0}', space=vmem, size = 0x2000, scoped, tag = 'input window, operand 0']
    #allocation3 [shape = 's32[2]{0}', space=sflag, size = 0x8, scoped, tag = 'scoped memory for tpu_custom_call.1']
    #allocation4 [shape = 's32[2]{0}', space=sflag, size = 0x8, scoped, tag = 'scoped memory for tpu_custom_call.1']
    #allocation5 [shape = 'u8[98304]{0}', space=vmem, size = 0x18000, scoped, tag = 'input window, operand 3, single buffered']
    #allocation6 [shape = 's32[1]{0}', space=sflag, size = 0x4, scoped, tag = 'scoped memory for tpu_custom_call.1']
    #allocation7 [shape = 'u8[4096]{0}', space=vmem, size = 0x1000, scoped, tag = 'input window, operand 4, single buffered']
    #allocation8 [shape = 'u8[32768]{0}', space=vmem, size = 0x8000, scoped, tag = 'input window, operand 5, single buffered']
    #allocation9 [shape = 's32[1]{0}', space=sflag, size = 0x4, scoped, tag = 'scoped memory for tpu_custom_call.1']
    #allocation10 [shape = 'u8[131072]{0}', space=vmem, size = 0x20000, scoped, tag = 'input window, operand 9, single buffered']
    #allocation11 [shape = 'u8[131072]{0}', space=vmem, size = 0x20000, scoped, tag = 'input window, operand 11, single buffered']
    #allocation12 [shape = 's32[1]{0}', space=sflag, size = 0x4, scoped, tag = 'scoped memory for tpu_custom_call.1']
    #allocation13 [shape = 'u8[8192]{0}', space=vmem, size = 0x2000, scoped, tag = 'output window, operand 0']
    %18 = vsyncpa [#allocation3], 0
    %s19 = scalar_lea.sflag [#allocation3], 1
    %20 = vsyncpa %s19, 0
    %21 = vsyncpa [#allocation6], 0
    %22 = vsyncpa [#allocation9], 0
    %23 = vsyncpa [#allocation12], 0
    %24 = vsyncpa [#allocation4], 0
    %s25 = scalar_lea.sflag [#allocation4], 1
    %26 = vsyncpa %s25, 0
    loop: start=0, step=1, limit=4
    $region2: #{tpu_custom_call.1} parent=1 // loop_pre_header
      _
    $region3: #{tpu_custom_call.1} parent=1 // loop_header
      %s28 = sphi 0, %s32
      %p29 = scmp.ge.s32.totalorder %s28, 4
      %s38 = sphi 0, %s40
      %s41 = sphi 0, %s38
      %s42 = sphi 0, %s41
      %s58 = sphi 0, %s42
      %s62 = sphi 0, %s62
      %s64 = sphi 0, %s62
      %s65 = sphi 0, %s64
      %s79 = sphi 0, %s65
      %s83 = sphi 0, %s83
      %s85 = sphi 0, %s83
      %s86 = sphi 0, %s85
      %s100 = sphi 0, %s86
      %s104 = sphi 0, %s104
      %s106 = sphi 0, %s104
      %s107 = sphi 0, %s106
      %s121 = sphi 0, %s107
      %s125 = sphi 0, %s125
      %s127 = sphi 0, %s125
      %s128 = sphi 0, %s127
      %s142 = sphi 0, %s128
      %s146 = sphi 0, %s146
      %s148 = sphi 0, %s146
      %s149 = sphi 0, %s148
      %s163 = sphi 0, %s149
      %s167 = sphi 0, %s167
      %s169 = sphi 0, %s167
      %s170 = sphi 0, %s169
      %s184 = sphi 0, %s170
      %s188 = sphi 0, %s188
      %s190 = sphi 0, %s188
      %s191 = sphi 0, %s190
      %s205 = sphi 0, %s191
      %s209 = sphi 0, %s209
      %s211 = sphi 0, %s209
      %s212 = sphi 0, %s211
      %s226 = sphi 0, %s212
      %s230 = sphi 0, %s230
      %s232 = sphi 0, %s230
      %s233 = sphi 0, %s232
      %s247 = sphi 0, %s233
      %s251 = sphi 0, %s251
      %s253 = sphi 0, %s251
      %s254 = sphi 0, %s253
      %s268 = sphi 0, %s254
      %s272 = sphi 0, %s272
      %s274 = sphi 0, %s272
      %s275 = sphi 0, %s274
      %s289 = sphi 0, %s275
      %s293 = sphi 0, %s293
      %s295 = sphi 0, %s293
      %s296 = sphi 0, %s295
      %s310 = sphi 0, %s296
      %s316 = sphi 0, %s318
      %s319 = sphi 0, %s316
      %s320 = sphi 0, %s319
      %s336 = sphi 0, %s320
    $region4: #{tpu_custom_call.1} parent=1 // loop_header_branch
      %31 = sbr.rel (%p29) target = $region8
    $region5: #{tpu_custom_call.1} parent=1 // loop_body
      %s33 = ssub.s32 %s28, 1
      %s34 = ssub.s32 %s28, 2
      %s35 = sadd.s32 %s28, 1
      %s36 = ssub.s32 %s28, %s35
      %p37 = scmp.eq.s32.totalorder %s36, 0
      %s39 = sadd.s32 %s38, 1
      %s40 = scalar_select %p37, %s38, %s39
      %p43 = pneg %p37
      %p44 = scmp.eq.s32.totalorder %s28, 1
      %p45 = por %p43, %p44
      %p46 = scmp.ne.s32.totalorder %s38, %s41
      %p47 = scmp.eq.s32.totalorder %s28, 0
      %p48 = por %p46, %p47
      %p49 = scmp.ne.s32.totalorder %s38, %s41
      %p50 = scmp.eq.s32.totalorder %s33, 1
      %p51 = por %p49, %p50
      %p52 = scmp.ne.s32.totalorder %s41, %s42
      %p53 = scmp.eq.s32.totalorder %s33, 0
      %p54 = por %p52, %p53
      %p55 = scmp.ne.s32.totalorder %s41, %s42
      %p56 = scmp.eq.s32.totalorder %s34, 1
      %p57 = por %p55, %p56
      %p59 = scmp.ne.s32.totalorder %s42, %s58
      %p60 = scmp.eq.s32.totalorder %s34, 0
      %p61 = por %p59, %p60
      %s63 = sadd.s32 %s62, 1
      %p66 = scmp.eq.s32.totalorder %s28, 1
      %p67 = scmp.ne.s32.totalorder %s62, %s64
      %p68 = scmp.eq.s32.totalorder %s28, 0
      %p69 = por %p67, %p68
      %p70 = scmp.ne.s32.totalorder %s62, %s64
      %p71 = scmp.eq.s32.totalorder %s33, 1
      %p72 = por %p70, %p71
      %p73 = scmp.ne.s32.totalorder %s64, %s65
      %p74 = scmp.eq.s32.totalorder %s33, 0
      %p75 = por %p73, %p74
      %p76 = scmp.ne.s32.totalorder %s64, %s65
      %p77 = scmp.eq.s32.totalorder %s34, 1
      %p78 = por %p76, %p77
      %p80 = scmp.ne.s32.totalorder %s65, %s79
      %p81 = scmp.eq.s32.totalorder %s34, 0
      %p82 = por %p80, %p81
      %s84 = sadd.s32 %s83, 1
      %p87 = scmp.eq.s32.totalorder %s28, 1
      %p88 = scmp.ne.s32.totalorder %s83, %s85
      %p89 = scmp.eq.s32.totalorder %s28, 0
      %p90 = por %p88, %p89
      %p91 = scmp.ne.s32.totalorder %s83, %s85
      %p92 = scmp.eq.s32.totalorder %s33, 1
      %p93 = por %p91, %p92
      %p94 = scmp.ne.s32.totalorder %s85, %s86
      %p95 = scmp.eq.s32.totalorder %s33, 0
      %p96 = por %p94, %p95
      %p97 = scmp.ne.s32.totalorder %s85, %s86
      %p98 = scmp.eq.s32.totalorder %s34, 1
      %p99 = por %p97, %p98
      %p101 = scmp.ne.s32.totalorder %s86, %s100
      %p102 = scmp.eq.s32.totalorder %s34, 0
      %p103 = por %p101, %p102
      %s105 = sadd.s32 %s104, 1
      %p108 = scmp.eq.s32.totalorder %s28, 1
      %p109 = scmp.ne.s32.totalorder %s104, %s106
      %p110 = scmp.eq.s32.totalorder %s28, 0
      %p111 = por %p109, %p110
      %p112 = scmp.ne.s32.totalorder %s104, %s106
      %p113 = scmp.eq.s32.totalorder %s33, 1
      %p114 = por %p112, %p113
      %p115 = scmp.ne.s32.totalorder %s106, %s107
      %p116 = scmp.eq.s32.totalorder %s33, 0
      %p117 = por %p115, %p116
      %p118 = scmp.ne.s32.totalorder %s106, %s107
      %p119 = scmp.eq.s32.totalorder %s34, 1
      %p120 = por %p118, %p119
      %p122 = scmp.ne.s32.totalorder %s107, %s121
      %p123 = scmp.eq.s32.totalorder %s34, 0
      %p124 = por %p122, %p123
      %s126 = sadd.s32 %s125, 1
      %p129 = scmp.eq.s32.totalorder %s28, 1
      %p130 = scmp.ne.s32.totalorder %s125, %s127
      %p131 = scmp.eq.s32.totalorder %s28, 0
      %p132 = por %p130, %p131
      %p133 = scmp.ne.s32.totalorder %s125, %s127
      %p134 = scmp.eq.s32.totalorder %s33, 1
      %p135 = por %p133, %p134
      %p136 = scmp.ne.s32.totalorder %s127, %s128
      %p137 = scmp.eq.s32.totalorder %s33, 0
      %p138 = por %p136, %p137
      %p139 = scmp.ne.s32.totalorder %s127, %s128
      %p140 = scmp.eq.s32.totalorder %s34, 1
      %p141 = por %p139, %p140
      %p143 = scmp.ne.s32.totalorder %s128, %s142
      %p144 = scmp.eq.s32.totalorder %s34, 0
      %p145 = por %p143, %p144
      %s147 = sadd.s32 %s146, 1
      %p150 = scmp.eq.s32.totalorder %s28, 1
      %p151 = scmp.ne.s32.totalorder %s146, %s148
      %p152 = scmp.eq.s32.totalorder %s28, 0
      %p153 = por %p151, %p152
      %p154 = scmp.ne.s32.totalorder %s146, %s148
      %p155 = scmp.eq.s32.totalorder %s33, 1
      %p156 = por %p154, %p155
      %p157 = scmp.ne.s32.totalorder %s148, %s149
      %p158 = scmp.eq.s32.totalorder %s33, 0
      %p159 = por %p157, %p158
      %p160 = scmp.ne.s32.totalorder %s148, %s149
      %p161 = scmp.eq.s32.totalorder %s34, 1
      %p162 = por %p160, %p161
      %p164 = scmp.ne.s32.totalorder %s149, %s163
      %p165 = scmp.eq.s32.totalorder %s34, 0
      %p166 = por %p164, %p165
      %s168 = sadd.s32 %s167, 1
      %p171 = scmp.eq.s32.totalorder %s28, 1
      %p172 = scmp.ne.s32.totalorder %s167, %s169
      %p173 = scmp.eq.s32.totalorder %s28, 0
      %p174 = por %p172, %p173
      %p175 = scmp.ne.s32.totalorder %s167, %s169
      %p176 = scmp.eq.s32.totalorder %s33, 1
      %p177 = por %p175, %p176
      %p178 = scmp.ne.s32.totalorder %s169, %s170
      %p179 = scmp.eq.s32.totalorder %s33, 0
      %p180 = por %p178, %p179
      %p181 = scmp.ne.s32.totalorder %s169, %s170
      %p182 = scmp.eq.s32.totalorder %s34, 1
      %p183 = por %p181, %p182
      %p185 = scmp.ne.s32.totalorder %s170, %s184
      %p186 = scmp.eq.s32.totalorder %s34, 0
      %p187 = por %p185, %p186
      %s189 = sadd.s32 %s188, 1
      %p192 = scmp.eq.s32.totalorder %s28, 1
      %p193 = scmp.ne.s32.totalorder %s188, %s190
      %p194 = scmp.eq.s32.totalorder %s28, 0
      %p195 = por %p193, %p194
      %p196 = scmp.ne.s32.totalorder %s188, %s190
      %p197 = scmp.eq.s32.totalorder %s33, 1
      %p198 = por %p196, %p197
      %p199 = scmp.ne.s32.totalorder %s190, %s191
      %p200 = scmp.eq.s32.totalorder %s33, 0
      %p201 = por %p199, %p200
      %p202 = scmp.ne.s32.totalorder %s190, %s191
      %p203 = scmp.eq.s32.totalorder %s34, 1
      %p204 = por %p202, %p203
      %p206 = scmp.ne.s32.totalorder %s191, %s205
      %p207 = scmp.eq.s32.totalorder %s34, 0
      %p208 = por %p206, %p207
      %s210 = sadd.s32 %s209, 1
      %p213 = scmp.eq.s32.totalorder %s28, 1
      %p214 = scmp.ne.s32.totalorder %s209, %s211
      %p215 = scmp.eq.s32.totalorder %s28, 0
      %p216 = por %p214, %p215
      %p217 = scmp.ne.s32.totalorder %s209, %s211
      %p218 = scmp.eq.s32.totalorder %s33, 1
      %p219 = por %p217, %p218
      %p220 = scmp.ne.s32.totalorder %s211, %s212
      %p221 = scmp.eq.s32.totalorder %s33, 0
      %p222 = por %p220, %p221
      %p223 = scmp.ne.s32.totalorder %s211, %s212
      %p224 = scmp.eq.s32.totalorder %s34, 1
      %p225 = por %p223, %p224
      %p227 = scmp.ne.s32.totalorder %s212, %s226
      %p228 = scmp.eq.s32.totalorder %s34, 0
      %p229 = por %p227, %p228
      %s231 = sadd.s32 %s230, 1
      %p234 = scmp.eq.s32.totalorder %s28, 1
      %p235 = scmp.ne.s32.totalorder %s230, %s232
      %p236 = scmp.eq.s32.totalorder %s28, 0
      %p237 = por %p235, %p236
      %p238 = scmp.ne.s32.totalorder %s230, %s232
      %p239 = scmp.eq.s32.totalorder %s33, 1
      %p240 = por %p238, %p239
      %p241 = scmp.ne.s32.totalorder %s232, %s233
      %p242 = scmp.eq.s32.totalorder %s33, 0
      %p243 = por %p241, %p242
      %p244 = scmp.ne.s32.totalorder %s232, %s233
      %p245 = scmp.eq.s32.totalorder %s34, 1
      %p246 = por %p244, %p245
      %p248 = scmp.ne.s32.totalorder %s233, %s247
      %p249 = scmp.eq.s32.totalorder %s34, 0
      %p250 = por %p248, %p249
      %s252 = sadd.s32 %s251, 1
      %p255 = scmp.eq.s32.totalorder %s28, 1
      %p256 = scmp.ne.s32.totalorder %s251, %s253
      %p257 = scmp.eq.s32.totalorder %s28, 0
      %p258 = por %p256, %p257
      %p259 = scmp.ne.s32.totalorder %s251, %s253
      %p260 = scmp.eq.s32.totalorder %s33, 1
      %p261 = por %p259, %p260
      %p262 = scmp.ne.s32.totalorder %s253, %s254
      %p263 = scmp.eq.s32.totalorder %s33, 0
      %p264 = por %p262, %p263
      %p265 = scmp.ne.s32.totalorder %s253, %s254
      %p266 = scmp.eq.s32.totalorder %s34, 1
      %p267 = por %p265, %p266
      %p269 = scmp.ne.s32.totalorder %s254, %s268
      %p270 = scmp.eq.s32.totalorder %s34, 0
      %p271 = por %p269, %p270
      %s273 = sadd.s32 %s272, 1
      %p276 = scmp.eq.s32.totalorder %s28, 1
      %p277 = scmp.ne.s32.totalorder %s272, %s274
      %p278 = scmp.eq.s32.totalorder %s28, 0
      %p279 = por %p277, %p278
      %p280 = scmp.ne.s32.totalorder %s272, %s274
      %p281 = scmp.eq.s32.totalorder %s33, 1
      %p282 = por %p280, %p281
      %p283 = scmp.ne.s32.totalorder %s274, %s275
      %p284 = scmp.eq.s32.totalorder %s33, 0
      %p285 = por %p283, %p284
      %p286 = scmp.ne.s32.totalorder %s274, %s275
      %p287 = scmp.eq.s32.totalorder %s34, 1
      %p288 = por %p286, %p287
      %p290 = scmp.ne.s32.totalorder %s275, %s289
      %p291 = scmp.eq.s32.totalorder %s34, 0
      %p292 = por %p290, %p291
      %s294 = sadd.s32 %s293, 1
      %p297 = scmp.eq.s32.totalorder %s28, 1
      %p298 = scmp.ne.s32.totalorder %s293, %s295
      %p299 = scmp.eq.s32.totalorder %s28, 0
      %p300 = por %p298, %p299
      %p301 = scmp.ne.s32.totalorder %s293, %s295
      %p302 = scmp.eq.s32.totalorder %s33, 1
      %p303 = por %p301, %p302
      %p304 = scmp.ne.s32.totalorder %s295, %s296
      %p305 = scmp.eq.s32.totalorder %s33, 0
      %p306 = por %p304, %p305
      %p307 = scmp.ne.s32.totalorder %s295, %s296
      %p308 = scmp.eq.s32.totalorder %s34, 1
      %p309 = por %p307, %p308
      %p311 = scmp.ne.s32.totalorder %s296, %s310
      %p312 = scmp.eq.s32.totalorder %s34, 0
      %p313 = por %p311, %p312
      %s314 = ssub.s32 %s28, %s35
      %p315 = scmp.eq.s32.totalorder %s314, 0
      %s317 = sadd.s32 %s316, 1
      %s318 = scalar_select %p315, %s316, %s317
      %p321 = pneg %p315
      %p322 = scmp.eq.s32.totalorder %s28, 1
      %p323 = por %p321, %p322
      %p324 = scmp.ne.s32.totalorder %s316, %s319
      %p325 = scmp.eq.s32.totalorder %s28, 0
      %p326 = por %p324, %p325
      %p327 = scmp.ne.s32.totalorder %s316, %s319
      %p328 = scmp.eq.s32.totalorder %s33, 1
      %p329 = por %p327, %p328
      %p330 = scmp.ne.s32.totalorder %s319, %s320
      %p331 = scmp.eq.s32.totalorder %s33, 0
      %p332 = por %p330, %p331
      %p333 = scmp.ne.s32.totalorder %s319, %s320
      %p334 = scmp.eq.s32.totalorder %s34, 1
      %p335 = por %p333, %p334
      %p337 = scmp.ne.s32.totalorder %s320, %s336
      %p338 = scmp.eq.s32.totalorder %s34, 0
      %p339 = por %p337, %p338
      %p340 = scmp.le.s32.totalorder 1, %s28
      %p341 = scmp.lt.s32.totalorder %s28, 3
      %p342 = pnand %p340, %p341
      %p343 = pneg %p342
      // Predicated region
      $region9: #{tpu_custom_call.1} parent=5 // pred_check
        _
      $region10: #{tpu_custom_call.1} parent=5 // pred_check_branch
        %345 = sbr.rel (%p342) target = $region12
      $region11: #{tpu_custom_call.1} parent=5 // pred_region
        %s346 = ssub.s32 %s28, 1
        // Predicated region
        $region13: #{tpu_custom_call.1} parent=11 // pred_check
          %p347 = pneg %p75
        $region14: #{tpu_custom_call.1} parent=11 // pred_check_branch
          %349 = sbr.rel (%p347) target = $region16
        $region15: #{tpu_custom_call.1} parent=11 // pred_region
          _
        $region16: #{tpu_custom_call.1} parent=11 // pred_fallthru
          _
        // Predicated region
        $region17: #{tpu_custom_call.1} parent=11 // pred_check
          %p350 = pneg %p96
        $region18: #{tpu_custom_call.1} parent=11 // pred_check_branch
          %352 = sbr.rel (%p350) target = $region20
        $region19: #{tpu_custom_call.1} parent=11 // pred_region
          _
        $region20: #{tpu_custom_call.1} parent=11 // pred_fallthru
          _
        // Predicated region
        $region21: #{tpu_custom_call.1} parent=11 // pred_check
          %p353 = pneg %p117
        $region22: #{tpu_custom_call.1} parent=11 // pred_check_branch
          %355 = sbr.rel (%p353) target = $region24
        $region23: #{tpu_custom_call.1} parent=11 // pred_region
          %s357 = ssub.s32 3072, 3072
          %358 = vsyncadd [#allocation6], %s357
          %s359 = sshll.u32 [#allocation5], 4
          %s360 = int_to_ptr.vmem [resolvable:$true] %s359
          %365 = dma.hbm_to_vmem [thread:$0]  %s3, 3072, %s360, [#allocation6], 64, 64, 4
        $region24: #{tpu_custom_call.1} parent=11 // pred_fallthru
          _
        // Predicated region
        $region25: #{tpu_custom_call.1} parent=11 // pred_check
          %p366 = pneg %p138
        $region26: #{tpu_custom_call.1} parent=11 // pred_check_branch
          %368 = sbr.rel (%p366) target = $region28
        $region27: #{tpu_custom_call.1} parent=11 // pred_region
          %s370 = ssub.s32 128, 128
          %371 = vsyncadd [#allocation6], %s370
          %s373 = sshll.u32 [#allocation7], 4
          %s374 = int_to_ptr.vmem [resolvable:$true] %s373
          %376 = dma.hbm_to_vmem [thread:$0]  %s4, 128, %s374, [#allocation6]
        $region28: #{tpu_custom_call.1} parent=11 // pred_fallthru
          _
        // Predicated region
        $region29: #{tpu_custom_call.1} parent=11 // pred_check
          %p377 = pneg %p159
        $region30: #{tpu_custom_call.1} parent=11 // pred_check_branch
          %379 = sbr.rel (%p377) target = $region32
        $region31: #{tpu_custom_call.1} parent=11 // pred_region
          %s381 = ssub.s32 1024, 1024
          %382 = vsyncadd [#allocation9], %s381
          %s383 = sshll.u32 [#allocation8], 4
          %s384 = int_to_ptr.vmem [resolvable:$true] %s383
          %389 = dma.hbm_to_vmem [thread:$0]  %s5, 1024, %s384, [#allocation9], 64, 64, 4
        $region32: #{tpu_custom_call.1} parent=11 // pred_fallthru
          _
        // Predicated region
        $region33: #{tpu_custom_call.1} parent=11 // pred_check
          %p390 = pneg %p180
        $region34: #{tpu_custom_call.1} parent=11 // pred_check_branch
          %392 = sbr.rel (%p390) target = $region36
        $region35: #{tpu_custom_call.1} parent=11 // pred_region
          _
        $region36: #{tpu_custom_call.1} parent=11 // pred_fallthru
          _
        // Predicated region
        $region37: #{tpu_custom_call.1} parent=11 // pred_check
          %p393 = pneg %p201
        $region38: #{tpu_custom_call.1} parent=11 // pred_check_branch
          %395 = sbr.rel (%p393) target = $region40
        $region39: #{tpu_custom_call.1} parent=11 // pred_region
          _
        $region40: #{tpu_custom_call.1} parent=11 // pred_fallthru
          _
        // Predicated region
        $region41: #{tpu_custom_call.1} parent=11 // pred_check
          %p396 = pneg %p222
        $region42: #{tpu_custom_call.1} parent=11 // pred_check_branch
          %398 = sbr.rel (%p396) target = $region44
        $region43: #{tpu_custom_call.1} parent=11 // pred_region
          _
        $region44: #{tpu_custom_call.1} parent=11 // pred_fallthru
          _
        // Predicated region
        $region45: #{tpu_custom_call.1} parent=11 // pred_check
          %p399 = pneg %p243
        $region46: #{tpu_custom_call.1} parent=11 // pred_check_branch
          %401 = sbr.rel (%p399) target = $region48
        $region47: #{tpu_custom_call.1} parent=11 // pred_region
          %s403 = ssub.s32 4096, 4096
          %404 = vsyncadd [#allocation9], %s403
          %s405 = sshll.u32 [#allocation10], 4
          %s406 = int_to_ptr.vmem [resolvable:$true] %s405
          %411 = dma.hbm_to_vmem [thread:$0]  %s9, 4096, %s406, [#allocation9], 256, 256, 16
        $region48: #{tpu_custom_call.1} parent=11 // pred_fallthru
          _
        // Predicated region
        $region49: #{tpu_custom_call.1} parent=11 // pred_check
          %p412 = pneg %p264
        $region50: #{tpu_custom_call.1} parent=11 // pred_check_branch
          %414 = sbr.rel (%p412) target = $region52
        $region51: #{tpu_custom_call.1} parent=11 // pred_region
          _
        $region52: #{tpu_custom_call.1} parent=11 // pred_fallthru
          _
        // Predicated region
        $region53: #{tpu_custom_call.1} parent=11 // pred_check
          %p415 = pneg %p285
        $region54: #{tpu_custom_call.1} parent=11 // pred_check_branch
          %417 = sbr.rel (%p415) target = $region56
        $region55: #{tpu_custom_call.1} parent=11 // pred_region
          %s419 = ssub.s32 4096, 4096
          %420 = vsyncadd [#allocation12], %s419
          %s421 = sshll.u32 [#allocation11], 4
          %s422 = int_to_ptr.vmem [resolvable:$true] %s421
          %427 = dma.hbm_to_vmem [thread:$0]  %s11, 4096, %s422, [#allocation12], 64, 64, 4
        $region56: #{tpu_custom_call.1} parent=11 // pred_fallthru
          _
        // Predicated region
        $region57: #{tpu_custom_call.1} parent=11 // pred_check
          %p428 = pneg %p306
        $region58: #{tpu_custom_call.1} parent=11 // pred_check_branch
          %430 = sbr.rel (%p428) target = $region60
        $region59: #{tpu_custom_call.1} parent=11 // pred_region
          _
        $region60: #{tpu_custom_call.1} parent=11 // pred_fallthru
          _
      $region12: #{tpu_custom_call.1} parent=5 // pred_fallthru
        _
      %p431 = scmp.lt.s32.totalorder %s28, 2
      // Predicated region
      $region61: #{tpu_custom_call.1} parent=5 // pred_check
        %p432 = pneg %p431
      $region62: #{tpu_custom_call.1} parent=5 // pred_check_branch
        %434 = sbr.rel (%p432) target = $region64
      $region63: #{tpu_custom_call.1} parent=5 // pred_region
        // Predicated region
        $region65: #{tpu_custom_call.1} parent=63 // pred_check
          %p435 = pneg %p48
        $region66: #{tpu_custom_call.1} parent=63 // pred_check_branch
          %437 = sbr.rel (%p435) target = $region68
        $region67: #{tpu_custom_call.1} parent=63 // pred_region
          %s438 = sand.u32 %s38, 1
          %s439 = scalar_lea.sflag [#allocation3], %s438
          %s440 = sand.u32 %s38, 1
          %s441 = smul.addr %s440, 8
          %s442 = scalar_lea.vmem [#allocation2], %s441
          %s444 = ssub.s32 128, 128
          %445 = vsyncadd %s439, %s444
          %s446 = smul.addr %s28, 128
          %s447 = scalar_lea.hbm %s0, %s446
          %s449 = sshll.u32 %s442, 4
          %s450 = int_to_ptr.vmem [resolvable:$true] %s449
          %452 = dma.hbm_to_vmem [thread:$0]  %s447, 128, %s450, %s439
        $region68: #{tpu_custom_call.1} parent=63 // pred_fallthru
          _
      $region64: #{tpu_custom_call.1} parent=5 // pred_fallthru
        _
      %p453 = scmp.le.s32.totalorder 1, %s28
      %p454 = scmp.lt.s32.totalorder %s28, 3
      %p455 = pnand %p453, %p454
      %p456 = pneg %p455
      // Predicated region
      $region69: #{tpu_custom_call.1} parent=5 // pred_check
        _
      $region70: #{tpu_custom_call.1} parent=5 // pred_check_branch
        %458 = sbr.rel (%p455) target = $region72
      $region71: #{tpu_custom_call.1} parent=5 // pred_region
        %s459 = ssub.s32 %s28, 1
        %s460 = sand.u32 %s41, 1
        %s461 = scalar_lea.sflag [#allocation3], %s460
        %s462 = sand.u32 %s41, 1
        %s463 = smul.addr %s462, 8
        %s464 = scalar_lea.vmem [#allocation2], %s463
        // Predicated region
        $region73: #{tpu_custom_call.1} parent=71 // pred_check
          %p465 = pneg %p54
        $region74: #{tpu_custom_call.1} parent=71 // pred_check_branch
          %467 = sbr.rel (%p465) target = $region76
        $region75: #{tpu_custom_call.1} parent=71 // pred_region
          %468 = dma.done %s461, 128
        $region76: #{tpu_custom_call.1} parent=71 // pred_fallthru
          _
        // Predicated region
        $region77: #{tpu_custom_call.1} parent=71 // pred_check
          %p469 = pneg %p117
        $region78: #{tpu_custom_call.1} parent=71 // pred_check_branch
          %471 = sbr.rel (%p469) target = $region80
        $region79: #{tpu_custom_call.1} parent=71 // pred_region
          %472 = dma.done [#allocation6], 3072
        $region80: #{tpu_custom_call.1} parent=71 // pred_fallthru
          _
        // Predicated region
        $region81: #{tpu_custom_call.1} parent=71 // pred_check
          %p473 = pneg %p138
        $region82: #{tpu_custom_call.1} parent=71 // pred_check_branch
          %475 = sbr.rel (%p473) target = $region84
        $region83: #{tpu_custom_call.1} parent=71 // pred_region
          %476 = dma.done [#allocation6], 128
        $region84: #{tpu_custom_call.1} parent=71 // pred_fallthru
          _
        // Predicated region
        $region85: #{tpu_custom_call.1} parent=71 // pred_check
          %p477 = pneg %p159
        $region86: #{tpu_custom_call.1} parent=71 // pred_check_branch
          %479 = sbr.rel (%p477) target = $region88
        $region87: #{tpu_custom_call.1} parent=71 // pred_region
          %480 = dma.done [#allocation9], 1024
        $region88: #{tpu_custom_call.1} parent=71 // pred_fallthru
          _
        // Predicated region
        $region89: #{tpu_custom_call.1} parent=71 // pred_check
          %p481 = pneg %p243
        $region90: #{tpu_custom_call.1} parent=71 // pred_check_branch
          %483 = sbr.rel (%p481) target = $region92
        $region91: #{tpu_custom_call.1} parent=71 // pred_region
          %484 = dma.done [#allocation9], 4096
        $region92: #{tpu_custom_call.1} parent=71 // pred_fallthru
          _
        // Predicated region
        $region93: #{tpu_custom_call.1} parent=71 // pred_check
          %p485 = pneg %p285
        $region94: #{tpu_custom_call.1} parent=71 // pred_check_branch
          %487 = sbr.rel (%p485) target = $region96
        $region95: #{tpu_custom_call.1} parent=71 // pred_region
          %488 = dma.done [#allocation12], 4096
        $region96: #{tpu_custom_call.1} parent=71 // pred_fallthru
          _
        %s489 = sand.u32 %s41, 1
        %s490 = scalar_lea.sflag [#allocation3], %s489
        %s491 = sand.u32 %s41, 1
        %s492 = smul.addr %s491, 8
        %s493 = scalar_lea.vmem [#allocation2], %s492
        %p494 = pneg %p54
        %p495 = pneg %p51
        %p496 = pneg %p75
        %p497 = pneg %p72
        %p498 = pneg %p96
        %p499 = pneg %p93
        %p500 = pneg %p117
        %p501 = pneg %p114
        %p502 = pneg %p138
        %p503 = pneg %p135
        %p504 = pneg %p159
        %p505 = pneg %p156
        %p506 = pneg %p180
        %p507 = pneg %p177
        %p508 = pneg %p201
        %p509 = pneg %p198
        %p510 = pneg %p222
        %p511 = pneg %p219
        %p512 = pneg %p243
        %p513 = pneg %p240
        %p514 = pneg %p264
        %p515 = pneg %p261
        %p516 = pneg %p285
        %p517 = pneg %p282
        %p518 = pneg %p306
        %p519 = pneg %p303
        %p520 = pneg %p332
        %p521 = pneg %p329
        %s522 = sand.u32 %s319, 1
        %s523 = scalar_lea.sflag [#allocation4], %s522
        %s524 = sand.u32 %s319, 1
        %s525 = smul.addr %s524, 8
        %s526 = scalar_lea.vmem [#allocation13], %s525
        %v528 = vld [vmem:[%s464] sm:$0xff]
        %v529 = vld [vmem:[%s1] sm:$0x1]
        %v530 = vld [vmem:[%s2] sm:$0x1]
        %531 = vadd.xlane.f32.xlu0 %v528
        %v532 = vpop.xlane.xlu0 %531
        %v533 = vrcp.pop 128.0
        %v534 = vmul.f32 %v532, %v533
        %v535 = vsub.f32 %v528, %v534
        %v536 = vmul.f32 %v535, %v535
        %537 = vadd.xlane.f32.xlu0 %v536
        %v538 = vpop.xlane.xlu0 %537
        %v539 = vmul.f32 %v538, %v533
        %v540 = vadd.f32 %v539, 1e-05
        %v541 = vrsqrt.pop %v540
        %v542 = vmul.f32 %v535, %v541
        %v544 = vlaneseq
        %v545 = vshrl.u32 %v544, 7
        %v546 = vsub.s32 0, %v545
        %v547 = vrot.slane %v529, %v546
        %v549 = vmul.f32 %v542, %v547
        %v551 = vlaneseq
        %v552 = vshrl.u32 %v551, 7
        %v553 = vsub.s32 0, %v552
        %v554 = vrot.slane %v530, %v553
        %v556 = vadd.f32 %v549, %v554
        %v557 = vpack.c.bf16 %v556, %v556
        %v558 = vld [vmem:[#allocation5] sm:$0xf]
        %v559 = vld [vmem:[#allocation5 + $0x4] sm:$0xf]
        %v560 = vld [vmem:[#allocation5 + $0x8] sm:$0xf]
        %v561 = vld [vmem:[#allocation5 + $0xc] sm:$0xf]
        %v562 = vld [vmem:[#allocation5 + $0x10] sm:$0xf]
        %v563 = vld [vmem:[#allocation5 + $0x14] sm:$0xf]
        %v564 = vld [vmem:[#allocation5 + $0x18] sm:$0xf]
        %v565 = vld [vmem:[#allocation5 + $0x1c] sm:$0xf]
        %v566 = vld [vmem:[#allocation5 + $0x20] sm:$0xf]
        %v567 = vld [vmem:[#allocation5 + $0x24] sm:$0xf]
        %v568 = vld [vmem:[#allocation5 + $0x28] sm:$0xf]
        %v569 = vld [vmem:[#allocation5 + $0x2c] sm:$0xf]
        %v570 = vld [vmem:[#allocation5 + $0x30] sm:$0xf]
        %v571 = vld [vmem:[#allocation5 + $0x34] sm:$0xf]
        %v572 = vld [vmem:[#allocation5 + $0x38] sm:$0xf]
        %v573 = vld [vmem:[#allocation5 + $0x3c] sm:$0xf]
        %v574 = vld [vmem:[#allocation5 + $0x40] sm:$0xf]
        %v575 = vld [vmem:[#allocation5 + $0x44] sm:$0xf]
        %v576 = vld [vmem:[#allocation5 + $0x48] sm:$0xf]
        %v577 = vld [vmem:[#allocation5 + $0x4c] sm:$0xf]
        %v578 = vld [vmem:[#allocation5 + $0x50] sm:$0xf]
        %v579 = vld [vmem:[#allocation5 + $0x54] sm:$0xf]
        %v580 = vld [vmem:[#allocation5 + $0x58] sm:$0xf]
        %v581 = vld [vmem:[#allocation5 + $0x5c] sm:$0xf]
        %v582 = vld [vmem:[#allocation5 + $0x60] sm:$0xf]
        %v583 = vld [vmem:[#allocation5 + $0x64] sm:$0xf]
        %v584 = vld [vmem:[#allocation5 + $0x68] sm:$0xf]
        %v585 = vld [vmem:[#allocation5 + $0x6c] sm:$0xf]
        %v586 = vld [vmem:[#allocation5 + $0x70] sm:$0xf]
        %v587 = vld [vmem:[#allocation5 + $0x74] sm:$0xf]
        %v588 = vld [vmem:[#allocation5 + $0x78] sm:$0xf]
        %v589 = vld [vmem:[#allocation5 + $0x7c] sm:$0xf]
        %v590 = vld [vmem:[#allocation5 + $0x80] sm:$0xf]
        %v591 = vld [vmem:[#allocation5 + $0x84] sm:$0xf]
        %v592 = vld [vmem:[#allocation5 + $0x88] sm:$0xf]
        %v593 = vld [vmem:[#allocation5 + $0x8c] sm:$0xf]
        %v594 = vld [vmem:[#allocation5 + $0x90] sm:$0xf]
        %v595 = vld [vmem:[#allocation5 + $0x94] sm:$0xf]
        %v596 = vld [vmem:[#allocation5 + $0x98] sm:$0xf]
        %v597 = vld [vmem:[#allocation5 + $0x9c] sm:$0xf]
        %v598 = vld [vmem:[#allocation5 + $0xa0] sm:$0xf]
        %v599 = vld [vmem:[#allocation5 + $0xa4] sm:$0xf]
        %v600 = vld [vmem:[#allocation5 + $0xa8] sm:$0xf]
        %v601 = vld [vmem:[#allocation5 + $0xac] sm:$0xf]
        %v602 = vld [vmem:[#allocation5 + $0xb0] sm:$0xf]
        %v603 = vld [vmem:[#allocation5 + $0xb4] sm:$0xf]
        %v604 = vld [vmem:[#allocation5 + $0xb8] sm:$0xf]
        %v605 = vld [vmem:[#allocation5 + $0xbc] sm:$0xf]
        %v654 = vunpack.c.l.b16 %v558
        %v655 = vunpack.c.l.b16 %v559
        %v656 = vunpack.c.l.b16 %v560
        %v657 = vunpack.c.l.b16 %v561
        %v658 = vunpack.c.l.b16 %v562
        %v659 = vunpack.c.l.b16 %v563
        %v660 = vunpack.c.l.b16 %v564
        %v661 = vunpack.c.l.b16 %v565
        %v662 = vunpack.c.l.b16 %v566
        %v663 = vunpack.c.l.b16 %v567
        %v664 = vunpack.c.l.b16 %v568
        %v665 = vunpack.c.l.b16 %v569
        %v666 = vunpack.c.l.b16 %v570
        %v667 = vunpack.c.l.b16 %v571
        %v668 = vunpack.c.l.b16 %v572
        %v669 = vunpack.c.l.b16 %v573
        %v670 = vunpack.c.l.b16 %v574
        %v671 = vunpack.c.l.b16 %v575
        %v672 = vunpack.c.l.b16 %v576
        %v673 = vunpack.c.l.b16 %v577
        %v674 = vunpack.c.l.b16 %v578
        %v675 = vunpack.c.l.b16 %v579
        %v676 = vunpack.c.l.b16 %v580
        %v677 = vunpack.c.l.b16 %v581
        %v678 = vunpack.c.l.b16 %v582
        %v679 = vunpack.c.l.b16 %v583
        %v680 = vunpack.c.l.b16 %v584
        %v681 = vunpack.c.l.b16 %v585
        %v682 = vunpack.c.l.b16 %v586
        %v683 = vunpack.c.l.b16 %v587
        %v684 = vunpack.c.l.b16 %v588
        %v685 = vunpack.c.l.b16 %v589
        %v686 = vunpack.c.l.b16 %v590
        %v687 = vunpack.c.l.b16 %v591
        %v688 = vunpack.c.l.b16 %v592
        %v689 = vunpack.c.l.b16 %v593
        %v690 = vunpack.c.l.b16 %v594
        %v691 = vunpack.c.l.b16 %v595
        %v692 = vunpack.c.l.b16 %v596
        %v693 = vunpack.c.l.b16 %v597
        %v694 = vunpack.c.l.b16 %v598
        %v695 = vunpack.c.l.b16 %v599
        %v696 = vunpack.c.l.b16 %v600
        %v697 = vunpack.c.l.b16 %v601
        %v698 = vunpack.c.l.b16 %v602
        %v699 = vunpack.c.l.b16 %v603
        %v700 = vunpack.c.l.b16 %v604
        %v701 = vunpack.c.l.b16 %v605
        %v702 = vpack.c.b16 %v655, %v654
        %v703 = vpack.c.b16 %v657, %v656
        %v704 = vpack.c.b16 %v659, %v658
        %v705 = vpack.c.b16 %v661, %v660
        %v706 = vpack.c.b16 %v663, %v662
        %v707 = vpack.c.b16 %v665, %v664
        %v708 = vpack.c.b16 %v667, %v666
        %v709 = vpack.c.b16 %v669, %v668
        %v710 = vpack.c.b16 %v671, %v670
        %v711 = vpack.c.b16 %v673, %v672
        %v712 = vpack.c.b16 %v675, %v674
        %v713 = vpack.c.b16 %v677, %v676
        %v714 = vpack.c.b16 %v679, %v678
        %v715 = vpack.c.b16 %v681, %v680
        %v716 = vpack.c.b16 %v683, %v682
        %v717 = vpack.c.b16 %v685, %v684
        %v718 = vpack.c.b16 %v687, %v686
        %v719 = vpack.c.b16 %v689, %v688
        %v720 = vpack.c.b16 %v691, %v690
        %v721 = vpack.c.b16 %v693, %v692
        %v722 = vpack.c.b16 %v695, %v694
        %v723 = vpack.c.b16 %v697, %v696
        %v724 = vpack.c.b16 %v699, %v698
        %v725 = vpack.c.b16 %v701, %v700
        %750 = vmatprep.subr.bf16.mxu0 0
        %751 = vmatpush1.bf16.xpose.msra.mxu0 0
        %752 = vmatprep.subr.bf16.mxu0 0
        %753 = vmatpush1.bf16.xpose.msra.mxu0 0
        %754 = vmatprep.subr.bf16.mxu0 0
        %755 = vmatpush1.bf16.xpose.msra.mxu0 0
        %756 = vmatprep.subr.bf16.mxu0 0
        %757 = vmatpush1.bf16.xpose.msra.mxu0 0
        %758 = vmatprep.subr.bf16.mxu0 0
        %759 = vmatpush1.bf16.xpose.msra.mxu0 0
        %760 = vmatprep.subr.bf16.mxu0 0
        %761 = vmatpush1.bf16.xpose.msra.mxu0 0
        %762 = vmatprep.subr.bf16.mxu0 0
        %763 = vmatpush1.bf16.xpose.msra.mxu0 0
        %764 = vmatprep.subr.bf16.mxu0 0
        %765 = vmatpush1.bf16.xpose.msra.mxu0 %v557
        %766 = vmatprep.subr.bf16.mxu0 0
        %767 = vmatpush2.bf16.xpose.msra.mxu0 0
        %768 = vmatprep.subr.bf16.mxu0 0
        %769 = vmatpush2.bf16.xpose.msra.mxu0 0
        %770 = vmatprep.subr.bf16.mxu0 0
        %771 = vmatpush2.bf16.xpose.msra.mxu0 0
        %772 = vmatprep.subr.bf16.mxu0 0
        %773 = vmatpush2.bf16.xpose.msra.mxu0 0
        %774 = vmatprep.subr.bf16.mxu0 0
        %775 = vmatpush2.bf16.xpose.msra.mxu0 0
        %776 = vmatprep.subr.bf16.mxu0 0
        %777 = vmatpush2.bf16.xpose.msra.mxu0 0
        %778 = vmatprep.subr.bf16.mxu0 0
        %779 = vmatpush2.bf16.xpose.msra.mxu0 0
        %780 = vmatprep.subr.bf16.mxu0 0
        %781 = vmatpush2.bf16.xpose.msra.mxu0 0
        %782 = vmatprep.mubr.bf16.mxu0 0
        %783 = vmatmul.mubr.bf16.gmra.mxu0 %v702
        %v784 = vpop.f32.mrf.mxu0
        %v785 = vadd.f32 0.0, %v784
        %v786 = vpop.f32.mrf.mxu0
        %v787 = vpop.f32.mrf.mxu0
        %v788 = vadd.f32 0.0, %v787
        %v789 = vpop.f32.mrf.mxu0
        %790 = vmatprep.mubr.bf16.mxu0 0
        %791 = vmatmul.mubr.bf16.gmra.mxu0 %v703
        %v792 = vpop.f32.mrf.mxu0
        %v793 = vadd.f32 0.0, %v792
        %v794 = vpop.f32.mrf.mxu0
        %v795 = vpop.f32.mrf.mxu0
        %v796 = vadd.f32 0.0, %v795
        %v797 = vpop.f32.mrf.mxu0
        %798 = vmatprep.mubr.bf16.mxu0 0
        %799 = vmatmul.mubr.bf16.gmra.mxu0 %v704
        %v800 = vpop.f32.mrf.mxu0
        %v801 = vadd.f32 0.0, %v800
        %v802 = vpop.f32.mrf.mxu0
        %v803 = vpop.f32.mrf.mxu0
        %v804 = vadd.f32 0.0, %v803
        %v805 = vpop.f32.mrf.mxu0
        %806 = vmatprep.mubr.bf16.mxu0 0
        %807 = vmatmul.mubr.bf16.gmra.mxu0 %v705
        %v808 = vpop.f32.mrf.mxu0
        %v809 = vadd.f32 0.0, %v808
        %v810 = vpop.f32.mrf.mxu0
        %v811 = vpop.f32.mrf.mxu0
        %v812 = vadd.f32 0.0, %v811
        %v813 = vpop.f32.mrf.mxu0
        %814 = vmatprep.mubr.bf16.mxu0 0
        %815 = vmatmul.mubr.bf16.gmra.mxu0 %v706
        %v816 = vpop.f32.mrf.mxu0
        %v817 = vadd.f32 0.0, %v816
        %v818 = vpop.f32.mrf.mxu0
        %v819 = vpop.f32.mrf.mxu0
        %v820 = vadd.f32 0.0, %v819
        %v821 = vpop.f32.mrf.mxu0
        %822 = vmatprep.mubr.bf16.mxu0 0
        %823 = vmatmul.mubr.bf16.gmra.mxu0 %v707
        %v824 = vpop.f32.mrf.mxu0
        %v825 = vadd.f32 0.0, %v824
        %v826 = vpop.f32.mrf.mxu0
        %v827 = vpop.f32.mrf.mxu0
        %v828 = vadd.f32 0.0, %v827
        %v829 = vpop.f32.mrf.mxu0
        %830 = vmatprep.mubr.bf16.mxu0 0
        %831 = vmatmul.mubr.bf16.gmra.mxu0 %v708
        %v832 = vpop.f32.mrf.mxu0
        %v833 = vadd.f32 0.0, %v832
        %v834 = vpop.f32.mrf.mxu0
        %v835 = vpop.f32.mrf.mxu0
        %v836 = vadd.f32 0.0, %v835
        %v837 = vpop.f32.mrf.mxu0
        %838 = vmatprep.mubr.bf16.mxu0 0
        %839 = vmatmul.mubr.bf16.gmra.mxu0 %v709
        %v840 = vpop.f32.mrf.mxu0
        %v841 = vadd.f32 0.0, %v840
        %v842 = vpop.f32.mrf.mxu0
        %v843 = vpop.f32.mrf.mxu0
        %v844 = vadd.f32 0.0, %v843
        %v845 = vpop.f32.mrf.mxu0
        %846 = vmatprep.mubr.bf16.mxu0 0
        %847 = vmatmul.mubr.bf16.gmra.mxu0 %v710
        %v848 = vpop.f32.mrf.mxu0
        %v849 = vadd.f32 0.0, %v848
        %v850 = vpop.f32.mrf.mxu0
        %v851 = vpop.f32.mrf.mxu0
        %v852 = vadd.f32 0.0, %v851
        %v853 = vpop.f32.mrf.mxu0
        %854 = vmatprep.mubr.bf16.mxu0 0
        %855 = vmatmul.mubr.bf16.gmra.mxu0 %v711
        %v856 = vpop.f32.mrf.mxu0
        %v857 = vadd.f32 0.0, %v856
        %v858 = vpop.f32.mrf.mxu0
        %v859 = vpop.f32.mrf.mxu0
        %v860 = vadd.f32 0.0, %v859
        %v861 = vpop.f32.mrf.mxu0
        %862 = vmatprep.mubr.bf16.mxu0 0
        %863 = vmatmul.mubr.bf16.gmra.mxu0 %v712
        %v864 = vpop.f32.mrf.mxu0
        %v865 = vadd.f32 0.0, %v864
        %v866 = vpop.f32.mrf.mxu0
        %v867 = vpop.f32.mrf.mxu0
        %v868 = vadd.f32 0.0, %v867
        %v869 = vpop.f32.mrf.mxu0
        %870 = vmatprep.mubr.bf16.mxu0 0
        %871 = vmatmul.mubr.bf16.gmra.mxu0 %v713
        %v872 = vpop.f32.mrf.mxu0
        %v873 = vadd.f32 0.0, %v872
        %v874 = vpop.f32.mrf.mxu0
        %v875 = vpop.f32.mrf.mxu0
        %v876 = vadd.f32 0.0, %v875
        %v877 = vpop.f32.mrf.mxu0
        %878 = vmatprep.mubr.bf16.mxu0 0
        %879 = vmatmul.mubr.bf16.gmra.mxu0 %v714
        %v880 = vpop.f32.mrf.mxu0
        %v881 = vadd.f32 0.0, %v880
        %v882 = vpop.f32.mrf.mxu0
        %v883 = vpop.f32.mrf.mxu0
        %v884 = vadd.f32 0.0, %v883
        %v885 = vpop.f32.mrf.mxu0
        %886 = vmatprep.mubr.bf16.mxu0 0
        %887 = vmatmul.mubr.bf16.gmra.mxu0 %v715
        %v888 = vpop.f32.mrf.mxu0
        %v889 = vadd.f32 0.0, %v888
        %v890 = vpop.f32.mrf.mxu0
        %v891 = vpop.f32.mrf.mxu0
        %v892 = vadd.f32 0.0, %v891
        %v893 = vpop.f32.mrf.mxu0
        %894 = vmatprep.mubr.bf16.mxu0 0
        %895 = vmatmul.mubr.bf16.gmra.mxu0 %v716
        %v896 = vpop.f32.mrf.mxu0
        %v897 = vadd.f32 0.0, %v896
        %v898 = vpop.f32.mrf.mxu0
        %v899 = vpop.f32.mrf.mxu0
        %v900 = vadd.f32 0.0, %v899
        %v901 = vpop.f32.mrf.mxu0
        %902 = vmatprep.mubr.bf16.mxu0 0
        %903 = vmatmul.mubr.bf16.gmra.mxu0 %v717
        %v904 = vpop.f32.mrf.mxu0
        %v905 = vadd.f32 0.0, %v904
        %v906 = vpop.f32.mrf.mxu0
        %v907 = vpop.f32.mrf.mxu0
        %v908 = vadd.f32 0.0, %v907
        %v909 = vpop.f32.mrf.mxu0
        %910 = vmatprep.mubr.bf16.mxu0 0
        %911 = vmatmul.mubr.bf16.gmra.mxu0 %v718
        %v912 = vpop.f32.mrf.mxu0
        %v913 = vadd.f32 0.0, %v912
        %v914 = vpop.f32.mrf.mxu0
        %v915 = vpop.f32.mrf.mxu0
        %v916 = vadd.f32 0.0, %v915
        %v917 = vpop.f32.mrf.mxu0
        %918 = vmatprep.mubr.bf16.mxu0 0
        %919 = vmatmul.mubr.bf16.gmra.mxu0 %v719
        %v920 = vpop.f32.mrf.mxu0
        %v921 = vadd.f32 0.0, %v920
        %v922 = vpop.f32.mrf.mxu0
        %v923 = vpop.f32.mrf.mxu0
        %v924 = vadd.f32 0.0, %v923
        %v925 = vpop.f32.mrf.mxu0
        %926 = vmatprep.mubr.bf16.mxu0 0
        %927 = vmatmul.mubr.bf16.gmra.mxu0 %v720
        %v928 = vpop.f32.mrf.mxu0
        %v929 = vadd.f32 0.0, %v928
        %v930 = vpop.f32.mrf.mxu0
        %v931 = vpop.f32.mrf.mxu0
        %v932 = vadd.f32 0.0, %v931
        %v933 = vpop.f32.mrf.mxu0
        %934 = vmatprep.mubr.bf16.mxu0 0
        %935 = vmatmul.mubr.bf16.gmra.mxu0 %v721
        %v936 = vpop.f32.mrf.mxu0
        %v937 = vadd.f32 0.0, %v936
        %v938 = vpop.f32.mrf.mxu0
        %v939 = vpop.f32.mrf.mxu0
        %v940 = vadd.f32 0.0, %v939
        %v941 = vpop.f32.mrf.mxu0
        %942 = vmatprep.mubr.bf16.mxu0 0
        %943 = vmatmul.mubr.bf16.gmra.mxu0 %v722
        %v944 = vpop.f32.mrf.mxu0
        %v945 = vadd.f32 0.0, %v944
        %v946 = vpop.f32.mrf.mxu0
        %v947 = vpop.f32.mrf.mxu0
        %v948 = vadd.f32 0.0, %v947
        %v949 = vpop.f32.mrf.mxu0
        %950 = vmatprep.mubr.bf16.mxu0 0
        %951 = vmatmul.mubr.bf16.gmra.mxu0 %v723
        %v952 = vpop.f32.mrf.mxu0
        %v953 = vadd.f32 0.0, %v952
        %v954 = vpop.f32.mrf.mxu0
        %v955 = vpop.f32.mrf.mxu0
        %v956 = vadd.f32 0.0, %v955
        %v957 = vpop.f32.mrf.mxu0
        %958 = vmatprep.mubr.bf16.mxu0 0
        %959 = vmatmul.mubr.bf16.gmra.mxu0 %v724
        %v960 = vpop.f32.mrf.mxu0
        %v961 = vadd.f32 0.0, %v960
        %v962 = vpop.f32.mrf.mxu0
        %v963 = vpop.f32.mrf.mxu0
        %v964 = vadd.f32 0.0, %v963
        %v965 = vpop.f32.mrf.mxu0
        %966 = vmatprep.mubr.bf16.mxu0 0
        %967 = vmatmul.mubr.bf16.gmra.mxu0 %v725
        %v968 = vpop.f32.mrf.mxu0
        %v969 = vadd.f32 0.0, %v968
        %v970 = vpop.f32.mrf.mxu0
        %v971 = vpop.f32.mrf.mxu0
        %v972 = vadd.f32 0.0, %v971
        %v973 = vpop.f32.mrf.mxu0
        %974 = vdwg.mxu0
        %v975 = vld [vmem:[#allocation7] sm:$0xff]
        %976 = vxpose.xlu0.b32.start [1/16] %v975, 128
        %977 = vxpose.xlu0.b32.cont [2/16] 0.0, 128
        %978 = vxpose.xlu0.b32.cont [3/16] 0.0, 128
        %979 = vxpose.xlu0.b32.cont [4/16] 0.0, 128
        %980 = vxpose.xlu0.b32.cont [5/16] 0.0, 128
        %981 = vxpose.xlu0.b32.cont [6/16] 0.0, 128
        %982 = vxpose.xlu0.b32.cont [7/16] 0.0, 128
        %983 = vxpose.xlu0.b32.cont [8/16] 0.0, 128
        %984 = vxpose.xlu0.b32.cont [9/16] 0.0, 128
        %985 = vxpose.xlu0.b32.cont [10/16] 0.0, 128
        %986 = vxpose.xlu0.b32.cont [11/16] 0.0, 128
        %987 = vxpose.xlu0.b32.cont [12/16] 0.0, 128
        %988 = vxpose.xlu0.b32.cont [13/16] 0.0, 128
        %989 = vxpose.xlu0.b32.cont [14/16] 0.0, 128
        %990 = vxpose.xlu0.b32.cont [15/16] 0.0, 128
        %991 = vxpose.xlu0.b32.end [16/16] 0.0, 128
        %v992 = vpop.trf.xlu0
        %v993 = vpop.trf.xlu0
        %v994 = vpop.trf.xlu0
        %v995 = vpop.trf.xlu0
        %v996 = vpop.trf.xlu0
        %v997 = vpop.trf.xlu0
        %v998 = vpop.trf.xlu0
        %v999 = vpop.trf.xlu0
        %v1000 = vpop.trf.xlu0
        %v1001 = vpop.trf.xlu0
        %v1002 = vpop.trf.xlu0
        %v1003 = vpop.trf.xlu0
        %v1004 = vpop.trf.xlu0
        %v1005 = vpop.trf.xlu0
        %v1006 = vpop.trf.xlu0
        %v1007 = vpop.trf.xlu0
        %1009 = vset.pattern.permute.xlu0 0
        %1010 = vperm.xlu0 %1009, %v992
        %v1011 = vpop.permute.xlu0 %1010
        %1014 = vset.pattern.permute.xlu0 0
        %1015 = vperm.xlu0 %1014, %v993
        %v1016 = vpop.permute.xlu0 %1015
        %1019 = vset.pattern.permute.xlu0 0
        %1020 = vperm.xlu0 %1019, %v994
        %v1021 = vpop.permute.xlu0 %1020
        %1024 = vset.pattern.permute.xlu0 0
        %1025 = vperm.xlu0 %1024, %v995
        %v1026 = vpop.permute.xlu0 %1025
        %1029 = vset.pattern.permute.xlu0 0
        %1030 = vperm.xlu0 %1029, %v996
        %v1031 = vpop.permute.xlu0 %1030
        %1034 = vset.pattern.permute.xlu0 0
        %1035 = vperm.xlu0 %1034, %v997
        %v1036 = vpop.permute.xlu0 %1035
        %1039 = vset.pattern.permute.xlu0 0
        %1040 = vperm.xlu0 %1039, %v998
        %v1041 = vpop.permute.xlu0 %1040
        %1044 = vset.pattern.permute.xlu0 0
        %1045 = vperm.xlu0 %1044, %v999
        %v1046 = vpop.permute.xlu0 %1045
        %1049 = vset.pattern.permute.xlu0 0
        %1050 = vperm.xlu0 %1049, %v1000
        %v1051 = vpop.permute.xlu0 %1050
        %1054 = vset.pattern.permute.xlu0 0
        %1055 = vperm.xlu0 %1054, %v1001
        %v1056 = vpop.permute.xlu0 %1055
        %1059 = vset.pattern.permute.xlu0 0
        %1060 = vperm.xlu0 %1059, %v1002
        %v1061 = vpop.permute.xlu0 %1060
        %1064 = vset.pattern.permute.xlu0 0
        %1065 = vperm.xlu0 %1064, %v1003
        %v1066 = vpop.permute.xlu0 %1065
        %1069 = vset.pattern.permute.xlu0 0
        %1070 = vperm.xlu0 %1069, %v1004
        %v1071 = vpop.permute.xlu0 %1070
        %1074 = vset.pattern.permute.xlu0 0
        %1075 = vperm.xlu0 %1074, %v1005
        %v1076 = vpop.permute.xlu0 %1075
        %1079 = vset.pattern.permute.xlu0 0
        %1080 = vperm.xlu0 %1079, %v1006
        %v1081 = vpop.permute.xlu0 %1080
        %1084 = vset.pattern.permute.xlu0 0
        %1085 = vperm.xlu0 %1084, %v1007
        %v1086 = vpop.permute.xlu0 %1085
        %v1088 = vadd.f32 %v785, %v1011
        %v1089 = vadd.f32 %v788, %v1016
        %v1090 = vadd.f32 %v793, %v1021
        %v1091 = vadd.f32 %v796, %v1026
        %v1092 = vadd.f32 %v801, %v1031
        %v1093 = vadd.f32 %v804, %v1036
        %v1094 = vadd.f32 %v809, %v1041
        %v1095 = vadd.f32 %v812, %v1046
        %v1096 = vadd.f32 %v817, %v1051
        %v1097 = vadd.f32 %v820, %v1056
        %v1098 = vadd.f32 %v825, %v1061
        %v1099 = vadd.f32 %v828, %v1066
        %v1100 = vadd.f32 %v833, %v1071
        %v1101 = vadd.f32 %v836, %v1076
        %v1102 = vadd.f32 %v841, %v1081
        %v1103 = vadd.f32 %v844, %v1086
        %v1104 = vpack.c.bf16 %v1089, %v1088
        %v1105 = vpack.c.bf16 %v1091, %v1090
        %v1106 = vpack.c.bf16 %v1093, %v1092
        %v1107 = vpack.c.bf16 %v1095, %v1094
        %v1108 = vpack.c.bf16 %v1097, %v1096
        %v1109 = vpack.c.bf16 %v1099, %v1098
        %v1110 = vpack.c.bf16 %v1101, %v1100
        %v1111 = vpack.c.bf16 %v1103, %v1102
        %1112 = vset.pattern.permute.xlu0 1
        %1113 = vperm.xlu0 %1112, %v992
        %v1114 = vpop.permute.xlu0 %1113
        %1116 = vset.pattern.permute.xlu0 1
        %1117 = vperm.xlu0 %1116, %v993
        %v1118 = vpop.permute.xlu0 %1117
        %1120 = vset.pattern.permute.xlu0 1
        %1121 = vperm.xlu0 %1120, %v994
        %v1122 = vpop.permute.xlu0 %1121
        %1124 = vset.pattern.permute.xlu0 1
        %1125 = vperm.xlu0 %1124, %v995
        %v1126 = vpop.permute.xlu0 %1125
        %1128 = vset.pattern.permute.xlu0 1
        %1129 = vperm.xlu0 %1128, %v996
        %v1130 = vpop.permute.xlu0 %1129
        %1132 = vset.pattern.permute.xlu0 1
        %1133 = vperm.xlu0 %1132, %v997
        %v1134 = vpop.permute.xlu0 %1133
        %1136 = vset.pattern.permute.xlu0 1
        %1137 = vperm.xlu0 %1136, %v998
        %v1138 = vpop.permute.xlu0 %1137
        %1140 = vset.pattern.permute.xlu0 1
        %1141 = vperm.xlu0 %1140, %v999
        %v1142 = vpop.permute.xlu0 %1141
        %1144 = vset.pattern.permute.xlu0 1
        %1145 = vperm.xlu0 %1144, %v1000
        %v1146 = vpop.permute.xlu0 %1145
        %1148 = vset.pattern.permute.xlu0 1
        %1149 = vperm.xlu0 %1148, %v1001
        %v1150 = vpop.permute.xlu0 %1149
        %1152 = vset.pattern.permute.xlu0 1
        %1153 = vperm.xlu0 %1152, %v1002
        %v1154 = vpop.permute.xlu0 %1153
        %1156 = vset.pattern.permute.xlu0 1
        %1157 = vperm.xlu0 %1156, %v1003
        %v1158 = vpop.permute.xlu0 %1157
        %1160 = vset.pattern.permute.xlu0 1
        %1161 = vperm.xlu0 %1160, %v1004
        %v1162 = vpop.permute.xlu0 %1161
        %1164 = vset.pattern.permute.xlu0 1
        %1165 = vperm.xlu0 %1164, %v1005
        %v1166 = vpop.permute.xlu0 %1165
        %1168 = vset.pattern.permute.xlu0 1
        %1169 = vperm.xlu0 %1168, %v1006
        %v1170 = vpop.permute.xlu0 %1169
        %1172 = vset.pattern.permute.xlu0 1
        %1173 = vperm.xlu0 %1172, %v1007
        %v1174 = vpop.permute.xlu0 %1173
        %v1176 = vadd.f32 %v849, %v1114
        %v1177 = vadd.f32 %v852, %v1118
        %v1178 = vadd.f32 %v857, %v1122
        %v1179 = vadd.f32 %v860, %v1126
        %v1180 = vadd.f32 %v865, %v1130
        %v1181 = vadd.f32 %v868, %v1134
        %v1182 = vadd.f32 %v873, %v1138
        %v1183 = vadd.f32 %v876, %v1142
        %v1184 = vadd.f32 %v881, %v1146
        %v1185 = vadd.f32 %v884, %v1150
        %v1186 = vadd.f32 %v889, %v1154
        %v1187 = vadd.f32 %v892, %v1158
        %v1188 = vadd.f32 %v897, %v1162
        %v1189 = vadd.f32 %v900, %v1166
        %v1190 = vadd.f32 %v905, %v1170
        %v1191 = vadd.f32 %v908, %v1174
        %v1192 = vpack.c.bf16 %v1177, %v1176
        %v1193 = vpack.c.bf16 %v1179, %v1178
        %v1194 = vpack.c.bf16 %v1181, %v1180
        %v1195 = vpack.c.bf16 %v1183, %v1182
        %v1196 = vpack.c.bf16 %v1185, %v1184
        %v1197 = vpack.c.bf16 %v1187, %v1186
        %v1198 = vpack.c.bf16 %v1189, %v1188
        %v1199 = vpack.c.bf16 %v1191, %v1190
        %1200 = vset.pattern.permute.xlu0 2
        %1201 = vperm.xlu0 %1200, %v992
        %v1202 = vpop.permute.xlu0 %1201
        %1204 = vset.pattern.permute.xlu0 2
        %1205 = vperm.xlu0 %1204, %v993
        %v1206 = vpop.permute.xlu0 %1205
        %1208 = vset.pattern.permute.xlu0 2
        %1209 = vperm.xlu0 %1208, %v994
        %v1210 = vpop.permute.xlu0 %1209
        %1212 = vset.pattern.permute.xlu0 2
        %1213 = vperm.xlu0 %1212, %v995
        %v1214 = vpop.permute.xlu0 %1213
        %1216 = vset.pattern.permute.xlu0 2
        %1217 = vperm.xlu0 %1216, %v996
        %v1218 = vpop.permute.xlu0 %1217
        %1220 = vset.pattern.permute.xlu0 2
        %1221 = vperm.xlu0 %1220, %v997
        %v1222 = vpop.permute.xlu0 %1221
        %1224 = vset.pattern.permute.xlu0 2
        %1225 = vperm.xlu0 %1224, %v998
        %v1226 = vpop.permute.xlu0 %1225
        %1228 = vset.pattern.permute.xlu0 2
        %1229 = vperm.xlu0 %1228, %v999
        %v1230 = vpop.permute.xlu0 %1229
        %1232 = vset.pattern.permute.xlu0 2
        %1233 = vperm.xlu0 %1232, %v1000
        %v1234 = vpop.permute.xlu0 %1233
        %1236 = vset.pattern.permute.xlu0 2
        %1237 = vperm.xlu0 %1236, %v1001
        %v1238 = vpop.permute.xlu0 %1237
        %1240 = vset.pattern.permute.xlu0 2
        %1241 = vperm.xlu0 %1240, %v1002
        %v1242 = vpop.permute.xlu0 %1241
        %1244 = vset.pattern.permute.xlu0 2
        %1245 = vperm.xlu0 %1244, %v1003
        %v1246 = vpop.permute.xlu0 %1245
        %1248 = vset.pattern.permute.xlu0 2
        %1249 = vperm.xlu0 %1248, %v1004
        %v1250 = vpop.permute.xlu0 %1249
        %1252 = vset.pattern.permute.xlu0 2
        %1253 = vperm.xlu0 %1252, %v1005
        %v1254 = vpop.permute.xlu0 %1253
        %1256 = vset.pattern.permute.xlu0 2
        %1257 = vperm.xlu0 %1256, %v1006
        %v1258 = vpop.permute.xlu0 %1257
        %1260 = vset.pattern.permute.xlu0 2
        %1261 = vperm.xlu0 %1260, %v1007
        %v1262 = vpop.permute.xlu0 %1261
        %v1264 = vadd.f32 %v913, %v1202
        %v1265 = vadd.f32 %v916, %v1206
        %v1266 = vadd.f32 %v921, %v1210
        %v1267 = vadd.f32 %v924, %v1214
        %v1268 = vadd.f32 %v929, %v1218
        %v1269 = vadd.f32 %v932, %v1222
        %v1270 = vadd.f32 %v937, %v1226
        %v1271 = vadd.f32 %v940, %v1230
        %v1272 = vadd.f32 %v945, %v1234
        %v1273 = vadd.f32 %v948, %v1238
        %v1274 = vadd.f32 %v953, %v1242
        %v1275 = vadd.f32 %v956, %v1246
        %v1276 = vadd.f32 %v961, %v1250
        %v1277 = vadd.f32 %v964, %v1254
        %v1278 = vadd.f32 %v969, %v1258
        %v1279 = vadd.f32 %v972, %v1262
        %v1280 = vpack.c.bf16 %v1265, %v1264
        %v1281 = vpack.c.bf16 %v1267, %v1266
        %v1282 = vpack.c.bf16 %v1269, %v1268
        %v1283 = vpack.c.bf16 %v1271, %v1270
        %v1284 = vpack.c.bf16 %v1273, %v1272
        %v1285 = vpack.c.bf16 %v1275, %v1274
        %v1286 = vpack.c.bf16 %v1277, %v1276
        %v1287 = vpack.c.bf16 %v1279, %v1278
        %1288 = vxpose.xlu0.c.b16.start [1/8] %v1104, 128
        %1289 = vxpose.xlu0.c.b16.cont [2/8] 0, 128
        %1290 = vxpose.xlu0.c.b16.cont [3/8] 0, 128
        %1291 = vxpose.xlu0.c.b16.cont [4/8] 0, 128
        %1292 = vxpose.xlu0.c.b16.cont [5/8] 0, 128
        %1293 = vxpose.xlu0.c.b16.cont [6/8] 0, 128
        %1294 = vxpose.xlu0.c.b16.cont [7/8] 0, 128
        %1295 = vxpose.xlu0.c.b16.end [8/8] 0, 128
        %v1296 = vpop.trf.xlu0
        %v1297 = vpop.trf.xlu0
        %v1298 = vpop.trf.xlu0
        %v1299 = vpop.trf.xlu0
        %v1300 = vpop.trf.xlu0
        %v1301 = vpop.trf.xlu0
        %v1302 = vpop.trf.xlu0
        %v1303 = vpop.trf.xlu0
        %vm1304 = vcmask 130048
        %v1306 = vsel %vm1304, %v1296, 0
        %1308 = vmatprep.subr.bf16.mxu0 0
        %1309 = vmatpush1.bf16.msra.mxu0 0
        %1310 = vmatprep.subr.bf16.mxu0 0
        %1311 = vmatpush1.bf16.msra.mxu0 0
        %1312 = vmatprep.subr.bf16.mxu0 0
        %1313 = vmatpush1.bf16.msra.mxu0 0
        %1314 = vmatprep.subr.bf16.mxu0 0
        %1315 = vmatpush1.bf16.msra.mxu0 0
        %1316 = vmatprep.subr.bf16.mxu0 0
        %1317 = vmatpush1.bf16.msra.mxu0 0
        %1318 = vmatprep.subr.bf16.mxu0 0
        %1319 = vmatpush1.bf16.msra.mxu0 0
        %1320 = vmatprep.subr.bf16.mxu0 0
        %1321 = vmatpush1.bf16.msra.mxu0 0
        %1322 = vmatprep.subr.bf16.mxu0 0
        %1323 = vmatpush1.bf16.msra.mxu0 %v1192
        %1324 = vmatprep.subr.bf16.mxu0 0
        %1325 = vmatpush2.bf16.msra.mxu0 0
        %1326 = vmatprep.subr.bf16.mxu0 0
        %1327 = vmatpush2.bf16.msra.mxu0 0
        %1328 = vmatprep.subr.bf16.mxu0 0
        %1329 = vmatpush2.bf16.msra.mxu0 0
        %1330 = vmatprep.subr.bf16.mxu0 0
        %1331 = vmatpush2.bf16.msra.mxu0 0
        %1332 = vmatprep.subr.bf16.mxu0 0
        %1333 = vmatpush2.bf16.msra.mxu0 0
        %1334 = vmatprep.subr.bf16.mxu0 0
        %1335 = vmatpush2.bf16.msra.mxu0 0
        %1336 = vmatprep.subr.bf16.mxu0 0
        %1337 = vmatpush2.bf16.msra.mxu0 0
        %1338 = vmatprep.subr.bf16.mxu0 0
        %1339 = vmatpush2.bf16.msra.mxu0 0
        %1340 = vmatprep.mubr.bf16.mxu0 0
        %1341 = vmatmul.mubr.bf16.gmra.mxu0 %v1306
        %v1342 = vpop.f32.mrf.mxu0
        %v1343 = vadd.f32 0.0, %v1342
        %v1344 = vpop.f32.mrf.mxu0
        %v1345 = vpop.f32.mrf.mxu0
        %v1346 = vpop.f32.mrf.mxu0
        %1347 = vdwg.mxu0
        %1348 = vxpose.xlu0.c.b16.start [1/8] %v1105, 128
        %1349 = vxpose.xlu0.c.b16.cont [2/8] 0, 128
        %1350 = vxpose.xlu0.c.b16.cont [3/8] 0, 128
        %1351 = vxpose.xlu0.c.b16.cont [4/8] 0, 128
        %1352 = vxpose.xlu0.c.b16.cont [5/8] 0, 128
        %1353 = vxpose.xlu0.c.b16.cont [6/8] 0, 128
        %1354 = vxpose.xlu0.c.b16.cont [7/8] 0, 128
        %1355 = vxpose.xlu0.c.b16.end [8/8] 0, 128
        %v1356 = vpop.trf.xlu0
        %v1357 = vpop.trf.xlu0
        %v1358 = vpop.trf.xlu0
        %v1359 = vpop.trf.xlu0
        %v1360 = vpop.trf.xlu0
        %v1361 = vpop.trf.xlu0
        %v1362 = vpop.trf.xlu0
        %v1363 = vpop.trf.xlu0
        %v1365 = vsel %vm1304, %v1356, 0
        %1367 = vmatprep.subr.bf16.mxu0 0
        %1368 = vmatpush1.bf16.msra.mxu0 0
        %1369 = vmatprep.subr.bf16.mxu0 0
        %1370 = vmatpush1.bf16.msra.mxu0 0
        %1371 = vmatprep.subr.bf16.mxu0 0
        %1372 = vmatpush1.bf16.msra.mxu0 0
        %1373 = vmatprep.subr.bf16.mxu0 0
        %1374 = vmatpush1.bf16.msra.mxu0 0
        %1375 = vmatprep.subr.bf16.mxu0 0
        %1376 = vmatpush1.bf16.msra.mxu0 0
        %1377 = vmatprep.subr.bf16.mxu0 0
        %1378 = vmatpush1.bf16.msra.mxu0 0
        %1379 = vmatprep.subr.bf16.mxu0 0
        %1380 = vmatpush1.bf16.msra.mxu0 0
        %1381 = vmatprep.subr.bf16.mxu0 0
        %1382 = vmatpush1.bf16.msra.mxu0 %v1193
        %1383 = vmatprep.subr.bf16.mxu0 0
        %1384 = vmatpush2.bf16.msra.mxu0 0
        %1385 = vmatprep.subr.bf16.mxu0 0
        %1386 = vmatpush2.bf16.msra.mxu0 0
        %1387 = vmatprep.subr.bf16.mxu0 0
        %1388 = vmatpush2.bf16.msra.mxu0 0
        %1389 = vmatprep.subr.bf16.mxu0 0
        %1390 = vmatpush2.bf16.msra.mxu0 0
        %1391 = vmatprep.subr.bf16.mxu0 0
        %1392 = vmatpush2.bf16.msra.mxu0 0
        %1393 = vmatprep.subr.bf16.mxu0 0
        %1394 = vmatpush2.bf16.msra.mxu0 0
        %1395 = vmatprep.subr.bf16.mxu0 0
        %1396 = vmatpush2.bf16.msra.mxu0 0
        %1397 = vmatprep.subr.bf16.mxu0 0
        %1398 = vmatpush2.bf16.msra.mxu0 0
        %1399 = vmatprep.mubr.bf16.mxu0 0
        %1400 = vmatmul.mubr.bf16.gmra.mxu0 %v1365
        %v1401 = vpop.f32.mrf.mxu0
        %v1402 = vadd.f32 0.0, %v1401
        %v1403 = vpop.f32.mrf.mxu0
        %v1404 = vpop.f32.mrf.mxu0
        %v1405 = vpop.f32.mrf.mxu0
        %1406 = vdwg.mxu0
        %1407 = vxpose.xlu0.c.b16.start [1/8] %v1106, 128
        %1408 = vxpose.xlu0.c.b16.cont [2/8] 0, 128
        %1409 = vxpose.xlu0.c.b16.cont [3/8] 0, 128
        %1410 = vxpose.xlu0.c.b16.cont [4/8] 0, 128
        %1411 = vxpose.xlu0.c.b16.cont [5/8] 0, 128
        %1412 = vxpose.xlu0.c.b16.cont [6/8] 0, 128
        %1413 = vxpose.xlu0.c.b16.cont [7/8] 0, 128
        %1414 = vxpose.xlu0.c.b16.end [8/8] 0, 128
        %v1415 = vpop.trf.xlu0
        %v1416 = vpop.trf.xlu0
        %v1417 = vpop.trf.xlu0
        %v1418 = vpop.trf.xlu0
        %v1419 = vpop.trf.xlu0
        %v1420 = vpop.trf.xlu0
        %v1421 = vpop.trf.xlu0
        %v1422 = vpop.trf.xlu0
        %v1424 = vsel %vm1304, %v1415, 0
        %1426 = vmatprep.subr.bf16.mxu0 0
        %1427 = vmatpush1.bf16.msra.mxu0 0
        %1428 = vmatprep.subr.bf16.mxu0 0
        %1429 = vmatpush1.bf16.msra.mxu0 0
        %1430 = vmatprep.subr.bf16.mxu0 0
        %1431 = vmatpush1.bf16.msra.mxu0 0
        %1432 = vmatprep.subr.bf16.mxu0 0
        %1433 = vmatpush1.bf16.msra.mxu0 0
        %1434 = vmatprep.subr.bf16.mxu0 0
        %1435 = vmatpush1.bf16.msra.mxu0 0
        %1436 = vmatprep.subr.bf16.mxu0 0
        %1437 = vmatpush1.bf16.msra.mxu0 0
        %1438 = vmatprep.subr.bf16.mxu0 0
        %1439 = vmatpush1.bf16.msra.mxu0 0
        %1440 = vmatprep.subr.bf16.mxu0 0
        %1441 = vmatpush1.bf16.msra.mxu0 %v1194
        %1442 = vmatprep.subr.bf16.mxu0 0
        %1443 = vmatpush2.bf16.msra.mxu0 0
        %1444 = vmatprep.subr.bf16.mxu0 0
        %1445 = vmatpush2.bf16.msra.mxu0 0
        %1446 = vmatprep.subr.bf16.mxu0 0
        %1447 = vmatpush2.bf16.msra.mxu0 0
        %1448 = vmatprep.subr.bf16.mxu0 0
        %1449 = vmatpush2.bf16.msra.mxu0 0
        %1450 = vmatprep.subr.bf16.mxu0 0
        %1451 = vmatpush2.bf16.msra.mxu0 0
        %1452 = vmatprep.subr.bf16.mxu0 0
        %1453 = vmatpush2.bf16.msra.mxu0 0
        %1454 = vmatprep.subr.bf16.mxu0 0
        %1455 = vmatpush2.bf16.msra.mxu0 0
        %1456 = vmatprep.subr.bf16.mxu0 0
        %1457 = vmatpush2.bf16.msra.mxu0 0
        %1458 = vmatprep.mubr.bf16.mxu0 0
        %1459 = vmatmul.mubr.bf16.gmra.mxu0 %v1424
        %v1460 = vpop.f32.mrf.mxu0
        %v1461 = vadd.f32 0.0, %v1460
        %v1462 = vpop.f32.mrf.mxu0
        %v1463 = vpop.f32.mrf.mxu0
        %v1464 = vpop.f32.mrf.mxu0
        %1465 = vdwg.mxu0
        %1466 = vxpose.xlu0.c.b16.start [1/8] %v1107, 128
        %1467 = vxpose.xlu0.c.b16.cont [2/8] 0, 128
        %1468 = vxpose.xlu0.c.b16.cont [3/8] 0, 128
        %1469 = vxpose.xlu0.c.b16.cont [4/8] 0, 128
        %1470 = vxpose.xlu0.c.b16.cont [5/8] 0, 128
        %1471 = vxpose.xlu0.c.b16.cont [6/8] 0, 128
        %1472 = vxpose.xlu0.c.b16.cont [7/8] 0, 128
        %1473 = vxpose.xlu0.c.b16.end [8/8] 0, 128
        %v1474 = vpop.trf.xlu0
        %v1475 = vpop.trf.xlu0
        %v1476 = vpop.trf.xlu0
        %v1477 = vpop.trf.xlu0
        %v1478 = vpop.trf.xlu0
        %v1479 = vpop.trf.xlu0
        %v1480 = vpop.trf.xlu0
        %v1481 = vpop.trf.xlu0
        %v1483 = vsel %vm1304, %v1474, 0
        %1485 = vmatprep.subr.bf16.mxu0 0
        %1486 = vmatpush1.bf16.msra.mxu0 0
        %1487 = vmatprep.subr.bf16.mxu0 0
        %1488 = vmatpush1.bf16.msra.mxu0 0
        %1489 = vmatprep.subr.bf16.mxu0 0
        %1490 = vmatpush1.bf16.msra.mxu0 0
        %1491 = vmatprep.subr.bf16.mxu0 0
        %1492 = vmatpush1.bf16.msra.mxu0 0
        %1493 = vmatprep.subr.bf16.mxu0 0
        %1494 = vmatpush1.bf16.msra.mxu0 0
        %1495 = vmatprep.subr.bf16.mxu0 0
        %1496 = vmatpush1.bf16.msra.mxu0 0
        %1497 = vmatprep.subr.bf16.mxu0 0
        %1498 = vmatpush1.bf16.msra.mxu0 0
        %1499 = vmatprep.subr.bf16.mxu0 0
        %1500 = vmatpush1.bf16.msra.mxu0 %v1195
        %1501 = vmatprep.subr.bf16.mxu0 0
        %1502 = vmatpush2.bf16.msra.mxu0 0
        %1503 = vmatprep.subr.bf16.mxu0 0
        %1504 = vmatpush2.bf16.msra.mxu0 0
        %1505 = vmatprep.subr.bf16.mxu0 0
        %1506 = vmatpush2.bf16.msra.mxu0 0
        %1507 = vmatprep.subr.bf16.mxu0 0
        %1508 = vmatpush2.bf16.msra.mxu0 0
        %1509 = vmatprep.subr.bf16.mxu0 0
        %1510 = vmatpush2.bf16.msra.mxu0 0
        %1511 = vmatprep.subr.bf16.mxu0 0
        %1512 = vmatpush2.bf16.msra.mxu0 0
        %1513 = vmatprep.subr.bf16.mxu0 0
        %1514 = vmatpush2.bf16.msra.mxu0 0
        %1515 = vmatprep.subr.bf16.mxu0 0
        %1516 = vmatpush2.bf16.msra.mxu0 0
        %1517 = vmatprep.mubr.bf16.mxu0 0
        %1518 = vmatmul.mubr.bf16.gmra.mxu0 %v1483
        %v1519 = vpop.f32.mrf.mxu0
        %v1520 = vadd.f32 0.0, %v1519
        %v1521 = vpop.f32.mrf.mxu0
        %v1522 = vpop.f32.mrf.mxu0
        %v1523 = vpop.f32.mrf.mxu0
        %1524 = vdwg.mxu0
        %1525 = vxpose.xlu0.c.b16.start [1/8] %v1108, 128
        %1526 = vxpose.xlu0.c.b16.cont [2/8] 0, 128
        %1527 = vxpose.xlu0.c.b16.cont [3/8] 0, 128
        %1528 = vxpose.xlu0.c.b16.cont [4/8] 0, 128
        %1529 = vxpose.xlu0.c.b16.cont [5/8] 0, 128
        %1530 = vxpose.xlu0.c.b16.cont [6/8] 0, 128
        %1531 = vxpose.xlu0.c.b16.cont [7/8] 0, 128
        %1532 = vxpose.xlu0.c.b16.end [8/8] 0, 128
        %v1533 = vpop.trf.xlu0
        %v1534 = vpop.trf.xlu0
        %v1535 = vpop.trf.xlu0
        %v1536 = vpop.trf.xlu0
        %v1537 = vpop.trf.xlu0
        %v1538 = vpop.trf.xlu0
        %v1539 = vpop.trf.xlu0
        %v1540 = vpop.trf.xlu0
        %v1542 = vsel %vm1304, %v1533, 0
        %1544 = vmatprep.subr.bf16.mxu0 0
        %1545 = vmatpush1.bf16.msra.mxu0 0
        %1546 = vmatprep.subr.bf16.mxu0 0
        %1547 = vmatpush1.bf16.msra.mxu0 0
        %1548 = vmatprep.subr.bf16.mxu0 0
        %1549 = vmatpush1.bf16.msra.mxu0 0
        %1550 = vmatprep.subr.bf16.mxu0 0
        %1551 = vmatpush1.bf16.msra.mxu0 0
        %1552 = vmatprep.subr.bf16.mxu0 0
        %1553 = vmatpush1.bf16.msra.mxu0 0
        %1554 = vmatprep.subr.bf16.mxu0 0
        %1555 = vmatpush1.bf16.msra.mxu0 0
        %1556 = vmatprep.subr.bf16.mxu0 0
        %1557 = vmatpush1.bf16.msra.mxu0 0
        %1558 = vmatprep.subr.bf16.mxu0 0
        %1559 = vmatpush1.bf16.msra.mxu0 %v1196
        %1560 = vmatprep.subr.bf16.mxu0 0
        %1561 = vmatpush2.bf16.msra.mxu0 0
        %1562 = vmatprep.subr.bf16.mxu0 0
        %1563 = vmatpush2.bf16.msra.mxu0 0
        %1564 = vmatprep.subr.bf16.mxu0 0
        %1565 = vmatpush2.bf16.msra.mxu0 0
        %1566 = vmatprep.subr.bf16.mxu0 0
        %1567 = vmatpush2.bf16.msra.mxu0 0
        %1568 = vmatprep.subr.bf16.mxu0 0
        %1569 = vmatpush2.bf16.msra.mxu0 0
        %1570 = vmatprep.subr.bf16.mxu0 0
        %1571 = vmatpush2.bf16.msra.mxu0 0
        %1572 = vmatprep.subr.bf16.mxu0 0
        %1573 = vmatpush2.bf16.msra.mxu0 0
        %1574 = vmatprep.subr.bf16.mxu0 0
        %1575 = vmatpush2.bf16.msra.mxu0 0
        %1576 = vmatprep.mubr.bf16.mxu0 0
        %1577 = vmatmul.mubr.bf16.gmra.mxu0 %v1542
        %v1578 = vpop.f32.mrf.mxu0
        %v1579 = vadd.f32 0.0, %v1578
        %v1580 = vpop.f32.mrf.mxu0
        %v1581 = vpop.f32.mrf.mxu0
        %v1582 = vpop.f32.mrf.mxu0
        %1583 = vdwg.mxu0
        %1584 = vxpose.xlu0.c.b16.start [1/8] %v1109, 128
        %1585 = vxpose.xlu0.c.b16.cont [2/8] 0, 128
        %1586 = vxpose.xlu0.c.b16.cont [3/8] 0, 128
        %1587 = vxpose.xlu0.c.b16.cont [4/8] 0, 128
        %1588 = vxpose.xlu0.c.b16.cont [5/8] 0, 128
        %1589 = vxpose.xlu0.c.b16.cont [6/8] 0, 128
        %1590 = vxpose.xlu0.c.b16.cont [7/8] 0, 128
        %1591 = vxpose.xlu0.c.b16.end [8/8] 0, 128
        %v1592 = vpop.trf.xlu0
        %v1593 = vpop.trf.xlu0
        %v1594 = vpop.trf.xlu0
        %v1595 = vpop.trf.xlu0
        %v1596 = vpop.trf.xlu0
        %v1597 = vpop.trf.xlu0
        %v1598 = vpop.trf.xlu0
        %v1599 = vpop.trf.xlu0
        %v1601 = vsel %vm1304, %v1592, 0
        %1603 = vmatprep.subr.bf16.mxu0 0
        %1604 = vmatpush1.bf16.msra.mxu0 0
        %1605 = vmatprep.subr.bf16.mxu0 0
        %1606 = vmatpush1.bf16.msra.mxu0 0
        %1607 = vmatprep.subr.bf16.mxu0 0
        %1608 = vmatpush1.bf16.msra.mxu0 0
        %1609 = vmatprep.subr.bf16.mxu0 0
        %1610 = vmatpush1.bf16.msra.mxu0 0
        %1611 = vmatprep.subr.bf16.mxu0 0
        %1612 = vmatpush1.bf16.msra.mxu0 0
        %1613 = vmatprep.subr.bf16.mxu0 0
        %1614 = vmatpush1.bf16.msra.mxu0 0
        %1615 = vmatprep.subr.bf16.mxu0 0
        %1616 = vmatpush1.bf16.msra.mxu0 0
        %1617 = vmatprep.subr.bf16.mxu0 0
        %1618 = vmatpush1.bf16.msra.mxu0 %v1197
        %1619 = vmatprep.subr.bf16.mxu0 0
        %1620 = vmatpush2.bf16.msra.mxu0 0
        %1621 = vmatprep.subr.bf16.mxu0 0
        %1622 = vmatpush2.bf16.msra.mxu0 0
        %1623 = vmatprep.subr.bf16.mxu0 0
        %1624 = vmatpush2.bf16.msra.mxu0 0
        %1625 = vmatprep.subr.bf16.mxu0 0
        %1626 = vmatpush2.bf16.msra.mxu0 0
        %1627 = vmatprep.subr.bf16.mxu0 0
        %1628 = vmatpush2.bf16.msra.mxu0 0
        %1629 = vmatprep.subr.bf16.mxu0 0
        %1630 = vmatpush2.bf16.msra.mxu0 0
        %1631 = vmatprep.subr.bf16.mxu0 0
        %1632 = vmatpush2.bf16.msra.mxu0 0
        %1633 = vmatprep.subr.bf16.mxu0 0
        %1634 = vmatpush2.bf16.msra.mxu0 0
        %1635 = vmatprep.mubr.bf16.mxu0 0
        %1636 = vmatmul.mubr.bf16.gmra.mxu0 %v1601
        %v1637 = vpop.f32.mrf.mxu0
        %v1638 = vadd.f32 0.0, %v1637
        %v1639 = vpop.f32.mrf.mxu0
        %v1640 = vpop.f32.mrf.mxu0
        %v1641 = vpop.f32.mrf.mxu0
        %1642 = vdwg.mxu0
        %1643 = vxpose.xlu0.c.b16.start [1/8] %v1110, 128
        %1644 = vxpose.xlu0.c.b16.cont [2/8] 0, 128
        %1645 = vxpose.xlu0.c.b16.cont [3/8] 0, 128
        %1646 = vxpose.xlu0.c.b16.cont [4/8] 0, 128
        %1647 = vxpose.xlu0.c.b16.cont [5/8] 0, 128
        %1648 = vxpose.xlu0.c.b16.cont [6/8] 0, 128
        %1649 = vxpose.xlu0.c.b16.cont [7/8] 0, 128
        %1650 = vxpose.xlu0.c.b16.end [8/8] 0, 128
        %v1651 = vpop.trf.xlu0
        %v1652 = vpop.trf.xlu0
        %v1653 = vpop.trf.xlu0
        %v1654 = vpop.trf.xlu0
        %v1655 = vpop.trf.xlu0
        %v1656 = vpop.trf.xlu0
        %v1657 = vpop.trf.xlu0
        %v1658 = vpop.trf.xlu0
        %v1660 = vsel %vm1304, %v1651, 0
        %1662 = vmatprep.subr.bf16.mxu0 0
        %1663 = vmatpush1.bf16.msra.mxu0 0
        %1664 = vmatprep.subr.bf16.mxu0 0
        %1665 = vmatpush1.bf16.msra.mxu0 0
        %1666 = vmatprep.subr.bf16.mxu0 0
        %1667 = vmatpush1.bf16.msra.mxu0 0
        %1668 = vmatprep.subr.bf16.mxu0 0
        %1669 = vmatpush1.bf16.msra.mxu0 0
        %1670 = vmatprep.subr.bf16.mxu0 0
        %1671 = vmatpush1.bf16.msra.mxu0 0
        %1672 = vmatprep.subr.bf16.mxu0 0
        %1673 = vmatpush1.bf16.msra.mxu0 0
        %1674 = vmatprep.subr.bf16.mxu0 0
        %1675 = vmatpush1.bf16.msra.mxu0 0
        %1676 = vmatprep.subr.bf16.mxu0 0
        %1677 = vmatpush1.bf16.msra.mxu0 %v1198
        %1678 = vmatprep.subr.bf16.mxu0 0
        %1679 = vmatpush2.bf16.msra.mxu0 0
        %1680 = vmatprep.subr.bf16.mxu0 0
        %1681 = vmatpush2.bf16.msra.mxu0 0
        %1682 = vmatprep.subr.bf16.mxu0 0
        %1683 = vmatpush2.bf16.msra.mxu0 0
        %1684 = vmatprep.subr.bf16.mxu0 0
        %1685 = vmatpush2.bf16.msra.mxu0 0
        %1686 = vmatprep.subr.bf16.mxu0 0
        %1687 = vmatpush2.bf16.msra.mxu0 0
        %1688 = vmatprep.subr.bf16.mxu0 0
        %1689 = vmatpush2.bf16.msra.mxu0 0
        %1690 = vmatprep.subr.bf16.mxu0 0
        %1691 = vmatpush2.bf16.msra.mxu0 0
        %1692 = vmatprep.subr.bf16.mxu0 0
        %1693 = vmatpush2.bf16.msra.mxu0 0
        %1694 = vmatprep.mubr.bf16.mxu0 0
        %1695 = vmatmul.mubr.bf16.gmra.mxu0 %v1660
        %v1696 = vpop.f32.mrf.mxu0
        %v1697 = vadd.f32 0.0, %v1696
        %v1698 = vpop.f32.mrf.mxu0
        %v1699 = vpop.f32.mrf.mxu0
        %v1700 = vpop.f32.mrf.mxu0
        %1701 = vdwg.mxu0
        %1702 = vxpose.xlu0.c.b16.start [1/8] %v1111, 128
        %1703 = vxpose.xlu0.c.b16.cont [2/8] 0, 128
        %1704 = vxpose.xlu0.c.b16.cont [3/8] 0, 128
        %1705 = vxpose.xlu0.c.b16.cont [4/8] 0, 128
        %1706 = vxpose.xlu0.c.b16.cont [5/8] 0, 128
        %1707 = vxpose.xlu0.c.b16.cont [6/8] 0, 128
        %1708 = vxpose.xlu0.c.b16.cont [7/8] 0, 128
        %1709 = vxpose.xlu0.c.b16.end [8/8] 0, 128
        %v1710 = vpop.trf.xlu0
        %v1711 = vpop.trf.xlu0
        %v1712 = vpop.trf.xlu0
        %v1713 = vpop.trf.xlu0
        %v1714 = vpop.trf.xlu0
        %v1715 = vpop.trf.xlu0
        %v1716 = vpop.trf.xlu0
        %v1717 = vpop.trf.xlu0
        %v1719 = vsel %vm1304, %v1710, 0
        %1721 = vmatprep.subr.bf16.mxu0 0
        %1722 = vmatpush1.bf16.msra.mxu0 0
        %1723 = vmatprep.subr.bf16.mxu0 0
        %1724 = vmatpush1.bf16.msra.mxu0 0
        %1725 = vmatprep.subr.bf16.mxu0 0
        %1726 = vmatpush1.bf16.msra.mxu0 0
        %1727 = vmatprep.subr.bf16.mxu0 0
        %1728 = vmatpush1.bf16.msra.mxu0 0
        %1729 = vmatprep.subr.bf16.mxu0 0
        %1730 = vmatpush1.bf16.msra.mxu0 0
        %1731 = vmatprep.subr.bf16.mxu0 0
        %1732 = vmatpush1.bf16.msra.mxu0 0
        %1733 = vmatprep.subr.bf16.mxu0 0
        %1734 = vmatpush1.bf16.msra.mxu0 0
        %1735 = vmatprep.subr.bf16.mxu0 0
        %1736 = vmatpush1.bf16.msra.mxu0 %v1199
        %1737 = vmatprep.subr.bf16.mxu0 0
        %1738 = vmatpush2.bf16.msra.mxu0 0
        %1739 = vmatprep.subr.bf16.mxu0 0
        %1740 = vmatpush2.bf16.msra.mxu0 0
        %1741 = vmatprep.subr.bf16.mxu0 0
        %1742 = vmatpush2.bf16.msra.mxu0 0
        %1743 = vmatprep.subr.bf16.mxu0 0
        %1744 = vmatpush2.bf16.msra.mxu0 0
        %1745 = vmatprep.subr.bf16.mxu0 0
        %1746 = vmatpush2.bf16.msra.mxu0 0
        %1747 = vmatprep.subr.bf16.mxu0 0
        %1748 = vmatpush2.bf16.msra.mxu0 0
        %1749 = vmatprep.subr.bf16.mxu0 0
        %1750 = vmatpush2.bf16.msra.mxu0 0
        %1751 = vmatprep.subr.bf16.mxu0 0
        %1752 = vmatpush2.bf16.msra.mxu0 0
        %1753 = vmatprep.mubr.bf16.mxu0 0
        %1754 = vmatmul.mubr.bf16.gmra.mxu0 %v1719
        %v1755 = vpop.f32.mrf.mxu0
        %v1756 = vadd.f32 0.0, %v1755
        %v1757 = vpop.f32.mrf.mxu0
        %v1758 = vpop.f32.mrf.mxu0
        %v1759 = vpop.f32.mrf.mxu0
        %1760 = vdwg.mxu0
        %vm1761 = vcmask 64512
        %v1762 = vsel %vm1761, %v1343, -inf
        %1763 = vmax.xlane.f32.xlu0 %v1762
        %v1764 = vpop.xlane.xlu0 %1763
        %v1765 = vsel %vm1761, %v1402, -inf
        %1766 = vmax.xlane.f32.xlu0 %v1765
        %v1767 = vpop.xlane.xlu0 %1766
        %v1768 = vsel %vm1761, %v1461, -inf
        %1769 = vmax.xlane.f32.xlu0 %v1768
        %v1770 = vpop.xlane.xlu0 %1769
        %v1771 = vsel %vm1761, %v1520, -inf
        %1772 = vmax.xlane.f32.xlu0 %v1771
        %v1773 = vpop.xlane.xlu0 %1772
        %v1774 = vsel %vm1761, %v1579, -inf
        %1775 = vmax.xlane.f32.xlu0 %v1774
        %v1776 = vpop.xlane.xlu0 %1775
        %v1777 = vsel %vm1761, %v1638, -inf
        %1778 = vmax.xlane.f32.xlu0 %v1777
        %v1779 = vpop.xlane.xlu0 %1778
        %v1780 = vsel %vm1761, %v1697, -inf
        %1781 = vmax.xlane.f32.xlu0 %v1780
        %v1782 = vpop.xlane.xlu0 %1781
        %v1783 = vsel %vm1761, %v1756, -inf
        %1784 = vmax.xlane.f32.xlu0 %v1783
        %v1785 = vpop.xlane.xlu0 %1784
        %v1786 = vsub.f32 %v1343, %v1764
        %v1787 = vsub.f32 %v1402, %v1767
        %v1788 = vsub.f32 %v1461, %v1770
        %v1789 = vsub.f32 %v1520, %v1773
        %v1790 = vsub.f32 %v1579, %v1776
        %v1791 = vsub.f32 %v1638, %v1779
        %v1792 = vsub.f32 %v1697, %v1782
        %v1793 = vsub.f32 %v1756, %v1785
        %v1794 = vmul.f32 %v1786, 1.442695
        %v1795 = vpow.pop %v1794
        %v1796 = vmul.f32 %v1787, 1.442695
        %v1797 = vpow.pop %v1796
        %v1798 = vmul.f32 %v1788, 1.442695
        %v1799 = vpow.pop %v1798
        %v1800 = vmul.f32 %v1789, 1.442695
        %v1801 = vpow.pop %v1800
        %v1802 = vmul.f32 %v1790, 1.442695
        %v1803 = vpow.pop %v1802
        %v1804 = vmul.f32 %v1791, 1.442695
        %v1805 = vpow.pop %v1804
        %v1806 = vmul.f32 %v1792, 1.442695
        %v1807 = vpow.pop %v1806
        %v1808 = vmul.f32 %v1793, 1.442695
        %v1809 = vpow.pop %v1808
        %v1810 = vsel %vm1761, %v1795, 0.0
        %1811 = vadd.xlane.f32.xlu0 %v1810
        %v1812 = vpop.xlane.xlu0 %1811
        %v1813 = vsel %vm1761, %v1797, 0.0
        %1814 = vadd.xlane.f32.xlu0 %v1813
        %v1815 = vpop.xlane.xlu0 %1814
        %v1816 = vsel %vm1761, %v1799, 0.0
        %1817 = vadd.xlane.f32.xlu0 %v1816
        %v1818 = vpop.xlane.xlu0 %1817
        %v1819 = vsel %vm1761, %v1801, 0.0
        %1820 = vadd.xlane.f32.xlu0 %v1819
        %v1821 = vpop.xlane.xlu0 %1820
        %v1822 = vsel %vm1761, %v1803, 0.0
        %1823 = vadd.xlane.f32.xlu0 %v1822
        %v1824 = vpop.xlane.xlu0 %1823
        %v1825 = vsel %vm1761, %v1805, 0.0
        %1826 = vadd.xlane.f32.xlu0 %v1825
        %v1827 = vpop.xlane.xlu0 %1826
        %v1828 = vsel %vm1761, %v1807, 0.0
        %1829 = vadd.xlane.f32.xlu0 %v1828
        %v1830 = vpop.xlane.xlu0 %1829
        %v1831 = vsel %vm1761, %v1809, 0.0
        %1832 = vadd.xlane.f32.xlu0 %v1831
        %v1833 = vpop.xlane.xlu0 %1832
        %v1834 = vrcp.pop %v1812
        %v1835 = vrcp.pop %v1815
        %v1836 = vrcp.pop %v1818
        %v1837 = vrcp.pop %v1821
        %v1838 = vrcp.pop %v1824
        %v1839 = vrcp.pop %v1827
        %v1840 = vrcp.pop %v1830
        %v1841 = vrcp.pop %v1833
        %v1842 = vmul.f32 %v1795, %v1834
        %v1843 = vmul.f32 %v1797, %v1835
        %v1844 = vmul.f32 %v1799, %v1836
        %v1845 = vmul.f32 %v1801, %v1837
        %v1846 = vmul.f32 %v1803, %v1838
        %v1847 = vmul.f32 %v1805, %v1839
        %v1848 = vmul.f32 %v1807, %v1840
        %v1849 = vmul.f32 %v1809, %v1841
        %v1850 = vpack.c.bf16 %v1842, %v1842
        %v1851 = vpack.c.bf16 %v1843, %v1843
        %v1852 = vpack.c.bf16 %v1844, %v1844
        %v1853 = vpack.c.bf16 %v1845, %v1845
        %v1854 = vpack.c.bf16 %v1846, %v1846
        %v1855 = vpack.c.bf16 %v1847, %v1847
        %v1856 = vpack.c.bf16 %v1848, %v1848
        %v1857 = vpack.c.bf16 %v1849, %v1849
        %v1859 = vsel %vm1761, %v1280, 0
        %v1862 = vsel %vm1761, %v1850, 0
        %1864 = vmatprep.subr.bf16.mxu0 0
        %1865 = vmatpush1.bf16.xpose.msra.mxu0 0
        %1866 = vmatprep.subr.bf16.mxu0 0
        %1867 = vmatpush1.bf16.xpose.msra.mxu0 0
        %1868 = vmatprep.subr.bf16.mxu0 0
        %1869 = vmatpush1.bf16.xpose.msra.mxu0 0
        %1870 = vmatprep.subr.bf16.mxu0 0
        %1871 = vmatpush1.bf16.xpose.msra.mxu0 0
        %1872 = vmatprep.subr.bf16.mxu0 0
        %1873 = vmatpush1.bf16.xpose.msra.mxu0 0
        %1874 = vmatprep.subr.bf16.mxu0 0
        %1875 = vmatpush1.bf16.xpose.msra.mxu0 0
        %1876 = vmatprep.subr.bf16.mxu0 0
        %1877 = vmatpush1.bf16.xpose.msra.mxu0 0
        %1878 = vmatprep.subr.bf16.mxu0 0
        %1879 = vmatpush1.bf16.xpose.msra.mxu0 %v1862
        %1880 = vmatprep.subr.bf16.mxu0 0
        %1881 = vmatpush2.bf16.xpose.msra.mxu0 0
        %1882 = vmatprep.subr.bf16.mxu0 0
        %1883 = vmatpush2.bf16.xpose.msra.mxu0 0
        %1884 = vmatprep.subr.bf16.mxu0 0
        %1885 = vmatpush2.bf16.xpose.msra.mxu0 0
        %1886 = vmatprep.subr.bf16.mxu0 0
        %1887 = vmatpush2.bf16.xpose.msra.mxu0 0
        %1888 = vmatprep.subr.bf16.mxu0 0
        %1889 = vmatpush2.bf16.xpose.msra.mxu0 0
        %1890 = vmatprep.subr.bf16.mxu0 0
        %1891 = vmatpush2.bf16.xpose.msra.mxu0 0
        %1892 = vmatprep.subr.bf16.mxu0 0
        %1893 = vmatpush2.bf16.xpose.msra.mxu0 0
        %1894 = vmatprep.subr.bf16.mxu0 0
        %1895 = vmatpush2.bf16.xpose.msra.mxu0 0
        %1896 = vmatprep.mubr.bf16.mxu0 0
        %1897 = vmatmul.mubr.bf16.gmra.mxu0 %v1859
        %v1898 = vpop.f32.mrf.mxu0
        %v1899 = vadd.f32 0.0, %v1898
        %v1900 = vpop.f32.mrf.mxu0
        %v1901 = vpop.f32.mrf.mxu0
        %v1902 = vadd.f32 0.0, %v1901
        %v1903 = vpop.f32.mrf.mxu0
        %1904 = vdwg.mxu0
        %v1906 = vsel %vm1761, %v1281, 0
        %v1909 = vsel %vm1761, %v1851, 0
        %1911 = vmatprep.subr.bf16.mxu0 0
        %1912 = vmatpush1.bf16.xpose.msra.mxu0 0
        %1913 = vmatprep.subr.bf16.mxu0 0
        %1914 = vmatpush1.bf16.xpose.msra.mxu0 0
        %1915 = vmatprep.subr.bf16.mxu0 0
        %1916 = vmatpush1.bf16.xpose.msra.mxu0 0
        %1917 = vmatprep.subr.bf16.mxu0 0
        %1918 = vmatpush1.bf16.xpose.msra.mxu0 0
        %1919 = vmatprep.subr.bf16.mxu0 0
        %1920 = vmatpush1.bf16.xpose.msra.mxu0 0
        %1921 = vmatprep.subr.bf16.mxu0 0
        %1922 = vmatpush1.bf16.xpose.msra.mxu0 0
        %1923 = vmatprep.subr.bf16.mxu0 0
        %1924 = vmatpush1.bf16.xpose.msra.mxu0 0
        %1925 = vmatprep.subr.bf16.mxu0 0
        %1926 = vmatpush1.bf16.xpose.msra.mxu0 %v1909
        %1927 = vmatprep.subr.bf16.mxu0 0
        %1928 = vmatpush2.bf16.xpose.msra.mxu0 0
        %1929 = vmatprep.subr.bf16.mxu0 0
        %1930 = vmatpush2.bf16.xpose.msra.mxu0 0
        %1931 = vmatprep.subr.bf16.mxu0 0
        %1932 = vmatpush2.bf16.xpose.msra.mxu0 0
        %1933 = vmatprep.subr.bf16.mxu0 0
        %1934 = vmatpush2.bf16.xpose.msra.mxu0 0
        %1935 = vmatprep.subr.bf16.mxu0 0
        %1936 = vmatpush2.bf16.xpose.msra.mxu0 0
        %1937 = vmatprep.subr.bf16.mxu0 0
        %1938 = vmatpush2.bf16.xpose.msra.mxu0 0
        %1939 = vmatprep.subr.bf16.mxu0 0
        %1940 = vmatpush2.bf16.xpose.msra.mxu0 0
        %1941 = vmatprep.subr.bf16.mxu0 0
        %1942 = vmatpush2.bf16.xpose.msra.mxu0 0
        %1943 = vmatprep.mubr.bf16.mxu0 0
        %1944 = vmatmul.mubr.bf16.gmra.mxu0 %v1906
        %v1945 = vpop.f32.mrf.mxu0
        %v1946 = vadd.f32 0.0, %v1945
        %v1947 = vpop.f32.mrf.mxu0
        %v1948 = vpop.f32.mrf.mxu0
        %v1949 = vadd.f32 0.0, %v1948
        %v1950 = vpop.f32.mrf.mxu0
        %1951 = vdwg.mxu0
        %v1953 = vsel %vm1761, %v1282, 0
        %v1956 = vsel %vm1761, %v1852, 0
        %1958 = vmatprep.subr.bf16.mxu0 0
        %1959 = vmatpush1.bf16.xpose.msra.mxu0 0
        %1960 = vmatprep.subr.bf16.mxu0 0
        %1961 = vmatpush1.bf16.xpose.msra.mxu0 0
        %1962 = vmatprep.subr.bf16.mxu0 0
        %1963 = vmatpush1.bf16.xpose.msra.mxu0 0
        %1964 = vmatprep.subr.bf16.mxu0 0
        %1965 = vmatpush1.bf16.xpose.msra.mxu0 0
        %1966 = vmatprep.subr.bf16.mxu0 0
        %1967 = vmatpush1.bf16.xpose.msra.mxu0 0
        %1968 = vmatprep.subr.bf16.mxu0 0
        %1969 = vmatpush1.bf16.xpose.msra.mxu0 0
        %1970 = vmatprep.subr.bf16.mxu0 0
        %1971 = vmatpush1.bf16.xpose.msra.mxu0 0
        %1972 = vmatprep.subr.bf16.mxu0 0
        %1973 = vmatpush1.bf16.xpose.msra.mxu0 %v1956
        %1974 = vmatprep.subr.bf16.mxu0 0
        %1975 = vmatpush2.bf16.xpose.msra.mxu0 0
        %1976 = vmatprep.subr.bf16.mxu0 0
        %1977 = vmatpush2.bf16.xpose.msra.mxu0 0
        %1978 = vmatprep.subr.bf16.mxu0 0
        %1979 = vmatpush2.bf16.xpose.msra.mxu0 0
        %1980 = vmatprep.subr.bf16.mxu0 0
        %1981 = vmatpush2.bf16.xpose.msra.mxu0 0
        %1982 = vmatprep.subr.bf16.mxu0 0
        %1983 = vmatpush2.bf16.xpose.msra.mxu0 0
        %1984 = vmatprep.subr.bf16.mxu0 0
        %1985 = vmatpush2.bf16.xpose.msra.mxu0 0
        %1986 = vmatprep.subr.bf16.mxu0 0
        %1987 = vmatpush2.bf16.xpose.msra.mxu0 0
        %1988 = vmatprep.subr.bf16.mxu0 0
        %1989 = vmatpush2.bf16.xpose.msra.mxu0 0
        %1990 = vmatprep.mubr.bf16.mxu0 0
        %1991 = vmatmul.mubr.bf16.gmra.mxu0 %v1953
        %v1992 = vpop.f32.mrf.mxu0
        %v1993 = vadd.f32 0.0, %v1992
        %v1994 = vpop.f32.mrf.mxu0
        %v1995 = vpop.f32.mrf.mxu0
        %v1996 = vadd.f32 0.0, %v1995
        %v1997 = vpop.f32.mrf.mxu0
        %1998 = vdwg.mxu0
        %v2000 = vsel %vm1761, %v1283, 0
        %v2003 = vsel %vm1761, %v1853, 0
        %2005 = vmatprep.subr.bf16.mxu0 0
        %2006 = vmatpush1.bf16.xpose.msra.mxu0 0
        %2007 = vmatprep.subr.bf16.mxu0 0
        %2008 = vmatpush1.bf16.xpose.msra.mxu0 0
        %2009 = vmatprep.subr.bf16.mxu0 0
        %2010 = vmatpush1.bf16.xpose.msra.mxu0 0
        %2011 = vmatprep.subr.bf16.mxu0 0
        %2012 = vmatpush1.bf16.xpose.msra.mxu0 0
        %2013 = vmatprep.subr.bf16.mxu0 0
        %2014 = vmatpush1.bf16.xpose.msra.mxu0 0
        %2015 = vmatprep.subr.bf16.mxu0 0
        %2016 = vmatpush1.bf16.xpose.msra.mxu0 0
        %2017 = vmatprep.subr.bf16.mxu0 0
        %2018 = vmatpush1.bf16.xpose.msra.mxu0 0
        %2019 = vmatprep.subr.bf16.mxu0 0
        %2020 = vmatpush1.bf16.xpose.msra.mxu0 %v2003
        %2021 = vmatprep.subr.bf16.mxu0 0
        %2022 = vmatpush2.bf16.xpose.msra.mxu0 0
        %2023 = vmatprep.subr.bf16.mxu0 0
        %2024 = vmatpush2.bf16.xpose.msra.mxu0 0
        %2025 = vmatprep.subr.bf16.mxu0 0
        %2026 = vmatpush2.bf16.xpose.msra.mxu0 0
        %2027 = vmatprep.subr.bf16.mxu0 0
        %2028 = vmatpush2.bf16.xpose.msra.mxu0 0
        %2029 = vmatprep.subr.bf16.mxu0 0
        %2030 = vmatpush2.bf16.xpose.msra.mxu0 0
        %2031 = vmatprep.subr.bf16.mxu0 0
        %2032 = vmatpush2.bf16.xpose.msra.mxu0 0
        %2033 = vmatprep.subr.bf16.mxu0 0
        %2034 = vmatpush2.bf16.xpose.msra.mxu0 0
        %2035 = vmatprep.subr.bf16.mxu0 0
        %2036 = vmatpush2.bf16.xpose.msra.mxu0 0
        %2037 = vmatprep.mubr.bf16.mxu0 0
        %2038 = vmatmul.mubr.bf16.gmra.mxu0 %v2000
        %v2039 = vpop.f32.mrf.mxu0
        %v2040 = vadd.f32 0.0, %v2039
        %v2041 = vpop.f32.mrf.mxu0
        %v2042 = vpop.f32.mrf.mxu0
        %v2043 = vadd.f32 0.0, %v2042
        %v2044 = vpop.f32.mrf.mxu0
        %2045 = vdwg.mxu0
        %v2047 = vsel %vm1761, %v1284, 0
        %v2050 = vsel %vm1761, %v1854, 0
        %2052 = vmatprep.subr.bf16.mxu0 0
        %2053 = vmatpush1.bf16.xpose.msra.mxu0 0
        %2054 = vmatprep.subr.bf16.mxu0 0
        %2055 = vmatpush1.bf16.xpose.msra.mxu0 0
        %2056 = vmatprep.subr.bf16.mxu0 0
        %2057 = vmatpush1.bf16.xpose.msra.mxu0 0
        %2058 = vmatprep.subr.bf16.mxu0 0
        %2059 = vmatpush1.bf16.xpose.msra.mxu0 0
        %2060 = vmatprep.subr.bf16.mxu0 0
        %2061 = vmatpush1.bf16.xpose.msra.mxu0 0
        %2062 = vmatprep.subr.bf16.mxu0 0
        %2063 = vmatpush1.bf16.xpose.msra.mxu0 0
        %2064 = vmatprep.subr.bf16.mxu0 0
        %2065 = vmatpush1.bf16.xpose.msra.mxu0 0
        %2066 = vmatprep.subr.bf16.mxu0 0
        %2067 = vmatpush1.bf16.xpose.msra.mxu0 %v2050
        %2068 = vmatprep.subr.bf16.mxu0 0
        %2069 = vmatpush2.bf16.xpose.msra.mxu0 0
        %2070 = vmatprep.subr.bf16.mxu0 0
        %2071 = vmatpush2.bf16.xpose.msra.mxu0 0
        %2072 = vmatprep.subr.bf16.mxu0 0
        %2073 = vmatpush2.bf16.xpose.msra.mxu0 0
        %2074 = vmatprep.subr.bf16.mxu0 0
        %2075 = vmatpush2.bf16.xpose.msra.mxu0 0
        %2076 = vmatprep.subr.bf16.mxu0 0
        %2077 = vmatpush2.bf16.xpose.msra.mxu0 0
        %2078 = vmatprep.subr.bf16.mxu0 0
        %2079 = vmatpush2.bf16.xpose.msra.mxu0 0
        %2080 = vmatprep.subr.bf16.mxu0 0
        %2081 = vmatpush2.bf16.xpose.msra.mxu0 0
        %2082 = vmatprep.subr.bf16.mxu0 0
        %2083 = vmatpush2.bf16.xpose.msra.mxu0 0
        %2084 = vmatprep.mubr.bf16.mxu0 0
        %2085 = vmatmul.mubr.bf16.gmra.mxu0 %v2047
        %v2086 = vpop.f32.mrf.mxu0
        %v2087 = vadd.f32 0.0, %v2086
        %v2088 = vpop.f32.mrf.mxu0
        %v2089 = vpop.f32.mrf.mxu0
        %v2090 = vadd.f32 0.0, %v2089
        %v2091 = vpop.f32.mrf.mxu0
        %2092 = vdwg.mxu0
        %v2094 = vsel %vm1761, %v1285, 0
        %v2097 = vsel %vm1761, %v1855, 0
        %2099 = vmatprep.subr.bf16.mxu0 0
        %2100 = vmatpush1.bf16.xpose.msra.mxu0 0
        %2101 = vmatprep.subr.bf16.mxu0 0
        %2102 = vmatpush1.bf16.xpose.msra.mxu0 0
        %2103 = vmatprep.subr.bf16.mxu0 0
        %2104 = vmatpush1.bf16.xpose.msra.mxu0 0
        %2105 = vmatprep.subr.bf16.mxu0 0
        %2106 = vmatpush1.bf16.xpose.msra.mxu0 0
        %2107 = vmatprep.subr.bf16.mxu0 0
        %2108 = vmatpush1.bf16.xpose.msra.mxu0 0
        %2109 = vmatprep.subr.bf16.mxu0 0
        %2110 = vmatpush1.bf16.xpose.msra.mxu0 0
        %2111 = vmatprep.subr.bf16.mxu0 0
        %2112 = vmatpush1.bf16.xpose.msra.mxu0 0
        %2113 = vmatprep.subr.bf16.mxu0 0
        %2114 = vmatpush1.bf16.xpose.msra.mxu0 %v2097
        %2115 = vmatprep.subr.bf16.mxu0 0
        %2116 = vmatpush2.bf16.xpose.msra.mxu0 0
        %2117 = vmatprep.subr.bf16.mxu0 0
        %2118 = vmatpush2.bf16.xpose.msra.mxu0 0
        %2119 = vmatprep.subr.bf16.mxu0 0
        %2120 = vmatpush2.bf16.xpose.msra.mxu0 0
        %2121 = vmatprep.subr.bf16.mxu0 0
        %2122 = vmatpush2.bf16.xpose.msra.mxu0 0
        %2123 = vmatprep.subr.bf16.mxu0 0
        %2124 = vmatpush2.bf16.xpose.msra.mxu0 0
        %2125 = vmatprep.subr.bf16.mxu0 0
        %2126 = vmatpush2.bf16.xpose.msra.mxu0 0
        %2127 = vmatprep.subr.bf16.mxu0 0
        %2128 = vmatpush2.bf16.xpose.msra.mxu0 0
        %2129 = vmatprep.subr.bf16.mxu0 0
        %2130 = vmatpush2.bf16.xpose.msra.mxu0 0
        %2131 = vmatprep.mubr.bf16.mxu0 0
        %2132 = vmatmul.mubr.bf16.gmra.mxu0 %v2094
        %v2133 = vpop.f32.mrf.mxu0
        %v2134 = vadd.f32 0.0, %v2133
        %v2135 = vpop.f32.mrf.mxu0
        %v2136 = vpop.f32.mrf.mxu0
        %v2137 = vadd.f32 0.0, %v2136
        %v2138 = vpop.f32.mrf.mxu0
        %2139 = vdwg.mxu0
        %v2141 = vsel %vm1761, %v1286, 0
        %v2144 = vsel %vm1761, %v1856, 0
        %2146 = vmatprep.subr.bf16.mxu0 0
        %2147 = vmatpush1.bf16.xpose.msra.mxu0 0
        %2148 = vmatprep.subr.bf16.mxu0 0
        %2149 = vmatpush1.bf16.xpose.msra.mxu0 0
        %2150 = vmatprep.subr.bf16.mxu0 0
        %2151 = vmatpush1.bf16.xpose.msra.mxu0 0
        %2152 = vmatprep.subr.bf16.mxu0 0
        %2153 = vmatpush1.bf16.xpose.msra.mxu0 0
        %2154 = vmatprep.subr.bf16.mxu0 0
        %2155 = vmatpush1.bf16.xpose.msra.mxu0 0
        %2156 = vmatprep.subr.bf16.mxu0 0
        %2157 = vmatpush1.bf16.xpose.msra.mxu0 0
        %2158 = vmatprep.subr.bf16.mxu0 0
        %2159 = vmatpush1.bf16.xpose.msra.mxu0 0
        %2160 = vmatprep.subr.bf16.mxu0 0
        %2161 = vmatpush1.bf16.xpose.msra.mxu0 %v2144
        %2162 = vmatprep.subr.bf16.mxu0 0
        %2163 = vmatpush2.bf16.xpose.msra.mxu0 0
        %2164 = vmatprep.subr.bf16.mxu0 0
        %2165 = vmatpush2.bf16.xpose.msra.mxu0 0
        %2166 = vmatprep.subr.bf16.mxu0 0
        %2167 = vmatpush2.bf16.xpose.msra.mxu0 0
        %2168 = vmatprep.subr.bf16.mxu0 0
        %2169 = vmatpush2.bf16.xpose.msra.mxu0 0
        %2170 = vmatprep.subr.bf16.mxu0 0
        %2171 = vmatpush2.bf16.xpose.msra.mxu0 0
        %2172 = vmatprep.subr.bf16.mxu0 0
        %2173 = vmatpush2.bf16.xpose.msra.mxu0 0
        %2174 = vmatprep.subr.bf16.mxu0 0
        %2175 = vmatpush2.bf16.xpose.msra.mxu0 0
        %2176 = vmatprep.subr.bf16.mxu0 0
        %2177 = vmatpush2.bf16.xpose.msra.mxu0 0
        %2178 = vmatprep.mubr.bf16.mxu0 0
        %2179 = vmatmul.mubr.bf16.gmra.mxu0 %v2141
        %v2180 = vpop.f32.mrf.mxu0
        %v2181 = vadd.f32 0.0, %v2180
        %v2182 = vpop.f32.mrf.mxu0
        %v2183 = vpop.f32.mrf.mxu0
        %v2184 = vadd.f32 0.0, %v2183
        %v2185 = vpop.f32.mrf.mxu0
        %2186 = vdwg.mxu0
        %v2188 = vsel %vm1761, %v1287, 0
        %v2191 = vsel %vm1761, %v1857, 0
        %2193 = vmatprep.subr.bf16.mxu0 0
        %2194 = vmatpush1.bf16.xpose.msra.mxu0 0
        %2195 = vmatprep.subr.bf16.mxu0 0
        %2196 = vmatpush1.bf16.xpose.msra.mxu0 0
        %2197 = vmatprep.subr.bf16.mxu0 0
        %2198 = vmatpush1.bf16.xpose.msra.mxu0 0
        %2199 = vmatprep.subr.bf16.mxu0 0
        %2200 = vmatpush1.bf16.xpose.msra.mxu0 0
        %2201 = vmatprep.subr.bf16.mxu0 0
        %2202 = vmatpush1.bf16.xpose.msra.mxu0 0
        %2203 = vmatprep.subr.bf16.mxu0 0
        %2204 = vmatpush1.bf16.xpose.msra.mxu0 0
        %2205 = vmatprep.subr.bf16.mxu0 0
        %2206 = vmatpush1.bf16.xpose.msra.mxu0 0
        %2207 = vmatprep.subr.bf16.mxu0 0
        %2208 = vmatpush1.bf16.xpose.msra.mxu0 %v2191
        %2209 = vmatprep.subr.bf16.mxu0 0
        %2210 = vmatpush2.bf16.xpose.msra.mxu0 0
        %2211 = vmatprep.subr.bf16.mxu0 0
        %2212 = vmatpush2.bf16.xpose.msra.mxu0 0
        %2213 = vmatprep.subr.bf16.mxu0 0
        %2214 = vmatpush2.bf16.xpose.msra.mxu0 0
        %2215 = vmatprep.subr.bf16.mxu0 0
        %2216 = vmatpush2.bf16.xpose.msra.mxu0 0
        %2217 = vmatprep.subr.bf16.mxu0 0
        %2218 = vmatpush2.bf16.xpose.msra.mxu0 0
        %2219 = vmatprep.subr.bf16.mxu0 0
        %2220 = vmatpush2.bf16.xpose.msra.mxu0 0
        %2221 = vmatprep.subr.bf16.mxu0 0
        %2222 = vmatpush2.bf16.xpose.msra.mxu0 0
        %2223 = vmatprep.subr.bf16.mxu0 0
        %2224 = vmatpush2.bf16.xpose.msra.mxu0 0
        %2225 = vmatprep.mubr.bf16.mxu0 0
        %2226 = vmatmul.mubr.bf16.gmra.mxu0 %v2188
        %v2227 = vpop.f32.mrf.mxu0
        %v2228 = vadd.f32 0.0, %v2227
        %v2229 = vpop.f32.mrf.mxu0
        %v2230 = vpop.f32.mrf.mxu0
        %v2231 = vadd.f32 0.0, %v2230
        %v2232 = vpop.f32.mrf.mxu0
        %2233 = vdwg.mxu0
        %v2234 = vpack.c.bf16 %v1902, %v1899
        %v2235 = vpack.c.bf16 %v1949, %v1946
        %v2236 = vpack.c.bf16 %v1996, %v1993
        %v2237 = vpack.c.bf16 %v2043, %v2040
        %v2238 = vpack.c.bf16 %v2090, %v2087
        %v2239 = vpack.c.bf16 %v2137, %v2134
        %v2240 = vpack.c.bf16 %v2184, %v2181
        %v2241 = vpack.c.bf16 %v2231, %v2228
        %v2242 = vld [vmem:[#allocation8] sm:$0xf]
        %v2243 = vld [vmem:[#allocation8 + $0x4] sm:$0xf]
        %v2244 = vld [vmem:[#allocation8 + $0x8] sm:$0xf]
        %v2245 = vld [vmem:[#allocation8 + $0xc] sm:$0xf]
        %v2246 = vld [vmem:[#allocation8 + $0x10] sm:$0xf]
        %v2247 = vld [vmem:[#allocation8 + $0x14] sm:$0xf]
        %v2248 = vld [vmem:[#allocation8 + $0x18] sm:$0xf]
        %v2249 = vld [vmem:[#allocation8 + $0x1c] sm:$0xf]
        %v2250 = vld [vmem:[#allocation8 + $0x20] sm:$0xf]
        %v2251 = vld [vmem:[#allocation8 + $0x24] sm:$0xf]
        %v2252 = vld [vmem:[#allocation8 + $0x28] sm:$0xf]
        %v2253 = vld [vmem:[#allocation8 + $0x2c] sm:$0xf]
        %v2254 = vld [vmem:[#allocation8 + $0x30] sm:$0xf]
        %v2255 = vld [vmem:[#allocation8 + $0x34] sm:$0xf]
        %v2256 = vld [vmem:[#allocation8 + $0x38] sm:$0xf]
        %v2257 = vld [vmem:[#allocation8 + $0x3c] sm:$0xf]
        %v2258 = vld [vmem:[%s6] sm:$0x1]
        %v2260 = vlaneseq
        %v2261 = vshrl.u32 %v2260, 7
        %v2262 = vsub.s32 0, %v2261
        %v2263 = vrot.slane %v2258, %v2262
        %2265 = vxpose.xlu0.c.b16.start [1/8] %v2234, 128
        %2266 = vxpose.xlu0.c.b16.cont [2/8] %v2235, 128
        %2267 = vxpose.xlu0.c.b16.cont [3/8] %v2236, 128
        %2268 = vxpose.xlu0.c.b16.cont [4/8] %v2237, 128
        %2269 = vxpose.xlu0.c.b16.cont [5/8] %v2238, 128
        %2270 = vxpose.xlu0.c.b16.cont [6/8] %v2239, 128
        %2271 = vxpose.xlu0.c.b16.cont [7/8] %v2240, 128
        %2272 = vxpose.xlu0.c.b16.end [8/8] %v2241, 128
        %v2273 = vpop.trf.xlu0
        %v2274 = vpop.trf.xlu0
        %v2275 = vpop.trf.xlu0
        %v2276 = vpop.trf.xlu0
        %v2277 = vpop.trf.xlu0
        %v2278 = vpop.trf.xlu0
        %v2279 = vpop.trf.xlu0
        %v2280 = vpop.trf.xlu0
        %v2297 = vunpack.c.l.b16 %v2242
        %v2298 = vunpack.c.l.b16 %v2243
        %v2299 = vunpack.c.l.b16 %v2244
        %v2300 = vunpack.c.l.b16 %v2245
        %v2301 = vunpack.c.l.b16 %v2246
        %v2302 = vunpack.c.l.b16 %v2247
        %v2303 = vunpack.c.l.b16 %v2248
        %v2304 = vunpack.c.l.b16 %v2249
        %v2305 = vunpack.c.l.b16 %v2250
        %v2306 = vunpack.c.l.b16 %v2251
        %v2307 = vunpack.c.l.b16 %v2252
        %v2308 = vunpack.c.l.b16 %v2253
        %v2309 = vunpack.c.l.b16 %v2254
        %v2310 = vunpack.c.l.b16 %v2255
        %v2311 = vunpack.c.l.b16 %v2256
        %v2312 = vunpack.c.l.b16 %v2257
        %v2313 = vpack.c.b16 %v2298, %v2297
        %v2314 = vpack.c.b16 %v2300, %v2299
        %v2315 = vpack.c.b16 %v2302, %v2301
        %v2316 = vpack.c.b16 %v2304, %v2303
        %v2317 = vpack.c.b16 %v2306, %v2305
        %v2318 = vpack.c.b16 %v2308, %v2307
        %v2319 = vpack.c.b16 %v2310, %v2309
        %v2320 = vpack.c.b16 %v2312, %v2311
        %2329 = vmatprep.subr.bf16.mxu0 0
        %2330 = vmatpush1.bf16.msra.mxu0 %v2320
        %2331 = vmatprep.subr.bf16.mxu0 0
        %2332 = vmatpush1.bf16.msra.mxu0 %v2319
        %2333 = vmatprep.subr.bf16.mxu0 0
        %2334 = vmatpush1.bf16.msra.mxu0 %v2318
        %2335 = vmatprep.subr.bf16.mxu0 0
        %2336 = vmatpush1.bf16.msra.mxu0 %v2317
        %2337 = vmatprep.subr.bf16.mxu0 0
        %2338 = vmatpush1.bf16.msra.mxu0 %v2316
        %2339 = vmatprep.subr.bf16.mxu0 0
        %2340 = vmatpush1.bf16.msra.mxu0 %v2315
        %2341 = vmatprep.subr.bf16.mxu0 0
        %2342 = vmatpush1.bf16.msra.mxu0 %v2314
        %2343 = vmatprep.subr.bf16.mxu0 0
        %2344 = vmatpush1.bf16.msra.mxu0 %v2313
        %2345 = vmatprep.subr.bf16.mxu0 0
        %2346 = vmatpush2.bf16.msra.mxu0 0
        %2347 = vmatprep.subr.bf16.mxu0 0
        %2348 = vmatpush2.bf16.msra.mxu0 0
        %2349 = vmatprep.subr.bf16.mxu0 0
        %2350 = vmatpush2.bf16.msra.mxu0 0
        %2351 = vmatprep.subr.bf16.mxu0 0
        %2352 = vmatpush2.bf16.msra.mxu0 0
        %2353 = vmatprep.subr.bf16.mxu0 0
        %2354 = vmatpush2.bf16.msra.mxu0 0
        %2355 = vmatprep.subr.bf16.mxu0 0
        %2356 = vmatpush2.bf16.msra.mxu0 0
        %2357 = vmatprep.subr.bf16.mxu0 0
        %2358 = vmatpush2.bf16.msra.mxu0 0
        %2359 = vmatprep.subr.bf16.mxu0 0
        %2360 = vmatpush2.bf16.msra.mxu0 0
        %2361 = vmatprep.mubr.bf16.mxu0 0
        %2362 = vmatmul.mubr.bf16.gmra.mxu0 %v2273
        %v2363 = vpop.f32.mrf.mxu0
        %v2364 = vadd.f32 %v2263, %v2363
        %v2365 = vpop.f32.mrf.mxu0
        %v2366 = vpop.f32.mrf.mxu0
        %v2367 = vpop.f32.mrf.mxu0
        %2368 = vdwg.mxu0
        %v2369 = vadd.f32 %v528, %v2364
        %v2370 = vld [vmem:[%s7] sm:$0x1]
        %v2371 = vld [vmem:[%s8] sm:$0x1]
        %2372 = vadd.xlane.f32.xlu0 %v2369
        %v2373 = vpop.xlane.xlu0 %2372
        %v2374 = vmul.f32 %v2373, %v533
        %v2375 = vsub.f32 %v2369, %v2374
        %v2376 = vmul.f32 %v2375, %v2375
        %2377 = vadd.xlane.f32.xlu0 %v2376
        %v2378 = vpop.xlane.xlu0 %2377
        %v2379 = vmul.f32 %v2378, %v533
        %v2380 = vadd.f32 %v2379, 1e-05
        %v2381 = vrsqrt.pop %v2380
        %v2382 = vmul.f32 %v2375, %v2381
        %v2384 = vlaneseq
        %v2385 = vshrl.u32 %v2384, 7
        %v2386 = vsub.s32 0, %v2385
        %v2387 = vrot.slane %v2370, %v2386
        %v2389 = vmul.f32 %v2382, %v2387
        %v2391 = vlaneseq
        %v2392 = vshrl.u32 %v2391, 7
        %v2393 = vsub.s32 0, %v2392
        %v2394 = vrot.slane %v2371, %v2393
        %v2396 = vadd.f32 %v2389, %v2394
        %v2397 = vpack.c.bf16 %v2396, %v2396
        %v2398 = vld [vmem:[#allocation10] sm:$0xff]
        %v2399 = vld [vmem:[#allocation10 + $0x8] sm:$0xff]
        %v2400 = vld [vmem:[#allocation10 + $0x10] sm:$0xff]
        %v2401 = vld [vmem:[#allocation10 + $0x18] sm:$0xff]
        %v2402 = vld [vmem:[#allocation10 + $0x20] sm:$0xff]
        %v2403 = vld [vmem:[#allocation10 + $0x28] sm:$0xff]
        %v2404 = vld [vmem:[#allocation10 + $0x30] sm:$0xff]
        %v2405 = vld [vmem:[#allocation10 + $0x38] sm:$0xff]
        %v2406 = vld [vmem:[#allocation10 + $0x40] sm:$0xff]
        %v2407 = vld [vmem:[#allocation10 + $0x48] sm:$0xff]
        %v2408 = vld [vmem:[#allocation10 + $0x50] sm:$0xff]
        %v2409 = vld [vmem:[#allocation10 + $0x58] sm:$0xff]
        %v2410 = vld [vmem:[#allocation10 + $0x60] sm:$0xff]
        %v2411 = vld [vmem:[#allocation10 + $0x68] sm:$0xff]
        %v2412 = vld [vmem:[#allocation10 + $0x70] sm:$0xff]
        %v2413 = vld [vmem:[#allocation10 + $0x78] sm:$0xff]
        %v2414 = vld [vmem:[#allocation10 + $0x80] sm:$0xff]
        %v2415 = vld [vmem:[#allocation10 + $0x88] sm:$0xff]
        %v2416 = vld [vmem:[#allocation10 + $0x90] sm:$0xff]
        %v2417 = vld [vmem:[#allocation10 + $0x98] sm:$0xff]
        %v2418 = vld [vmem:[#allocation10 + $0xa0] sm:$0xff]
        %v2419 = vld [vmem:[#allocation10 + $0xa8] sm:$0xff]
        %v2420 = vld [vmem:[#allocation10 + $0xb0] sm:$0xff]
        %v2421 = vld [vmem:[#allocation10 + $0xb8] sm:$0xff]
        %v2422 = vld [vmem:[#allocation10 + $0xc0] sm:$0xff]
        %v2423 = vld [vmem:[#allocation10 + $0xc8] sm:$0xff]
        %v2424 = vld [vmem:[#allocation10 + $0xd0] sm:$0xff]
        %v2425 = vld [vmem:[#allocation10 + $0xd8] sm:$0xff]
        %v2426 = vld [vmem:[#allocation10 + $0xe0] sm:$0xff]
        %v2427 = vld [vmem:[#allocation10 + $0xe8] sm:$0xff]
        %v2428 = vld [vmem:[#allocation10 + $0xf0] sm:$0xff]
        %v2429 = vld [vmem:[#allocation10 + $0xf8] sm:$0xff]
        %v2430 = vld [vmem:[%s10] sm:$0xf]
        %v2432 = vlaneseq
        %v2433 = vshrl.u32 %v2432, 7
        %v2434 = vsub.s32 0, %v2433
        %v2435 = vrot.slane %v2430, %v2434
        %v2436 = vlaneseq
        %v2437 = vshrl.u32 %v2436, 7
        %v2438 = vsub.s32 1, %v2437
        %v2439 = vrot.slane %v2430, %v2438
        %v2440 = vlaneseq
        %v2441 = vshrl.u32 %v2440, 7
        %v2442 = vsub.s32 2, %v2441
        %v2443 = vrot.slane %v2430, %v2442
        %v2444 = vlaneseq
        %v2445 = vshrl.u32 %v2444, 7
        %v2446 = vsub.s32 3, %v2445
        %v2447 = vrot.slane %v2430, %v2446
        %v2484 = vunpack.c.l.b16 %v2398
        %v2485 = vunpack.c.h.b16 %v2398
        %v2486 = vunpack.c.l.b16 %v2399
        %v2487 = vunpack.c.h.b16 %v2399
        %v2488 = vunpack.c.l.b16 %v2400
        %v2489 = vunpack.c.h.b16 %v2400
        %v2490 = vunpack.c.l.b16 %v2401
        %v2491 = vunpack.c.h.b16 %v2401
        %v2492 = vunpack.c.l.b16 %v2402
        %v2493 = vunpack.c.h.b16 %v2402
        %v2494 = vunpack.c.l.b16 %v2403
        %v2495 = vunpack.c.h.b16 %v2403
        %v2496 = vunpack.c.l.b16 %v2404
        %v2497 = vunpack.c.h.b16 %v2404
        %v2498 = vunpack.c.l.b16 %v2405
        %v2499 = vunpack.c.h.b16 %v2405
        %v2500 = vunpack.c.l.b16 %v2406
        %v2501 = vunpack.c.h.b16 %v2406
        %v2502 = vunpack.c.l.b16 %v2407
        %v2503 = vunpack.c.h.b16 %v2407
        %v2504 = vunpack.c.l.b16 %v2408
        %v2505 = vunpack.c.h.b16 %v2408
        %v2506 = vunpack.c.l.b16 %v2409
        %v2507 = vunpack.c.h.b16 %v2409
        %v2508 = vunpack.c.l.b16 %v2410
        %v2509 = vunpack.c.h.b16 %v2410
        %v2510 = vunpack.c.l.b16 %v2411
        %v2511 = vunpack.c.h.b16 %v2411
        %v2512 = vunpack.c.l.b16 %v2412
        %v2513 = vunpack.c.h.b16 %v2412
        %v2514 = vunpack.c.l.b16 %v2413
        %v2515 = vunpack.c.h.b16 %v2413
        %v2516 = vunpack.c.l.b16 %v2414
        %v2517 = vunpack.c.h.b16 %v2414
        %v2518 = vunpack.c.l.b16 %v2415
        %v2519 = vunpack.c.h.b16 %v2415
        %v2520 = vunpack.c.l.b16 %v2416
        %v2521 = vunpack.c.h.b16 %v2416
        %v2522 = vunpack.c.l.b16 %v2417
        %v2523 = vunpack.c.h.b16 %v2417
        %v2524 = vunpack.c.l.b16 %v2418
        %v2525 = vunpack.c.h.b16 %v2418
        %v2526 = vunpack.c.l.b16 %v2419
        %v2527 = vunpack.c.h.b16 %v2419
        %v2528 = vunpack.c.l.b16 %v2420
        %v2529 = vunpack.c.h.b16 %v2420
        %v2530 = vunpack.c.l.b16 %v2421
        %v2531 = vunpack.c.h.b16 %v2421
        %v2532 = vunpack.c.l.b16 %v2422
        %v2533 = vunpack.c.h.b16 %v2422
        %v2534 = vunpack.c.l.b16 %v2423
        %v2535 = vunpack.c.h.b16 %v2423
        %v2536 = vunpack.c.l.b16 %v2424
        %v2537 = vunpack.c.h.b16 %v2424
        %v2538 = vunpack.c.l.b16 %v2425
        %v2539 = vunpack.c.h.b16 %v2425
        %v2540 = vunpack.c.l.b16 %v2426
        %v2541 = vunpack.c.h.b16 %v2426
        %v2542 = vunpack.c.l.b16 %v2427
        %v2543 = vunpack.c.h.b16 %v2427
        %v2544 = vunpack.c.l.b16 %v2428
        %v2545 = vunpack.c.h.b16 %v2428
        %v2546 = vunpack.c.l.b16 %v2429
        %v2547 = vunpack.c.h.b16 %v2429
        %v2548 = vpack.c.b16 %v2488, %v2484
        %v2549 = vpack.c.b16 %v2489, %v2485
        %v2550 = vpack.c.b16 %v2490, %v2486
        %v2551 = vpack.c.b16 %v2491, %v2487
        %v2552 = vpack.c.b16 %v2496, %v2492
        %v2553 = vpack.c.b16 %v2497, %v2493
        %v2554 = vpack.c.b16 %v2498, %v2494
        %v2555 = vpack.c.b16 %v2499, %v2495
        %v2556 = vpack.c.b16 %v2504, %v2500
        %v2557 = vpack.c.b16 %v2505, %v2501
        %v2558 = vpack.c.b16 %v2506, %v2502
        %v2559 = vpack.c.b16 %v2507, %v2503
        %v2560 = vpack.c.b16 %v2512, %v2508
        %v2561 = vpack.c.b16 %v2513, %v2509
        %v2562 = vpack.c.b16 %v2514, %v2510
        %v2563 = vpack.c.b16 %v2515, %v2511
        %v2564 = vpack.c.b16 %v2520, %v2516
        %v2565 = vpack.c.b16 %v2521, %v2517
        %v2566 = vpack.c.b16 %v2522, %v2518
        %v2567 = vpack.c.b16 %v2523, %v2519
        %v2568 = vpack.c.b16 %v2528, %v2524
        %v2569 = vpack.c.b16 %v2529, %v2525
        %v2570 = vpack.c.b16 %v2530, %v2526
        %v2571 = vpack.c.b16 %v2531, %v2527
        %v2572 = vpack.c.b16 %v2536, %v2532
        %v2573 = vpack.c.b16 %v2537, %v2533
        %v2574 = vpack.c.b16 %v2538, %v2534
        %v2575 = vpack.c.b16 %v2539, %v2535
        %v2576 = vpack.c.b16 %v2544, %v2540
        %v2577 = vpack.c.b16 %v2545, %v2541
        %v2578 = vpack.c.b16 %v2546, %v2542
        %v2579 = vpack.c.b16 %v2547, %v2543
        %2612 = vmatprep.subr.bf16.mxu0 %v2577
        %2613 = vmatpush1.bf16.msra.mxu0 %v2576
        %2614 = vmatprep.subr.bf16.mxu0 %v2573
        %2615 = vmatpush1.bf16.msra.mxu0 %v2572
        %2616 = vmatprep.subr.bf16.mxu0 %v2569
        %2617 = vmatpush1.bf16.msra.mxu0 %v2568
        %2618 = vmatprep.subr.bf16.mxu0 %v2565
        %2619 = vmatpush1.bf16.msra.mxu0 %v2564
        %2620 = vmatprep.subr.bf16.mxu0 %v2561
        %2621 = vmatpush1.bf16.msra.mxu0 %v2560
        %2622 = vmatprep.subr.bf16.mxu0 %v2557
        %2623 = vmatpush1.bf16.msra.mxu0 %v2556
        %2624 = vmatprep.subr.bf16.mxu0 %v2553
        %2625 = vmatpush1.bf16.msra.mxu0 %v2552
        %2626 = vmatprep.subr.bf16.mxu0 %v2549
        %2627 = vmatpush1.bf16.msra.mxu0 %v2548
        %2628 = vmatprep.subr.bf16.mxu0 0
        %2629 = vmatpush2.bf16.msra.mxu0 0
        %2630 = vmatprep.subr.bf16.mxu0 0
        %2631 = vmatpush2.bf16.msra.mxu0 0
        %2632 = vmatprep.subr.bf16.mxu0 0
        %2633 = vmatpush2.bf16.msra.mxu0 0
        %2634 = vmatprep.subr.bf16.mxu0 0
        %2635 = vmatpush2.bf16.msra.mxu0 0
        %2636 = vmatprep.subr.bf16.mxu0 0
        %2637 = vmatpush2.bf16.msra.mxu0 0
        %2638 = vmatprep.subr.bf16.mxu0 0
        %2639 = vmatpush2.bf16.msra.mxu0 0
        %2640 = vmatprep.subr.bf16.mxu0 0
        %2641 = vmatpush2.bf16.msra.mxu0 0
        %2642 = vmatprep.subr.bf16.mxu0 0
        %2643 = vmatpush2.bf16.msra.mxu0 0
        %2644 = vmatprep.mubr.bf16.mxu0 0
        %2645 = vmatmul.mubr.bf16.gmra.mxu0 %v2397
        %v2646 = vpop.f32.mrf.mxu0
        %v2647 = vadd.f32 %v2435, %v2646
        %v2648 = vpop.f32.mrf.mxu0
        %v2649 = vadd.f32 %v2439, %v2648
        %v2650 = vpop.f32.mrf.mxu0
        %v2651 = vpop.f32.mrf.mxu0
        %2652 = vdwg.mxu0
        %2653 = vmatprep.subr.bf16.mxu0 %v2579
        %2654 = vmatpush1.bf16.msra.mxu0 %v2578
        %2655 = vmatprep.subr.bf16.mxu0 %v2575
        %2656 = vmatpush1.bf16.msra.mxu0 %v2574
        %2657 = vmatprep.subr.bf16.mxu0 %v2571
        %2658 = vmatpush1.bf16.msra.mxu0 %v2570
        %2659 = vmatprep.subr.bf16.mxu0 %v2567
        %2660 = vmatpush1.bf16.msra.mxu0 %v2566
        %2661 = vmatprep.subr.bf16.mxu0 %v2563
        %2662 = vmatpush1.bf16.msra.mxu0 %v2562
        %2663 = vmatprep.subr.bf16.mxu0 %v2559
        %2664 = vmatpush1.bf16.msra.mxu0 %v2558
        %2665 = vmatprep.subr.bf16.mxu0 %v2555
        %2666 = vmatpush1.bf16.msra.mxu0 %v2554
        %2667 = vmatprep.subr.bf16.mxu0 %v2551
        %2668 = vmatpush1.bf16.msra.mxu0 %v2550
        %2669 = vmatprep.subr.bf16.mxu0 0
        %2670 = vmatpush2.bf16.msra.mxu0 0
        %2671 = vmatprep.subr.bf16.mxu0 0
        %2672 = vmatpush2.bf16.msra.mxu0 0
        %2673 = vmatprep.subr.bf16.mxu0 0
        %2674 = vmatpush2.bf16.msra.mxu0 0
        %2675 = vmatprep.subr.bf16.mxu0 0
        %2676 = vmatpush2.bf16.msra.mxu0 0
        %2677 = vmatprep.subr.bf16.mxu0 0
        %2678 = vmatpush2.bf16.msra.mxu0 0
        %2679 = vmatprep.subr.bf16.mxu0 0
        %2680 = vmatpush2.bf16.msra.mxu0 0
        %2681 = vmatprep.subr.bf16.mxu0 0
        %2682 = vmatpush2.bf16.msra.mxu0 0
        %2683 = vmatprep.subr.bf16.mxu0 0
        %2684 = vmatpush2.bf16.msra.mxu0 0
        %2685 = vmatprep.mubr.bf16.mxu0 0
        %2686 = vmatmul.mubr.bf16.gmra.mxu0 %v2397
        %v2687 = vpop.f32.mrf.mxu0
        %v2688 = vadd.f32 %v2443, %v2687
        %v2689 = vpop.f32.mrf.mxu0
        %v2690 = vadd.f32 %v2447, %v2689
        %v2691 = vpop.f32.mrf.mxu0
        %v2692 = vpop.f32.mrf.mxu0
        %2693 = vdwg.mxu0
        %v2694 = vmul.f32 %v2647, 0.5
        %v2695 = vmul.f32 %v2649, 0.5
        %v2696 = vmul.f32 %v2688, 0.5
        %v2697 = vmul.f32 %v2690, 0.5
        %v2698 = vmul.f32 %v2647, 0.70710677
        %v2699 = vmul.f32 %v2649, 0.70710677
        %v2700 = vmul.f32 %v2688, 0.70710677
        %v2701 = vmul.f32 %v2690, 0.70710677
        %v2702 = verf.f32.pop %v2698
        %v2703 = verf.f32.pop %v2699
        %v2704 = verf.f32.pop %v2700
        %v2705 = verf.f32.pop %v2701
        %v2706 = vadd.f32 %v2702, 1.0
        %v2707 = vadd.f32 %v2703, 1.0
        %v2708 = vadd.f32 %v2704, 1.0
        %v2709 = vadd.f32 %v2705, 1.0
        %v2710 = vmul.f32 %v2694, %v2706
        %v2711 = vmul.f32 %v2695, %v2707
        %v2712 = vmul.f32 %v2696, %v2708
        %v2713 = vmul.f32 %v2697, %v2709
        %v2714 = vpack.c.bf16 %v2710, %v2710
        %v2715 = vpack.c.bf16 %v2711, %v2711
        %v2716 = vpack.c.bf16 %v2712, %v2712
        %v2717 = vpack.c.bf16 %v2713, %v2713
        %v2718 = vld [vmem:[#allocation11] sm:$0xf]
        %v2719 = vld [vmem:[#allocation11 + $0x4] sm:$0xf]
        %v2720 = vld [vmem:[#allocation11 + $0x8] sm:$0xf]
        %v2721 = vld [vmem:[#allocation11 + $0xc] sm:$0xf]
        %v2722 = vld [vmem:[#allocation11 + $0x10] sm:$0xf]
        %v2723 = vld [vmem:[#allocation11 + $0x14] sm:$0xf]
        %v2724 = vld [vmem:[#allocation11 + $0x18] sm:$0xf]
        %v2725 = vld [vmem:[#allocation11 + $0x1c] sm:$0xf]
        %v2726 = vld [vmem:[#allocation11 + $0x20] sm:$0xf]
        %v2727 = vld [vmem:[#allocation11 + $0x24] sm:$0xf]
        %v2728 = vld [vmem:[#allocation11 + $0x28] sm:$0xf]
        %v2729 = vld [vmem:[#allocation11 + $0x2c] sm:$0xf]
        %v2730 = vld [vmem:[#allocation11 + $0x30] sm:$0xf]
        %v2731 = vld [vmem:[#allocation11 + $0x34] sm:$0xf]
        %v2732 = vld [vmem:[#allocation11 + $0x38] sm:$0xf]
        %v2733 = vld [vmem:[#allocation11 + $0x3c] sm:$0xf]
        %v2734 = vld [vmem:[#allocation11 + $0x40] sm:$0xf]
        %v2735 = vld [vmem:[#allocation11 + $0x44] sm:$0xf]
        %v2736 = vld [vmem:[#allocation11 + $0x48] sm:$0xf]
        %v2737 = vld [vmem:[#allocation11 + $0x4c] sm:$0xf]
        %v2738 = vld [vmem:[#allocation11 + $0x50] sm:$0xf]
        %v2739 = vld [vmem:[#allocation11 + $0x54] sm:$0xf]
        %v2740 = vld [vmem:[#allocation11 + $0x58] sm:$0xf]
        %v2741 = vld [vmem:[#allocation11 + $0x5c] sm:$0xf]
        %v2742 = vld [vmem:[#allocation11 + $0x60] sm:$0xf]
        %v2743 = vld [vmem:[#allocation11 + $0x64] sm:$0xf]
        %v2744 = vld [vmem:[#allocation11 + $0x68] sm:$0xf]
        %v2745 = vld [vmem:[#allocation11 + $0x6c] sm:$0xf]
        %v2746 = vld [vmem:[#allocation11 + $0x70] sm:$0xf]
        %v2747 = vld [vmem:[#allocation11 + $0x74] sm:$0xf]
        %v2748 = vld [vmem:[#allocation11 + $0x78] sm:$0xf]
        %v2749 = vld [vmem:[#allocation11 + $0x7c] sm:$0xf]
        %v2750 = vld [vmem:[#allocation11 + $0x80] sm:$0xf]
        %v2751 = vld [vmem:[#allocation11 + $0x84] sm:$0xf]
        %v2752 = vld [vmem:[#allocation11 + $0x88] sm:$0xf]
        %v2753 = vld [vmem:[#allocation11 + $0x8c] sm:$0xf]
        %v2754 = vld [vmem:[#allocation11 + $0x90] sm:$0xf]
        %v2755 = vld [vmem:[#allocation11 + $0x94] sm:$0xf]
        %v2756 = vld [vmem:[#allocation11 + $0x98] sm:$0xf]
        %v2757 = vld [vmem:[#allocation11 + $0x9c] sm:$0xf]
        %v2758 = vld [vmem:[#allocation11 + $0xa0] sm:$0xf]
        %v2759 = vld [vmem:[#allocation11 + $0xa4] sm:$0xf]
        %v2760 = vld [vmem:[#allocation11 + $0xa8] sm:$0xf]
        %v2761 = vld [vmem:[#allocation11 + $0xac] sm:$0xf]
        %v2762 = vld [vmem:[#allocation11 + $0xb0] sm:$0xf]
        %v2763 = vld [vmem:[#allocation11 + $0xb4] sm:$0xf]
        %v2764 = vld [vmem:[#allocation11 + $0xb8] sm:$0xf]
        %v2765 = vld [vmem:[#allocation11 + $0xbc] sm:$0xf]
        %v2766 = vld [vmem:[#allocation11 + $0xc0] sm:$0xf]
        %v2767 = vld [vmem:[#allocation11 + $0xc4] sm:$0xf]
        %v2768 = vld [vmem:[#allocation11 + $0xc8] sm:$0xf]
        %v2769 = vld [vmem:[#allocation11 + $0xcc] sm:$0xf]
        %v2770 = vld [vmem:[#allocation11 + $0xd0] sm:$0xf]
        %v2771 = vld [vmem:[#allocation11 + $0xd4] sm:$0xf]
        %v2772 = vld [vmem:[#allocation11 + $0xd8] sm:$0xf]
        %v2773 = vld [vmem:[#allocation11 + $0xdc] sm:$0xf]
        %v2774 = vld [vmem:[#allocation11 + $0xe0] sm:$0xf]
        %v2775 = vld [vmem:[#allocation11 + $0xe4] sm:$0xf]
        %v2776 = vld [vmem:[#allocation11 + $0xe8] sm:$0xf]
        %v2777 = vld [vmem:[#allocation11 + $0xec] sm:$0xf]
        %v2778 = vld [vmem:[#allocation11 + $0xf0] sm:$0xf]
        %v2779 = vld [vmem:[#allocation11 + $0xf4] sm:$0xf]
        %v2780 = vld [vmem:[#allocation11 + $0xf8] sm:$0xf]
        %v2781 = vld [vmem:[#allocation11 + $0xfc] sm:$0xf]
        %v2782 = vld [vmem:[%s12] sm:$0x1]
        %v2784 = vlaneseq
        %v2785 = vshrl.u32 %v2784, 7
        %v2786 = vsub.s32 0, %v2785
        %v2787 = vrot.slane %v2782, %v2786
        %v2853 = vunpack.c.l.b16 %v2718
        %v2854 = vunpack.c.l.b16 %v2719
        %v2855 = vunpack.c.l.b16 %v2720
        %v2856 = vunpack.c.l.b16 %v2721
        %v2857 = vunpack.c.l.b16 %v2722
        %v2858 = vunpack.c.l.b16 %v2723
        %v2859 = vunpack.c.l.b16 %v2724
        %v2860 = vunpack.c.l.b16 %v2725
        %v2861 = vunpack.c.l.b16 %v2726
        %v2862 = vunpack.c.l.b16 %v2727
        %v2863 = vunpack.c.l.b16 %v2728
        %v2864 = vunpack.c.l.b16 %v2729
        %v2865 = vunpack.c.l.b16 %v2730
        %v2866 = vunpack.c.l.b16 %v2731
        %v2867 = vunpack.c.l.b16 %v2732
        %v2868 = vunpack.c.l.b16 %v2733
        %v2869 = vunpack.c.l.b16 %v2734
        %v2870 = vunpack.c.l.b16 %v2735
        %v2871 = vunpack.c.l.b16 %v2736
        %v2872 = vunpack.c.l.b16 %v2737
        %v2873 = vunpack.c.l.b16 %v2738
        %v2874 = vunpack.c.l.b16 %v2739
        %v2875 = vunpack.c.l.b16 %v2740
        %v2876 = vunpack.c.l.b16 %v2741
        %v2877 = vunpack.c.l.b16 %v2742
        %v2878 = vunpack.c.l.b16 %v2743
        %v2879 = vunpack.c.l.b16 %v2744
        %v2880 = vunpack.c.l.b16 %v2745
        %v2881 = vunpack.c.l.b16 %v2746
        %v2882 = vunpack.c.l.b16 %v2747
        %v2883 = vunpack.c.l.b16 %v2748
        %v2884 = vunpack.c.l.b16 %v2749
        %v2885 = vunpack.c.l.b16 %v2750
        %v2886 = vunpack.c.l.b16 %v2751
        %v2887 = vunpack.c.l.b16 %v2752
        %v2888 = vunpack.c.l.b16 %v2753
        %v2889 = vunpack.c.l.b16 %v2754
        %v2890 = vunpack.c.l.b16 %v2755
        %v2891 = vunpack.c.l.b16 %v2756
        %v2892 = vunpack.c.l.b16 %v2757
        %v2893 = vunpack.c.l.b16 %v2758
        %v2894 = vunpack.c.l.b16 %v2759
        %v2895 = vunpack.c.l.b16 %v2760
        %v2896 = vunpack.c.l.b16 %v2761
        %v2897 = vunpack.c.l.b16 %v2762
        %v2898 = vunpack.c.l.b16 %v2763
        %v2899 = vunpack.c.l.b16 %v2764
        %v2900 = vunpack.c.l.b16 %v2765
        %v2901 = vunpack.c.l.b16 %v2766
        %v2902 = vunpack.c.l.b16 %v2767
        %v2903 = vunpack.c.l.b16 %v2768
        %v2904 = vunpack.c.l.b16 %v2769
        %v2905 = vunpack.c.l.b16 %v2770
        %v2906 = vunpack.c.l.b16 %v2771
        %v2907 = vunpack.c.l.b16 %v2772
        %v2908 = vunpack.c.l.b16 %v2773
        %v2909 = vunpack.c.l.b16 %v2774
        %v2910 = vunpack.c.l.b16 %v2775
        %v2911 = vunpack.c.l.b16 %v2776
        %v2912 = vunpack.c.l.b16 %v2777
        %v2913 = vunpack.c.l.b16 %v2778
        %v2914 = vunpack.c.l.b16 %v2779
        %v2915 = vunpack.c.l.b16 %v2780
        %v2916 = vunpack.c.l.b16 %v2781
        %v2917 = vpack.c.b16 %v2854, %v2853
        %v2918 = vpack.c.b16 %v2856, %v2855
        %v2919 = vpack.c.b16 %v2858, %v2857
        %v2920 = vpack.c.b16 %v2860, %v2859
        %v2921 = vpack.c.b16 %v2862, %v2861
        %v2922 = vpack.c.b16 %v2864, %v2863
        %v2923 = vpack.c.b16 %v2866, %v2865
        %v2924 = vpack.c.b16 %v2868, %v2867
        %v2925 = vpack.c.b16 %v2870, %v2869
        %v2926 = vpack.c.b16 %v2872, %v2871
        %v2927 = vpack.c.b16 %v2874, %v2873
        %v2928 = vpack.c.b16 %v2876, %v2875
        %v2929 = vpack.c.b16 %v2878, %v2877
        %v2930 = vpack.c.b16 %v2880, %v2879
        %v2931 = vpack.c.b16 %v2882, %v2881
        %v2932 = vpack.c.b16 %v2884, %v2883
        %v2933 = vpack.c.b16 %v2886, %v2885
        %v2934 = vpack.c.b16 %v2888, %v2887
        %v2935 = vpack.c.b16 %v2890, %v2889
        %v2936 = vpack.c.b16 %v2892, %v2891
        %v2937 = vpack.c.b16 %v2894, %v2893
        %v2938 = vpack.c.b16 %v2896, %v2895
        %v2939 = vpack.c.b16 %v2898, %v2897
        %v2940 = vpack.c.b16 %v2900, %v2899
        %v2941 = vpack.c.b16 %v2902, %v2901
        %v2942 = vpack.c.b16 %v2904, %v2903
        %v2943 = vpack.c.b16 %v2906, %v2905
        %v2944 = vpack.c.b16 %v2908, %v2907
        %v2945 = vpack.c.b16 %v2910, %v2909
        %v2946 = vpack.c.b16 %v2912, %v2911
        %v2947 = vpack.c.b16 %v2914, %v2913
        %v2948 = vpack.c.b16 %v2916, %v2915
        %2981 = vmatprep.subr.bf16.mxu0 0
        %2982 = vmatpush1.bf16.msra.mxu0 %v2924
        %2983 = vmatprep.subr.bf16.mxu0 0
        %2984 = vmatpush1.bf16.msra.mxu0 %v2923
        %2985 = vmatprep.subr.bf16.mxu0 0
        %2986 = vmatpush1.bf16.msra.mxu0 %v2922
        %2987 = vmatprep.subr.bf16.mxu0 0
        %2988 = vmatpush1.bf16.msra.mxu0 %v2921
        %2989 = vmatprep.subr.bf16.mxu0 0
        %2990 = vmatpush1.bf16.msra.mxu0 %v2920
        %2991 = vmatprep.subr.bf16.mxu0 0
        %2992 = vmatpush1.bf16.msra.mxu0 %v2919
        %2993 = vmatprep.subr.bf16.mxu0 0
        %2994 = vmatpush1.bf16.msra.mxu0 %v2918
        %2995 = vmatprep.subr.bf16.mxu0 0
        %2996 = vmatpush1.bf16.msra.mxu0 %v2917
        %2997 = vmatprep.subr.bf16.mxu0 0
        %2998 = vmatpush2.bf16.msra.mxu0 %v2932
        %2999 = vmatprep.subr.bf16.mxu0 0
        %3000 = vmatpush2.bf16.msra.mxu0 %v2931
        %3001 = vmatprep.subr.bf16.mxu0 0
        %3002 = vmatpush2.bf16.msra.mxu0 %v2930
        %3003 = vmatprep.subr.bf16.mxu0 0
        %3004 = vmatpush2.bf16.msra.mxu0 %v2929
        %3005 = vmatprep.subr.bf16.mxu0 0
        %3006 = vmatpush2.bf16.msra.mxu0 %v2928
        %3007 = vmatprep.subr.bf16.mxu0 0
        %3008 = vmatpush2.bf16.msra.mxu0 %v2927
        %3009 = vmatprep.subr.bf16.mxu0 0
        %3010 = vmatpush2.bf16.msra.mxu0 %v2926
        %3011 = vmatprep.subr.bf16.mxu0 0
        %3012 = vmatpush2.bf16.msra.mxu0 %v2925
        %3013 = vmatprep.mubr.bf16.mxu0 %v2715
        %3014 = vmatmul.mubr.bf16.gmra.mxu0 %v2714
        %v3015 = vpop.f32.mrf.mxu0
        %v3016 = vadd.f32 %v2787, %v3015
        %v3017 = vpop.f32.mrf.mxu0
        %v3018 = vpop.f32.mrf.mxu0
        %v3019 = vpop.f32.mrf.mxu0
        %3020 = vdwg.mxu0
        %3021 = vmatprep.subr.bf16.mxu0 0
        %3022 = vmatpush1.bf16.msra.mxu0 %v2940
        %3023 = vmatprep.subr.bf16.mxu0 0
        %3024 = vmatpush1.bf16.msra.mxu0 %v2939
        %3025 = vmatprep.subr.bf16.mxu0 0
        %3026 = vmatpush1.bf16.msra.mxu0 %v2938
        %3027 = vmatprep.subr.bf16.mxu0 0
        %3028 = vmatpush1.bf16.msra.mxu0 %v2937
        %3029 = vmatprep.subr.bf16.mxu0 0
        %3030 = vmatpush1.bf16.msra.mxu0 %v2936
        %3031 = vmatprep.subr.bf16.mxu0 0
        %3032 = vmatpush1.bf16.msra.mxu0 %v2935
        %3033 = vmatprep.subr.bf16.mxu0 0
        %3034 = vmatpush1.bf16.msra.mxu0 %v2934
        %3035 = vmatprep.subr.bf16.mxu0 0
        %3036 = vmatpush1.bf16.msra.mxu0 %v2933
        %3037 = vmatprep.subr.bf16.mxu0 0
        %3038 = vmatpush2.bf16.msra.mxu0 %v2948
        %3039 = vmatprep.subr.bf16.mxu0 0
        %3040 = vmatpush2.bf16.msra.mxu0 %v2947
        %3041 = vmatprep.subr.bf16.mxu0 0
        %3042 = vmatpush2.bf16.msra.mxu0 %v2946
        %3043 = vmatprep.subr.bf16.mxu0 0
        %3044 = vmatpush2.bf16.msra.mxu0 %v2945
        %3045 = vmatprep.subr.bf16.mxu0 0
        %3046 = vmatpush2.bf16.msra.mxu0 %v2944
        %3047 = vmatprep.subr.bf16.mxu0 0
        %3048 = vmatpush2.bf16.msra.mxu0 %v2943
        %3049 = vmatprep.subr.bf16.mxu0 0
        %3050 = vmatpush2.bf16.msra.mxu0 %v2942
        %3051 = vmatprep.subr.bf16.mxu0 0
        %3052 = vmatpush2.bf16.msra.mxu0 %v2941
        %3053 = vmatprep.mubr.bf16.mxu0 %v2717
        %3054 = vmatmul.mubr.bf16.gmra.mxu0 %v2716
        %v3055 = vpop.f32.mrf.mxu0
        %v3056 = vadd.f32 %v3016, %v3055
        %v3057 = vpop.f32.mrf.mxu0
        %v3058 = vpop.f32.mrf.mxu0
        %v3059 = vpop.f32.mrf.mxu0
        %3060 = vdwg.mxu0
        %v3061 = vadd.f32 %v2369, %v3056
        %3062 = vst [vmem:[%s526] sm:$0xff] %v3061
        %s3063 = sand.u32 %s319, 1
        %s3064 = scalar_lea.sflag [#allocation4], %s3063
        %s3065 = sand.u32 %s319, 1
        %s3066 = smul.addr %s3065, 8
        %s3067 = scalar_lea.vmem [#allocation13], %s3066
        // Predicated region
        $region97: #{tpu_custom_call.1} parent=71 // pred_check
          %p3068 = pneg %p329
        $region98: #{tpu_custom_call.1} parent=71 // pred_check_branch
          %3070 = sbr.rel (%p3068) target = $region100
        $region99: #{tpu_custom_call.1} parent=71 // pred_region
          %s3072 = ssub.s32 128, 128
          %3073 = vsyncadd %s3064, %s3072
          %s3074 = smul.addr %s33, 128
          %s3075 = scalar_lea.hbm %s13, %s3074
          %s3077 = sshll.u32 %s3067, 4
          %s3078 = int_to_ptr.vmem [resolvable:$true] %s3077
          %3080 = dma.vmem_to_hbm [thread:$0]  %s3078, 128, %s3075, %s3064
        $region100: #{tpu_custom_call.1} parent=71 // pred_fallthru
          _
      $region72: #{tpu_custom_call.1} parent=5 // pred_fallthru
        _
      %p3081 = scmp.le.s32.totalorder 2, %s28
      // Predicated region
      $region101: #{tpu_custom_call.1} parent=5 // pred_check
        %p3082 = pneg %p3081
      $region102: #{tpu_custom_call.1} parent=5 // pred_check_branch
        %3084 = sbr.rel (%p3082) target = $region104
      $region103: #{tpu_custom_call.1} parent=5 // pred_region
        %s3085 = ssub.s32 %s28, 2
        // Predicated region
        $region105: #{tpu_custom_call.1} parent=103 // pred_check
          %p3086 = pneg %p335
        $region106: #{tpu_custom_call.1} parent=103 // pred_check_branch
          %3088 = sbr.rel (%p3086) target = $region108
        $region107: #{tpu_custom_call.1} parent=103 // pred_region
          %s3089 = sand.u32 %s320, 1
          %s3090 = scalar_lea.sflag [#allocation4], %s3089
          %s3091 = sand.u32 %s320, 1
          %s3092 = smul.addr %s3091, 8
          %s3093 = scalar_lea.vmem [#allocation13], %s3092
          %3094 = dma.done %s3090, 128
        $region108: #{tpu_custom_call.1} parent=103 // pred_fallthru
          _
      $region104: #{tpu_custom_call.1} parent=5 // pred_fallthru
        _
    $region6: #{tpu_custom_call.1} parent=1 // loop_footer
      %s32 = sadd.s32 1, %s28
    $region7: #{tpu_custom_call.1} parent=1 // loop_footer_branch
      %27 = sbr.rel target = $region3
    $region8: #{tpu_custom_call.1} parent=1 // loop_exit
      _
    %3095 = vsyncpa [#allocation3], 1
    %s3096 = scalar_lea.sflag [#allocation3], 1
    %3097 = vsyncpa %s3096, 1
    %3098 = vsyncpa [#allocation6], 1
    %3099 = vsyncpa [#allocation9], 1
    %3100 = vsyncpa [#allocation12], 1
    %3101 = vsyncpa [#allocation4], 1
    %s3102 = scalar_lea.sflag [#allocation4], 1
    %3103 = vsyncpa %s3102, 1

</llo_original>
